<compile_context>
chip_gen: v6e
topology: v6e:2x2x1
jax: 0.10.0
libtpu: 0.0.40
codegen_flags: <defaults>
</compile_context>

<pallas_src>
import functools
import math

import jax
import jax.numpy as jnp
from jax.experimental import pallas as pl
from jax.experimental.pallas import tpu as pltpu

EMBED_DIM = 60                      # real embedding width (PyTorch module)
DENSE_DIM = 64
NUM_HEADS = 4
HEAD_DIM = EMBED_DIM // NUM_HEADS   # 15 (real)
E_PAD = 64                          # hardware-friendly padded embedding width
DH_PAD = 16                         # padded per-head width
LN_EPS = 1e-5

# Weight-slab page indices (each page is a (E_PAD, E_PAD) K-major matrix).
WQ1, WK1, WV1, WQ2, WK2, WV2, WD1, WD2, WO1, WO2 = range(10)
# Bias / LayerNorm slab row indices (each row is E_PAD wide).
(BQ1, BK1, BV1, BQ2, BK2, BV2, BD1, BD2, BO1, BO2,
 LN1G, LN1B, LN2G, LN2B, LN3G, LN3B, LN4G, LN4B) = range(18)


# ---------------------------------------------------------------------------
# Fused decoder kernel
# ---------------------------------------------------------------------------
def _decoder_kernel(x_ref, enc_ref, w_ref, b_ref, o_ref,
                    *, batch, tgt_len, src_len):
    f32, bf16 = jnp.float32, jnp.bfloat16
    H, Dh, Er = NUM_HEADS, DH_PAD, EMBED_DIM

    b_all = b_ref[...].astype(f32)                     # (18, E_PAD), one load

    def brow(i):                                       # (1, E_PAD) row
        return b_all[i:i + 1, :]

    def mm(a, page):                                   # bf16 MXU, f32 accumulate
        return jnp.dot(a.astype(bf16), w_ref[page],
                       preferred_element_type=f32)

    def to_batch_major(ref, seq_len):
        # (L, N, 60) -> batch-major (N*L, E_PAD), zero in padded lanes.
        v = ref[...].astype(f32)
        rows = jnp.concatenate([v[:, n, :] for n in range(batch)], axis=0)
        pad = jnp.zeros((batch * seq_len, E_PAD - Er), f32)
        return jnp.concatenate([rows, pad], axis=-1)

    def layer_norm(z, gi, bi):
        # Padded lanes of z are zero, so sums over E_PAD == sums over the real
        # 60 features; divide by 60.  var = E[x^2] - E[x]^2 keeps both
        # cross-lane reductions independent.
        s1 = jnp.sum(z, axis=-1, keepdims=True)
        s2 = jnp.sum(z * z, axis=-1, keepdims=True)
        mean = s1 * (1.0 / Er)
        var = s2 * (1.0 / Er) - mean * mean
        zn = (z - mean) * jax.lax.rsqrt(var + LN_EPS)
        return zn * brow(gi) + brow(bi)                # padded gamma/beta = 0

    def attend(q_all, k_all, v_all, wo_page, bo_row, lq, lk):
        # q_all: (N*lq, E_PAD) with 1/sqrt(head_dim) already folded into Q.
        wo = w_ref[wo_page]                            # (E_PAD, E_PAD) bf16
        outs = []
        for n in range(batch):                         # static unroll
            qn = q_all[n * lq:(n + 1) * lq].astype(bf16)
            kn = k_all[n * lk:(n + 1) * lk].astype(bf16)
            vn = v_all[n * lk:(n + 1) * lk].astype(bf16)
            proj = jnp.zeros((lq, E_PAD), f32)
            for h in range(H):                         # static unroll
                qh = qn[:, h * Dh:(h + 1) * Dh]        # 16-aligned selects
                kh = kn[:, h * Dh:(h + 1) * Dh]
                vh = vn[:, h * Dh:(h + 1) * Dh]
                s = jax.lax.dot_general(
                    qh, kh, (((1,), (1,)), ((), ())),
                    preferred_element_type=f32)        # (lq, lk)
                s = s - jnp.max(s, axis=-1, keepdims=True)
                p = jnp.exp(s)
                p = p * pl.reciprocal(jnp.sum(p, axis=-1, keepdims=True))
                oh = jnp.dot(p.astype(bf16), vh,
                             preferred_element_type=f32)            # (lq, 16)
                # head merge fused into out-proj: sum_h oh @ Wo[h-rows]
                proj = proj + jnp.dot(oh.astype(bf16),
                                      wo[h * Dh:(h + 1) * Dh, :],
                                      preferred_element_type=f32)   # (lq, 64)
            outs.append(proj)
        return jnp.concatenate(outs, axis=0) + brow(bo_row)

    x = to_batch_major(x_ref, tgt_len)                 # (N*Lq, 64)
    enc = to_batch_major(enc_ref, src_len)             # (N*Lk, 64)

    # ---- MHA1: self-attention ----
    q1 = mm(x, WQ1) + brow(BQ1)
    k1 = mm(x, WK1) + brow(BK1)
    v1 = mm(x, WV1) + brow(BV1)
    attn1 = attend(q1, k1, v1, WO1, BO1, tgt_len, tgt_len)
    out1 = layer_norm(x + attn1, LN1G, LN1B)

    # ---- MHA2: cross-attention over encoder outputs ----
    q2 = mm(out1, WQ2) + brow(BQ2)
    k2 = mm(enc, WK2) + brow(BK2)
    v2 = mm(enc, WV2) + brow(BV2)
    attn2 = attend(q2, k2, v2, WO2, BO2, tgt_len, src_len)
    out2 = layer_norm(out1 + attn2, LN2G, LN2B)

    # ---- FFN (shared dense1/dense2, no activation), applied twice ----
    h1 = mm(out2, WD1) + brow(BD1)
    ff1 = mm(h1, WD2) + brow(BD2)
    out3 = layer_norm(out2 + ff1, LN3G, LN3B)

    h2 = mm(out3, WD1) + brow(BD1)
    ff2 = mm(h2, WD2) + brow(BD2)
    out4 = layer_norm(out3 + ff2, LN4G, LN4B)

    # ---- write back in (L, N, 60) layout; truncate padded lanes here ----
    blocks = [out4[n * tgt_len:(n + 1) * tgt_len, :Er] for n in range(batch)]
    o_ref[...] = jnp.stack(blocks, axis=1).astype(o_ref.dtype)


# ---------------------------------------------------------------------------
# Wrapper: one pallas_call, 4 inputs, everything VMEM-resident
# ---------------------------------------------------------------------------
def transformer_decoder_forward(inputs, encoder_outputs, params):
    """inputs: (L_tgt, N, 60); encoder_outputs: (L_src, N, 60) (PyTorch MHA layout)."""
    Lq, N, E = inputs.shape
    Lk = encoder_outputs.shape[0]
    assert E == EMBED_DIM
    w_slab = params["w_slab"]
    b_slab = params["b_slab"]

    kern = functools.partial(_decoder_kernel, batch=N, tgt_len=Lq, src_len=Lk)

    return pl.pallas_call(
        kern,
        out_shape=jax.ShapeDtypeStruct((Lq, N, E), inputs.dtype),
        grid=(1,),
        in_specs=[
            pl.BlockSpec((Lq, N, E), lambda i: (0, 0, 0)),
            pl.BlockSpec((Lk, N, E), lambda i: (0, 0, 0)),
            pl.BlockSpec(w_slab.shape, lambda i: (0, 0, 0)),
            pl.BlockSpec(b_slab.shape, lambda i: (0, 0)),
        ],
        out_specs=pl.BlockSpec((Lq, N, E), lambda i: (0, 0, 0)),
        compiler_params=pltpu.CompilerParams(
            dimension_semantics=("arbitrary",)),
    )(inputs, encoder_outputs, w_slab, b_slab)


# ---------------------------------------------------------------------------
# Parameters: PyTorch layout at init, one-time transform to padded kernel slabs
# ---------------------------------------------------------------------------
def init_params(key):
    """Parameters in PyTorch nn.Module layout (weights are (out, in))."""
    def lin_init(k, out_f, in_f):
        k1, k2 = jax.random.split(k)
        bound = 1.0 / math.sqrt(in_f)
        w = jax.random.uniform(k1, (out_f, in_f), jnp.float32, -bound, bound)
        b = jax.random.uniform(k2, (out_f,), jnp.float32, -bound, bound)
        return w, b

    def mha_init(k):
        k1, k2 = jax.random.split(k)
        in_w, in_b = lin_init(k1, 3 * EMBED_DIM, EMBED_DIM)
        out_w, out_b = lin_init(k2, EMBED_DIM, EMBED_DIM)
        return {"in_w": in_w, "in_b": in_b, "out_w": out_w, "out_b": out_b}

    ks = jax.random.split(key, 4)
    ones = jnp.ones((EMBED_DIM,), jnp.float32)
    zeros = jnp.zeros((EMBED_DIM,), jnp.float32)
    return {
        "mha1": mha_init(ks[0]), "mha2": mha_init(ks[1]),
        "dense1": lin_init(ks[2], DENSE_DIM, EMBED_DIM),
        "dense2": lin_init(ks[3], EMBED_DIM, DENSE_DIM),
        "ln1": (ones, zeros), "ln2": (ones, zeros),
        "ln3": (ones, zeros), "ln4": (ones, zeros),
    }


def prepare_params(p):
    """One-time transform: K-major weights, zero-padded to (64, 64) pages with
    per-head 15->16 padding, 1/sqrt(head_dim) folded into Q, everything packed
    into one bf16 weight slab + one f32 bias/LN slab."""
    E, Ep, H, Dr, Dp = EMBED_DIM, E_PAD, NUM_HEADS, HEAD_DIM, DH_PAD
    scale = 1.0 / math.sqrt(Dr)

    def pad_plain(a, axis):
        pads = [(0, 0)] * a.ndim
        pads[axis] = (0, Ep - E)
        return jnp.pad(a, pads)

    def pad_heads(a, axis):
        # 60-wide head-concat-15 axis -> 64-wide head-concat-16 (zero per head).
        a = jnp.moveaxis(a, axis, -1)
        lead = a.shape[:-1]
        a = a.reshape(lead + (H, Dr))
        a = jnp.pad(a, [(0, 0)] * len(lead) + [(0, 0), (0, Dp - Dr)])
        a = a.reshape(lead + (H * Dp,))
        return jnp.moveaxis(a, -1, axis)

    def in_proj(m):
        w, b = m["in_w"], m["in_b"]                    # (3E, E), (3E,)
        pages, rows = [], []
        for j in range(3):                             # q, k, v
            wj = w[j * E:(j + 1) * E].T                # K-major (in, out)
            bj = b[j * E:(j + 1) * E]
            if j == 0:                                 # fold 1/sqrt(head_dim) into Q
                wj = wj * scale
                bj = bj * scale
            pages.append(pad_heads(pad_plain(wj, 0), 1))   # (64, 64)
            rows.append(pad_heads(bj, 0))                  # (64,)
        return pages, rows

    def out_proj(m):
        wo = pad_plain(pad_heads(m["out_w"].T, 0), 1)      # (64, 64)
        bo = pad_plain(m["out_b"], 0)                      # (64,)
        return wo, bo

    (q1w, k1w, v1w), (q1b, k1b, v1b) = in_proj(p["mha1"])
    (q2w, k2w, v2w), (q2b, k2b, v2b) = in_proj(p["mha2"])
    o1w, o1b = out_proj(p["mha1"])
    o2w, o2b = out_proj(p["mha2"])

    d1w, d1b = p["dense1"]                             # (64, 60), (64,)
    d2w, d2b = p["dense2"]                             # (60, 64), (60,)
    d1w = pad_plain(d1w.T, 0)                          # (64, 64)
    d2w = pad_plain(d2w.T, 1)                          # (64, 64)
    d2b = pad_plain(d2b, 0)                            # (64,)

    pages = [None] * 10
    pages[WQ1], pages[WK1], pages[WV1] = q1w, k1w, v1w
    pages[WQ2], pages[WK2], pages[WV2] = q2w, k2w, v2w
    pages[WD1], pages[WD2] = d1w, d2w
    pages[WO1], pages[WO2] = o1w, o2w
    w_slab = jnp.stack(pages, axis=0).astype(jnp.bfloat16)   # (10, 64, 64)

    rows = [None] * 18
    rows[BQ1], rows[BK1], rows[BV1] = q1b, k1b, v1b
    rows[BQ2], rows[BK2], rows[BV2] = q2b, k2b, v2b
    rows[BD1], rows[BD2] = d1b, d2b
    rows[BO1], rows[BO2] = o1b, o2b
    for gi, name in zip((LN1G, LN2G, LN3G, LN4G), ("ln1", "ln2", "ln3", "ln4")):
        g, b = p[name]
        rows[gi] = pad_plain(g, 0)          # padded gamma = 0 -> zero padded lanes
        rows[gi + 1] = pad_plain(b, 0)
    b_slab = jnp.stack(rows, axis=0).astype(jnp.float32)     # (18, 64)

    return {"w_slab": w_slab, "b_slab": b_slab}


if __name__ == "__main__":
    key = jax.random.PRNGKey(0)
    pk, xk, ek = jax.random.split(key, 3)
    params = prepare_params(init_params(pk))

    L_TGT, L_SRC, BATCH = 8, 10, 2   # (seq, batch, embed) PyTorch-MHA layout
    inputs = jax.random.normal(xk, (L_TGT, BATCH, EMBED_DIM), jnp.float32)
    encoder_outputs = jax.random.normal(ek, (L_SRC, BATCH, EMBED_DIM), jnp.float32)

    out = jax.jit(transformer_decoder_forward)(inputs, encoder_outputs, params)
    out = jax.block_until_ready(out)
    assert out.shape == (L_TGT, BATCH, EMBED_DIM)
    assert bool(jnp.all(jnp.isfinite(out)))
    print("KERNEL_OK")
</pallas_src>

<mosaic_0001>
module attributes {stable_mosaic.version = 11 : i64} {
  func.func @_decoder_kernel(%arg0: i32, %arg1: memref<8x2x60xf32, #tpu.memory_space<vmem>>, %arg2: memref<10x2x60xf32, #tpu.memory_space<vmem>>, %arg3: memref<10x64x64xbf16, #tpu.memory_space<vmem>>, %arg4: memref<18x64xf32, #tpu.memory_space<vmem>>, %arg5: memref<8x2x60xf32, #tpu.memory_space<vmem>>) attributes {dimension_semantics = [#tpu.dimension_semantics<arbitrary>], iteration_bounds = array<i64: 1>, scalar_prefetch = 0 : i64, scratch_operands = 0 : i64, tpu.core_type = #tpu.core_type<tc>, window_params = [{pipeline_mode = #tpu.pipeline_mode<synchronous>, transform_indices = @transform_0, window_bounds = array<i64: 8, 2, 60>}, {pipeline_mode = #tpu.pipeline_mode<synchronous>, transform_indices = @transform_1, window_bounds = array<i64: 10, 2, 60>}, {pipeline_mode = #tpu.pipeline_mode<synchronous>, transform_indices = @transform_2, window_bounds = array<i64: 10, 64, 64>}, {pipeline_mode = #tpu.pipeline_mode<synchronous>, transform_indices = @transform_3, window_bounds = array<i64: 18, 64>}, {pipeline_mode = #tpu.pipeline_mode<synchronous>, transform_indices = @transform_4, window_bounds = array<i64: 8, 2, 60>}]} {
    %c0 = arith.constant 0 : index
    %c0_0 = arith.constant 0 : index
    %0 = vector.load %arg4[%c0, %c0_0] : memref<18x64xf32, #tpu.memory_space<vmem>>, vector<18x64xf32>
    %c0_1 = arith.constant 0 : index
    %c0_2 = arith.constant 0 : index
    %c0_3 = arith.constant 0 : index
    %1 = vector.load %arg1[%c0_1, %c0_2, %c0_3] : memref<8x2x60xf32, #tpu.memory_space<vmem>>, vector<8x2x60xf32>
    %2 = vector.extract_strided_slice %1 {offsets = [0, 0, 0], sizes = [8, 1, 60], strides = [1, 1, 1]} : vector<8x2x60xf32> to vector<8x1x60xf32>
    %3 = vector.shape_cast %2 : vector<8x1x60xf32> to vector<8x60xf32>
    %4 = vector.extract_strided_slice %1 {offsets = [0, 1, 0], sizes = [8, 1, 60], strides = [1, 1, 1]} : vector<8x2x60xf32> to vector<8x1x60xf32>
    %5 = vector.shape_cast %4 : vector<8x1x60xf32> to vector<8x60xf32>
    %6 = tpu.concatenate %3, %5 in 0 : vector<8x60xf32>, vector<8x60xf32> -> vector<16x60xf32>
    %cst = arith.constant 0.000000e+00 : f32
    %7 = vector.broadcast %cst : f32 to vector<16x4xf32>
    %8 = tpu.concatenate %6, %7 in 1 : vector<16x60xf32>, vector<16x4xf32> -> vector<16x64xf32>
    %c0_4 = arith.constant 0 : index
    %c0_5 = arith.constant 0 : index
    %c0_6 = arith.constant 0 : index
    %9 = vector.load %arg2[%c0_4, %c0_5, %c0_6] : memref<10x2x60xf32, #tpu.memory_space<vmem>>, vector<10x2x60xf32>
    %10 = vector.extract_strided_slice %9 {offsets = [0, 0, 0], sizes = [10, 1, 60], strides = [1, 1, 1]} : vector<10x2x60xf32> to vector<10x1x60xf32>
    %11 = vector.shape_cast %10 : vector<10x1x60xf32> to vector<10x60xf32>
    %12 = vector.extract_strided_slice %9 {offsets = [0, 1, 0], sizes = [10, 1, 60], strides = [1, 1, 1]} : vector<10x2x60xf32> to vector<10x1x60xf32>
    %13 = vector.shape_cast %12 : vector<10x1x60xf32> to vector<10x60xf32>
    %14 = tpu.concatenate %11, %13 in 0 : vector<10x60xf32>, vector<10x60xf32> -> vector<20x60xf32>
    %cst_7 = arith.constant 0.000000e+00 : f32
    %15 = vector.broadcast %cst_7 : f32 to vector<20x4xf32>
    %16 = tpu.concatenate %14, %15 in 1 : vector<20x60xf32>, vector<20x4xf32> -> vector<20x64xf32>
    %17 = arith.truncf %8 : vector<16x64xf32> to vector<16x64xbf16>
    %c0_8 = arith.constant 0 : index
    %c0_9 = arith.constant 0 : index
    %c0_10 = arith.constant 0 : index
    %18 = vector.load %arg3[%c0_8, %c0_9, %c0_10] : memref<10x64x64xbf16, #tpu.memory_space<vmem>>, vector<1x64x64xbf16>
    %19 = vector.shape_cast %18 : vector<1x64x64xbf16> to vector<64x64xbf16>
    %cst_11 = arith.constant dense<0.000000e+00> : vector<16x64xf32>
    %20 = tpu.matmul %17, %19, %cst_11 {dimension_numbers = #tpu.dot_dimension_numbers<[1], [0], [0], [1], [0, 0, 1, 1], [], []>} : vector<16x64xbf16>, vector<64x64xbf16>, vector<16x64xf32> -> vector<16x64xf32>
    %21 = vector.extract_strided_slice %0 {offsets = [0, 0], sizes = [1, 64], strides = [1, 1]} : vector<18x64xf32> to vector<1x64xf32>
    %22 = vector.broadcast %21 : vector<1x64xf32> to vector<16x64xf32>
    %23 = arith.addf %20, %22 : vector<16x64xf32>
    %24 = arith.truncf %8 : vector<16x64xf32> to vector<16x64xbf16>
    %c1 = arith.constant 1 : index
    %c0_12 = arith.constant 0 : index
    %c0_13 = arith.constant 0 : index
    %25 = vector.load %arg3[%c1, %c0_12, %c0_13] : memref<10x64x64xbf16, #tpu.memory_space<vmem>>, vector<1x64x64xbf16>
    %26 = vector.shape_cast %25 : vector<1x64x64xbf16> to vector<64x64xbf16>
    %cst_14 = arith.constant dense<0.000000e+00> : vector<16x64xf32>
    %27 = tpu.matmul %24, %26, %cst_14 {dimension_numbers = #tpu.dot_dimension_numbers<[1], [0], [0], [1], [0, 0, 1, 1], [], []>} : vector<16x64xbf16>, vector<64x64xbf16>, vector<16x64xf32> -> vector<16x64xf32>
    %28 = vector.extract_strided_slice %0 {offsets = [1, 0], sizes = [1, 64], strides = [1, 1]} : vector<18x64xf32> to vector<1x64xf32>
    %29 = vector.broadcast %28 : vector<1x64xf32> to vector<16x64xf32>
    %30 = arith.addf %27, %29 : vector<16x64xf32>
    %31 = arith.truncf %8 : vector<16x64xf32> to vector<16x64xbf16>
    %c2 = arith.constant 2 : index
    %c0_15 = arith.constant 0 : index
    %c0_16 = arith.constant 0 : index
    %32 = vector.load %arg3[%c2, %c0_15, %c0_16] : memref<10x64x64xbf16, #tpu.memory_space<vmem>>, vector<1x64x64xbf16>
    %33 = vector.shape_cast %32 : vector<1x64x64xbf16> to vector<64x64xbf16>
    %cst_17 = arith.constant dense<0.000000e+00> : vector<16x64xf32>
    %34 = tpu.matmul %31, %33, %cst_17 {dimension_numbers = #tpu.dot_dimension_numbers<[1], [0], [0], [1], [0, 0, 1, 1], [], []>} : vector<16x64xbf16>, vector<64x64xbf16>, vector<16x64xf32> -> vector<16x64xf32>
    %35 = vector.extract_strided_slice %0 {offsets = [2, 0], sizes = [1, 64], strides = [1, 1]} : vector<18x64xf32> to vector<1x64xf32>
    %36 = vector.broadcast %35 : vector<1x64xf32> to vector<16x64xf32>
    %37 = arith.addf %34, %36 : vector<16x64xf32>
    %c8 = arith.constant 8 : index
    %c0_18 = arith.constant 0 : index
    %c0_19 = arith.constant 0 : index
    %38 = vector.load %arg3[%c8, %c0_18, %c0_19] : memref<10x64x64xbf16, #tpu.memory_space<vmem>>, vector<1x64x64xbf16>
    %39 = vector.shape_cast %38 : vector<1x64x64xbf16> to vector<64x64xbf16>
    %40 = vector.extract_strided_slice %23 {offsets = [0, 0], sizes = [8, 64], strides = [1, 1]} : vector<16x64xf32> to vector<8x64xf32>
    %41 = arith.truncf %40 : vector<8x64xf32> to vector<8x64xbf16>
    %42 = vector.extract_strided_slice %30 {offsets = [0, 0], sizes = [8, 64], strides = [1, 1]} : vector<16x64xf32> to vector<8x64xf32>
    %43 = arith.truncf %42 : vector<8x64xf32> to vector<8x64xbf16>
    %44 = vector.extract_strided_slice %37 {offsets = [0, 0], sizes = [8, 64], strides = [1, 1]} : vector<16x64xf32> to vector<8x64xf32>
    %45 = arith.truncf %44 : vector<8x64xf32> to vector<8x64xbf16>
    %cst_20 = arith.constant 0.000000e+00 : f32
    %46 = vector.broadcast %cst_20 : f32 to vector<8x64xf32>
    %47 = vector.extract_strided_slice %41 {offsets = [0, 0], sizes = [8, 16], strides = [1, 1]} : vector<8x64xbf16> to vector<8x16xbf16>
    %48 = vector.extract_strided_slice %43 {offsets = [0, 0], sizes = [8, 16], strides = [1, 1]} : vector<8x64xbf16> to vector<8x16xbf16>
    %49 = vector.extract_strided_slice %45 {offsets = [0, 0], sizes = [8, 16], strides = [1, 1]} : vector<8x64xbf16> to vector<8x16xbf16>
    %cst_21 = arith.constant dense<0.000000e+00> : vector<8x8xf32>
    %50 = tpu.matmul %47, %48, %cst_21 {dimension_numbers = #tpu.dot_dimension_numbers<[1], [1], [0], [0], [0, 0, 1, 0], [], []>} : vector<8x16xbf16>, vector<8x16xbf16>, vector<8x8xf32> -> vector<8x8xf32>
    %cst_22 = arith.constant dense<0xFF800000> : vector<8xf32>
    %51 = vector.multi_reduction <maximumf>, %50, %cst_22 [1] : vector<8x8xf32> to vector<8xf32>
    %52 = vector.shape_cast %51 : vector<8xf32> to vector<8x1xf32>
    %53 = vector.broadcast %52 : vector<8x1xf32> to vector<8x8xf32>
    %54 = arith.subf %50, %53 : vector<8x8xf32>
    %55 = math.exp %54 : vector<8x8xf32>
    %cst_23 = arith.constant dense<0.000000e+00> : vector<8xf32>
    %56 = vector.multi_reduction <add>, %55, %cst_23 [1] : vector<8x8xf32> to vector<8xf32>
    %57 = vector.shape_cast %56 : vector<8xf32> to vector<8x1xf32>
    %58 = tpu.reciprocal %57 : vector<8x1xf32> -> vector<8x1xf32>
    %59 = vector.broadcast %58 : vector<8x1xf32> to vector<8x8xf32>
    %60 = arith.mulf %55, %59 : vector<8x8xf32>
    %61 = arith.truncf %60 : vector<8x8xf32> to vector<8x8xbf16>
    %cst_24 = arith.constant dense<0.000000e+00> : vector<8x16xf32>
    %62 = tpu.matmul %61, %49, %cst_24 {dimension_numbers = #tpu.dot_dimension_numbers<[1], [0], [0], [1], [0, 0, 1, 1], [], []>} : vector<8x8xbf16>, vector<8x16xbf16>, vector<8x16xf32> -> vector<8x16xf32>
    %63 = arith.truncf %62 : vector<8x16xf32> to vector<8x16xbf16>
    %64 = vector.extract_strided_slice %39 {offsets = [0, 0], sizes = [16, 64], strides = [1, 1]} : vector<64x64xbf16> to vector<16x64xbf16>
    %cst_25 = arith.constant dense<0.000000e+00> : vector<8x64xf32>
    %65 = tpu.matmul %63, %64, %cst_25 {dimension_numbers = #tpu.dot_dimension_numbers<[1], [0], [0], [1], [0, 0, 1, 1], [], []>} : vector<8x16xbf16>, vector<16x64xbf16>, vector<8x64xf32> -> vector<8x64xf32>
    %66 = arith.addf %46, %65 : vector<8x64xf32>
    %67 = vector.extract_strided_slice %41 {offsets = [0, 16], sizes = [8, 16], strides = [1, 1]} : vector<8x64xbf16> to vector<8x16xbf16>
    %68 = vector.extract_strided_slice %43 {offsets = [0, 16], sizes = [8, 16], strides = [1, 1]} : vector<8x64xbf16> to vector<8x16xbf16>
    %69 = vector.extract_strided_slice %45 {offsets = [0, 16], sizes = [8, 16], strides = [1, 1]} : vector<8x64xbf16> to vector<8x16xbf16>
    %cst_26 = arith.constant dense<0.000000e+00> : vector<8x8xf32>
    %70 = tpu.matmul %67, %68, %cst_26 {dimension_numbers = #tpu.dot_dimension_numbers<[1], [1], [0], [0], [0, 0, 1, 0], [], []>} : vector<8x16xbf16>, vector<8x16xbf16>, vector<8x8xf32> -> vector<8x8xf32>
    %cst_27 = arith.constant dense<0xFF800000> : vector<8xf32>
    %71 = vector.multi_reduction <maximumf>, %70, %cst_27 [1] : vector<8x8xf32> to vector<8xf32>
    %72 = vector.shape_cast %71 : vector<8xf32> to vector<8x1xf32>
    %73 = vector.broadcast %72 : vector<8x1xf32> to vector<8x8xf32>
    %74 = arith.subf %70, %73 : vector<8x8xf32>
    %75 = math.exp %74 : vector<8x8xf32>
    %cst_28 = arith.constant dense<0.000000e+00> : vector<8xf32>
    %76 = vector.multi_reduction <add>, %75, %cst_28 [1] : vector<8x8xf32> to vector<8xf32>
    %77 = vector.shape_cast %76 : vector<8xf32> to vector<8x1xf32>
    %78 = tpu.reciprocal %77 : vector<8x1xf32> -> vector<8x1xf32>
    %79 = vector.broadcast %78 : vector<8x1xf32> to vector<8x8xf32>
    %80 = arith.mulf %75, %79 : vector<8x8xf32>
    %81 = arith.truncf %80 : vector<8x8xf32> to vector<8x8xbf16>
    %cst_29 = arith.constant dense<0.000000e+00> : vector<8x16xf32>
    %82 = tpu.matmul %81, %69, %cst_29 {dimension_numbers = #tpu.dot_dimension_numbers<[1], [0], [0], [1], [0, 0, 1, 1], [], []>} : vector<8x8xbf16>, vector<8x16xbf16>, vector<8x16xf32> -> vector<8x16xf32>
    %83 = arith.truncf %82 : vector<8x16xf32> to vector<8x16xbf16>
    %84 = vector.extract_strided_slice %39 {offsets = [16, 0], sizes = [16, 64], strides = [1, 1]} : vector<64x64xbf16> to vector<16x64xbf16>
    %cst_30 = arith.constant dense<0.000000e+00> : vector<8x64xf32>
    %85 = tpu.matmul %83, %84, %cst_30 {dimension_numbers = #tpu.dot_dimension_numbers<[1], [0], [0], [1], [0, 0, 1, 1], [], []>} : vector<8x16xbf16>, vector<16x64xbf16>, vector<8x64xf32> -> vector<8x64xf32>
    %86 = arith.addf %66, %85 : vector<8x64xf32>
    %87 = vector.extract_strided_slice %41 {offsets = [0, 32], sizes = [8, 16], strides = [1, 1]} : vector<8x64xbf16> to vector<8x16xbf16>
    %88 = vector.extract_strided_slice %43 {offsets = [0, 32], sizes = [8, 16], strides = [1, 1]} : vector<8x64xbf16> to vector<8x16xbf16>
    %89 = vector.extract_strided_slice %45 {offsets = [0, 32], sizes = [8, 16], strides = [1, 1]} : vector<8x64xbf16> to vector<8x16xbf16>
    %cst_31 = arith.constant dense<0.000000e+00> : vector<8x8xf32>
    %90 = tpu.matmul %87, %88, %cst_31 {dimension_numbers = #tpu.dot_dimension_numbers<[1], [1], [0], [0], [0, 0, 1, 0], [], []>} : vector<8x16xbf16>, vector<8x16xbf16>, vector<8x8xf32> -> vector<8x8xf32>
    %cst_32 = arith.constant dense<0xFF800000> : vector<8xf32>
    %91 = vector.multi_reduction <maximumf>, %90, %cst_32 [1] : vector<8x8xf32> to vector<8xf32>
    %92 = vector.shape_cast %91 : vector<8xf32> to vector<8x1xf32>
    %93 = vector.broadcast %92 : vector<8x1xf32> to vector<8x8xf32>
    %94 = arith.subf %90, %93 : vector<8x8xf32>
    %95 = math.exp %94 : vector<8x8xf32>
    %cst_33 = arith.constant dense<0.000000e+00> : vector<8xf32>
    %96 = vector.multi_reduction <add>, %95, %cst_33 [1] : vector<8x8xf32> to vector<8xf32>
    %97 = vector.shape_cast %96 : vector<8xf32> to vector<8x1xf32>
    %98 = tpu.reciprocal %97 : vector<8x1xf32> -> vector<8x1xf32>
    %99 = vector.broadcast %98 : vector<8x1xf32> to vector<8x8xf32>
    %100 = arith.mulf %95, %99 : vector<8x8xf32>
    %101 = arith.truncf %100 : vector<8x8xf32> to vector<8x8xbf16>
    %cst_34 = arith.constant dense<0.000000e+00> : vector<8x16xf32>
    %102 = tpu.matmul %101, %89, %cst_34 {dimension_numbers = #tpu.dot_dimension_numbers<[1], [0], [0], [1], [0, 0, 1, 1], [], []>} : vector<8x8xbf16>, vector<8x16xbf16>, vector<8x16xf32> -> vector<8x16xf32>
    %103 = arith.truncf %102 : vector<8x16xf32> to vector<8x16xbf16>
    %104 = vector.extract_strided_slice %39 {offsets = [32, 0], sizes = [16, 64], strides = [1, 1]} : vector<64x64xbf16> to vector<16x64xbf16>
    %cst_35 = arith.constant dense<0.000000e+00> : vector<8x64xf32>
    %105 = tpu.matmul %103, %104, %cst_35 {dimension_numbers = #tpu.dot_dimension_numbers<[1], [0], [0], [1], [0, 0, 1, 1], [], []>} : vector<8x16xbf16>, vector<16x64xbf16>, vector<8x64xf32> -> vector<8x64xf32>
    %106 = arith.addf %86, %105 : vector<8x64xf32>
    %107 = vector.extract_strided_slice %41 {offsets = [0, 48], sizes = [8, 16], strides = [1, 1]} : vector<8x64xbf16> to vector<8x16xbf16>
    %108 = vector.extract_strided_slice %43 {offsets = [0, 48], sizes = [8, 16], strides = [1, 1]} : vector<8x64xbf16> to vector<8x16xbf16>
    %109 = vector.extract_strided_slice %45 {offsets = [0, 48], sizes = [8, 16], strides = [1, 1]} : vector<8x64xbf16> to vector<8x16xbf16>
    %cst_36 = arith.constant dense<0.000000e+00> : vector<8x8xf32>
    %110 = tpu.matmul %107, %108, %cst_36 {dimension_numbers = #tpu.dot_dimension_numbers<[1], [1], [0], [0], [0, 0, 1, 0], [], []>} : vector<8x16xbf16>, vector<8x16xbf16>, vector<8x8xf32> -> vector<8x8xf32>
    %cst_37 = arith.constant dense<0xFF800000> : vector<8xf32>
    %111 = vector.multi_reduction <maximumf>, %110, %cst_37 [1] : vector<8x8xf32> to vector<8xf32>
    %112 = vector.shape_cast %111 : vector<8xf32> to vector<8x1xf32>
    %113 = vector.broadcast %112 : vector<8x1xf32> to vector<8x8xf32>
    %114 = arith.subf %110, %113 : vector<8x8xf32>
    %115 = math.exp %114 : vector<8x8xf32>
    %cst_38 = arith.constant dense<0.000000e+00> : vector<8xf32>
    %116 = vector.multi_reduction <add>, %115, %cst_38 [1] : vector<8x8xf32> to vector<8xf32>
    %117 = vector.shape_cast %116 : vector<8xf32> to vector<8x1xf32>
    %118 = tpu.reciprocal %117 : vector<8x1xf32> -> vector<8x1xf32>
    %119 = vector.broadcast %118 : vector<8x1xf32> to vector<8x8xf32>
    %120 = arith.mulf %115, %119 : vector<8x8xf32>
    %121 = arith.truncf %120 : vector<8x8xf32> to vector<8x8xbf16>
    %cst_39 = arith.constant dense<0.000000e+00> : vector<8x16xf32>
    %122 = tpu.matmul %121, %109, %cst_39 {dimension_numbers = #tpu.dot_dimension_numbers<[1], [0], [0], [1], [0, 0, 1, 1], [], []>} : vector<8x8xbf16>, vector<8x16xbf16>, vector<8x16xf32> -> vector<8x16xf32>
    %123 = arith.truncf %122 : vector<8x16xf32> to vector<8x16xbf16>
    %124 = vector.extract_strided_slice %39 {offsets = [48, 0], sizes = [16, 64], strides = [1, 1]} : vector<64x64xbf16> to vector<16x64xbf16>
    %cst_40 = arith.constant dense<0.000000e+00> : vector<8x64xf32>
    %125 = tpu.matmul %123, %124, %cst_40 {dimension_numbers = #tpu.dot_dimension_numbers<[1], [0], [0], [1], [0, 0, 1, 1], [], []>} : vector<8x16xbf16>, vector<16x64xbf16>, vector<8x64xf32> -> vector<8x64xf32>
    %126 = arith.addf %106, %125 : vector<8x64xf32>
    %127 = vector.extract_strided_slice %23 {offsets = [8, 0], sizes = [8, 64], strides = [1, 1]} : vector<16x64xf32> to vector<8x64xf32>
    %128 = arith.truncf %127 : vector<8x64xf32> to vector<8x64xbf16>
    %129 = vector.extract_strided_slice %30 {offsets = [8, 0], sizes = [8, 64], strides = [1, 1]} : vector<16x64xf32> to vector<8x64xf32>
    %130 = arith.truncf %129 : vector<8x64xf32> to vector<8x64xbf16>
    %131 = vector.extract_strided_slice %37 {offsets = [8, 0], sizes = [8, 64], strides = [1, 1]} : vector<16x64xf32> to vector<8x64xf32>
    %132 = arith.truncf %131 : vector<8x64xf32> to vector<8x64xbf16>
    %cst_41 = arith.constant 0.000000e+00 : f32
    %133 = vector.broadcast %cst_41 : f32 to vector<8x64xf32>
    %134 = vector.extract_strided_slice %128 {offsets = [0, 0], sizes = [8, 16], strides = [1, 1]} : vector<8x64xbf16> to vector<8x16xbf16>
    %135 = vector.extract_strided_slice %130 {offsets = [0, 0], sizes = [8, 16], strides = [1, 1]} : vector<8x64xbf16> to vector<8x16xbf16>
    %136 = vector.extract_strided_slice %132 {offsets = [0, 0], sizes = [8, 16], strides = [1, 1]} : vector<8x64xbf16> to vector<8x16xbf16>
    %cst_42 = arith.constant dense<0.000000e+00> : vector<8x8xf32>
    %137 = tpu.matmul %134, %135, %cst_42 {dimension_numbers = #tpu.dot_dimension_numbers<[1], [1], [0], [0], [0, 0, 1, 0], [], []>} : vector<8x16xbf16>, vector<8x16xbf16>, vector<8x8xf32> -> vector<8x8xf32>
    %cst_43 = arith.constant dense<0xFF800000> : vector<8xf32>
    %138 = vector.multi_reduction <maximumf>, %137, %cst_43 [1] : vector<8x8xf32> to vector<8xf32>
    %139 = vector.shape_cast %138 : vector<8xf32> to vector<8x1xf32>
    %140 = vector.broadcast %139 : vector<8x1xf32> to vector<8x8xf32>
    %141 = arith.subf %137, %140 : vector<8x8xf32>
    %142 = math.exp %141 : vector<8x8xf32>
    %cst_44 = arith.constant dense<0.000000e+00> : vector<8xf32>
    %143 = vector.multi_reduction <add>, %142, %cst_44 [1] : vector<8x8xf32> to vector<8xf32>
    %144 = vector.shape_cast %143 : vector<8xf32> to vector<8x1xf32>
    %145 = tpu.reciprocal %144 : vector<8x1xf32> -> vector<8x1xf32>
    %146 = vector.broadcast %145 : vector<8x1xf32> to vector<8x8xf32>
    %147 = arith.mulf %142, %146 : vector<8x8xf32>
    %148 = arith.truncf %147 : vector<8x8xf32> to vector<8x8xbf16>
    %cst_45 = arith.constant dense<0.000000e+00> : vector<8x16xf32>
    %149 = tpu.matmul %148, %136, %cst_45 {dimension_numbers = #tpu.dot_dimension_numbers<[1], [0], [0], [1], [0, 0, 1, 1], [], []>} : vector<8x8xbf16>, vector<8x16xbf16>, vector<8x16xf32> -> vector<8x16xf32>
    %150 = arith.truncf %149 : vector<8x16xf32> to vector<8x16xbf16>
    %151 = vector.extract_strided_slice %39 {offsets = [0, 0], sizes = [16, 64], strides = [1, 1]} : vector<64x64xbf16> to vector<16x64xbf16>
    %cst_46 = arith.constant dense<0.000000e+00> : vector<8x64xf32>
    %152 = tpu.matmul %150, %151, %cst_46 {dimension_numbers = #tpu.dot_dimension_numbers<[1], [0], [0], [1], [0, 0, 1, 1], [], []>} : vector<8x16xbf16>, vector<16x64xbf16>, vector<8x64xf32> -> vector<8x64xf32>
    %153 = arith.addf %133, %152 : vector<8x64xf32>
    %154 = vector.extract_strided_slice %128 {offsets = [0, 16], sizes = [8, 16], strides = [1, 1]} : vector<8x64xbf16> to vector<8x16xbf16>
    %155 = vector.extract_strided_slice %130 {offsets = [0, 16], sizes = [8, 16], strides = [1, 1]} : vector<8x64xbf16> to vector<8x16xbf16>
    %156 = vector.extract_strided_slice %132 {offsets = [0, 16], sizes = [8, 16], strides = [1, 1]} : vector<8x64xbf16> to vector<8x16xbf16>
    %cst_47 = arith.constant dense<0.000000e+00> : vector<8x8xf32>
    %157 = tpu.matmul %154, %155, %cst_47 {dimension_numbers = #tpu.dot_dimension_numbers<[1], [1], [0], [0], [0, 0, 1, 0], [], []>} : vector<8x16xbf16>, vector<8x16xbf16>, vector<8x8xf32> -> vector<8x8xf32>
    %cst_48 = arith.constant dense<0xFF800000> : vector<8xf32>
    %158 = vector.multi_reduction <maximumf>, %157, %cst_48 [1] : vector<8x8xf32> to vector<8xf32>
    %159 = vector.shape_cast %158 : vector<8xf32> to vector<8x1xf32>
    %160 = vector.broadcast %159 : vector<8x1xf32> to vector<8x8xf32>
    %161 = arith.subf %157, %160 : vector<8x8xf32>
    %162 = math.exp %161 : vector<8x8xf32>
    %cst_49 = arith.constant dense<0.000000e+00> : vector<8xf32>
    %163 = vector.multi_reduction <add>, %162, %cst_49 [1] : vector<8x8xf32> to vector<8xf32>
    %164 = vector.shape_cast %163 : vector<8xf32> to vector<8x1xf32>
    %165 = tpu.reciprocal %164 : vector<8x1xf32> -> vector<8x1xf32>
    %166 = vector.broadcast %165 : vector<8x1xf32> to vector<8x8xf32>
    %167 = arith.mulf %162, %166 : vector<8x8xf32>
    %168 = arith.truncf %167 : vector<8x8xf32> to vector<8x8xbf16>
    %cst_50 = arith.constant dense<0.000000e+00> : vector<8x16xf32>
    %169 = tpu.matmul %168, %156, %cst_50 {dimension_numbers = #tpu.dot_dimension_numbers<[1], [0], [0], [1], [0, 0, 1, 1], [], []>} : vector<8x8xbf16>, vector<8x16xbf16>, vector<8x16xf32> -> vector<8x16xf32>
    %170 = arith.truncf %169 : vector<8x16xf32> to vector<8x16xbf16>
    %171 = vector.extract_strided_slice %39 {offsets = [16, 0], sizes = [16, 64], strides = [1, 1]} : vector<64x64xbf16> to vector<16x64xbf16>
    %cst_51 = arith.constant dense<0.000000e+00> : vector<8x64xf32>
    %172 = tpu.matmul %170, %171, %cst_51 {dimension_numbers = #tpu.dot_dimension_numbers<[1], [0], [0], [1], [0, 0, 1, 1], [], []>} : vector<8x16xbf16>, vector<16x64xbf16>, vector<8x64xf32> -> vector<8x64xf32>
    %173 = arith.addf %153, %172 : vector<8x64xf32>
    %174 = vector.extract_strided_slice %128 {offsets = [0, 32], sizes = [8, 16], strides = [1, 1]} : vector<8x64xbf16> to vector<8x16xbf16>
    %175 = vector.extract_strided_slice %130 {offsets = [0, 32], sizes = [8, 16], strides = [1, 1]} : vector<8x64xbf16> to vector<8x16xbf16>
    %176 = vector.extract_strided_slice %132 {offsets = [0, 32], sizes = [8, 16], strides = [1, 1]} : vector<8x64xbf16> to vector<8x16xbf16>
    %cst_52 = arith.constant dense<0.000000e+00> : vector<8x8xf32>
    %177 = tpu.matmul %174, %175, %cst_52 {dimension_numbers = #tpu.dot_dimension_numbers<[1], [1], [0], [0], [0, 0, 1, 0], [], []>} : vector<8x16xbf16>, vector<8x16xbf16>, vector<8x8xf32> -> vector<8x8xf32>
    %cst_53 = arith.constant dense<0xFF800000> : vector<8xf32>
    %178 = vector.multi_reduction <maximumf>, %177, %cst_53 [1] : vector<8x8xf32> to vector<8xf32>
    %179 = vector.shape_cast %178 : vector<8xf32> to vector<8x1xf32>
    %180 = vector.broadcast %179 : vector<8x1xf32> to vector<8x8xf32>
    %181 = arith.subf %177, %180 : vector<8x8xf32>
    %182 = math.exp %181 : vector<8x8xf32>
    %cst_54 = arith.constant dense<0.000000e+00> : vector<8xf32>
    %183 = vector.multi_reduction <add>, %182, %cst_54 [1] : vector<8x8xf32> to vector<8xf32>
    %184 = vector.shape_cast %183 : vector<8xf32> to vector<8x1xf32>
    %185 = tpu.reciprocal %184 : vector<8x1xf32> -> vector<8x1xf32>
    %186 = vector.broadcast %185 : vector<8x1xf32> to vector<8x8xf32>
    %187 = arith.mulf %182, %186 : vector<8x8xf32>
    %188 = arith.truncf %187 : vector<8x8xf32> to vector<8x8xbf16>
    %cst_55 = arith.constant dense<0.000000e+00> : vector<8x16xf32>
    %189 = tpu.matmul %188, %176, %cst_55 {dimension_numbers = #tpu.dot_dimension_numbers<[1], [0], [0], [1], [0, 0, 1, 1], [], []>} : vector<8x8xbf16>, vector<8x16xbf16>, vector<8x16xf32> -> vector<8x16xf32>
    %190 = arith.truncf %189 : vector<8x16xf32> to vector<8x16xbf16>
    %191 = vector.extract_strided_slice %39 {offsets = [32, 0], sizes = [16, 64], strides = [1, 1]} : vector<64x64xbf16> to vector<16x64xbf16>
    %cst_56 = arith.constant dense<0.000000e+00> : vector<8x64xf32>
    %192 = tpu.matmul %190, %191, %cst_56 {dimension_numbers = #tpu.dot_dimension_numbers<[1], [0], [0], [1], [0, 0, 1, 1], [], []>} : vector<8x16xbf16>, vector<16x64xbf16>, vector<8x64xf32> -> vector<8x64xf32>
    %193 = arith.addf %173, %192 : vector<8x64xf32>
    %194 = vector.extract_strided_slice %128 {offsets = [0, 48], sizes = [8, 16], strides = [1, 1]} : vector<8x64xbf16> to vector<8x16xbf16>
    %195 = vector.extract_strided_slice %130 {offsets = [0, 48], sizes = [8, 16], strides = [1, 1]} : vector<8x64xbf16> to vector<8x16xbf16>
    %196 = vector.extract_strided_slice %132 {offsets = [0, 48], sizes = [8, 16], strides = [1, 1]} : vector<8x64xbf16> to vector<8x16xbf16>
    %cst_57 = arith.constant dense<0.000000e+00> : vector<8x8xf32>
    %197 = tpu.matmul %194, %195, %cst_57 {dimension_numbers = #tpu.dot_dimension_numbers<[1], [1], [0], [0], [0, 0, 1, 0], [], []>} : vector<8x16xbf16>, vector<8x16xbf16>, vector<8x8xf32> -> vector<8x8xf32>
    %cst_58 = arith.constant dense<0xFF800000> : vector<8xf32>
    %198 = vector.multi_reduction <maximumf>, %197, %cst_58 [1] : vector<8x8xf32> to vector<8xf32>
    %199 = vector.shape_cast %198 : vector<8xf32> to vector<8x1xf32>
    %200 = vector.broadcast %199 : vector<8x1xf32> to vector<8x8xf32>
    %201 = arith.subf %197, %200 : vector<8x8xf32>
    %202 = math.exp %201 : vector<8x8xf32>
    %cst_59 = arith.constant dense<0.000000e+00> : vector<8xf32>
    %203 = vector.multi_reduction <add>, %202, %cst_59 [1] : vector<8x8xf32> to vector<8xf32>
    %204 = vector.shape_cast %203 : vector<8xf32> to vector<8x1xf32>
    %205 = tpu.reciprocal %204 : vector<8x1xf32> -> vector<8x1xf32>
    %206 = vector.broadcast %205 : vector<8x1xf32> to vector<8x8xf32>
    %207 = arith.mulf %202, %206 : vector<8x8xf32>
    %208 = arith.truncf %207 : vector<8x8xf32> to vector<8x8xbf16>
    %cst_60 = arith.constant dense<0.000000e+00> : vector<8x16xf32>
    %209 = tpu.matmul %208, %196, %cst_60 {dimension_numbers = #tpu.dot_dimension_numbers<[1], [0], [0], [1], [0, 0, 1, 1], [], []>} : vector<8x8xbf16>, vector<8x16xbf16>, vector<8x16xf32> -> vector<8x16xf32>
    %210 = arith.truncf %209 : vector<8x16xf32> to vector<8x16xbf16>
    %211 = vector.extract_strided_slice %39 {offsets = [48, 0], sizes = [16, 64], strides = [1, 1]} : vector<64x64xbf16> to vector<16x64xbf16>
    %cst_61 = arith.constant dense<0.000000e+00> : vector<8x64xf32>
    %212 = tpu.matmul %210, %211, %cst_61 {dimension_numbers = #tpu.dot_dimension_numbers<[1], [0], [0], [1], [0, 0, 1, 1], [], []>} : vector<8x16xbf16>, vector<16x64xbf16>, vector<8x64xf32> -> vector<8x64xf32>
    %213 = arith.addf %193, %212 : vector<8x64xf32>
    %214 = tpu.concatenate %126, %213 in 0 : vector<8x64xf32>, vector<8x64xf32> -> vector<16x64xf32>
    %215 = vector.extract_strided_slice %0 {offsets = [8, 0], sizes = [1, 64], strides = [1, 1]} : vector<18x64xf32> to vector<1x64xf32>
    %216 = vector.broadcast %215 : vector<1x64xf32> to vector<16x64xf32>
    %217 = arith.addf %214, %216 : vector<16x64xf32>
    %218 = arith.addf %8, %217 : vector<16x64xf32>
    %cst_62 = arith.constant dense<0.000000e+00> : vector<16xf32>
    %219 = vector.multi_reduction <add>, %218, %cst_62 [1] : vector<16x64xf32> to vector<16xf32>
    %220 = vector.shape_cast %219 : vector<16xf32> to vector<16x1xf32>
    %221 = arith.mulf %218, %218 : vector<16x64xf32>
    %cst_63 = arith.constant dense<0.000000e+00> : vector<16xf32>
    %222 = vector.multi_reduction <add>, %221, %cst_63 [1] : vector<16x64xf32> to vector<16xf32>
    %223 = vector.shape_cast %222 : vector<16xf32> to vector<16x1xf32>
    %cst_64 = arith.constant 0.0166666675 : f32
    %224 = vector.broadcast %cst_64 : f32 to vector<16x1xf32>
    %225 = arith.mulf %220, %224 : vector<16x1xf32>
    %cst_65 = arith.constant 0.0166666675 : f32
    %226 = vector.broadcast %cst_65 : f32 to vector<16x1xf32>
    %227 = arith.mulf %223, %226 : vector<16x1xf32>
    %228 = arith.mulf %225, %225 : vector<16x1xf32>
    %229 = arith.subf %227, %228 : vector<16x1xf32>
    %230 = vector.broadcast %225 : vector<16x1xf32> to vector<16x64xf32>
    %231 = arith.subf %218, %230 : vector<16x64xf32>
    %cst_66 = arith.constant 9.99999974E-6 : f32
    %232 = vector.broadcast %cst_66 : f32 to vector<16x1xf32>
    %233 = arith.addf %229, %232 : vector<16x1xf32>
    %234 = math.rsqrt %233 : vector<16x1xf32>
    %235 = vector.broadcast %234 : vector<16x1xf32> to vector<16x64xf32>
    %236 = arith.mulf %231, %235 : vector<16x64xf32>
    %237 = vector.extract_strided_slice %0 {offsets = [10, 0], sizes = [1, 64], strides = [1, 1]} : vector<18x64xf32> to vector<1x64xf32>
    %238 = vector.broadcast %237 : vector<1x64xf32> to vector<16x64xf32>
    %239 = arith.mulf %236, %238 : vector<16x64xf32>
    %240 = vector.extract_strided_slice %0 {offsets = [11, 0], sizes = [1, 64], strides = [1, 1]} : vector<18x64xf32> to vector<1x64xf32>
    %241 = vector.broadcast %240 : vector<1x64xf32> to vector<16x64xf32>
    %242 = arith.addf %239, %241 : vector<16x64xf32>
    %243 = arith.truncf %242 : vector<16x64xf32> to vector<16x64xbf16>
    %c3 = arith.constant 3 : index
    %c0_67 = arith.constant 0 : index
    %c0_68 = arith.constant 0 : index
    %244 = vector.load %arg3[%c3, %c0_67, %c0_68] : memref<10x64x64xbf16, #tpu.memory_space<vmem>>, vector<1x64x64xbf16>
    %245 = vector.shape_cast %244 : vector<1x64x64xbf16> to vector<64x64xbf16>
    %cst_69 = arith.constant dense<0.000000e+00> : vector<16x64xf32>
    %246 = tpu.matmul %243, %245, %cst_69 {dimension_numbers = #tpu.dot_dimension_numbers<[1], [0], [0], [1], [0, 0, 1, 1], [], []>} : vector<16x64xbf16>, vector<64x64xbf16>, vector<16x64xf32> -> vector<16x64xf32>
    %247 = vector.extract_strided_slice %0 {offsets = [3, 0], sizes = [1, 64], strides = [1, 1]} : vector<18x64xf32> to vector<1x64xf32>
    %248 = vector.broadcast %247 : vector<1x64xf32> to vector<16x64xf32>
    %249 = arith.addf %246, %248 : vector<16x64xf32>
    %250 = arith.truncf %16 : vector<20x64xf32> to vector<20x64xbf16>
    %c4 = arith.constant 4 : index
    %c0_70 = arith.constant 0 : index
    %c0_71 = arith.constant 0 : index
    %251 = vector.load %arg3[%c4, %c0_70, %c0_71] : memref<10x64x64xbf16, #tpu.memory_space<vmem>>, vector<1x64x64xbf16>
    %252 = vector.shape_cast %251 : vector<1x64x64xbf16> to vector<64x64xbf16>
    %cst_72 = arith.constant dense<0.000000e+00> : vector<20x64xf32>
    %253 = tpu.matmul %250, %252, %cst_72 {dimension_numbers = #tpu.dot_dimension_numbers<[1], [0], [0], [1], [0, 0, 1, 1], [], []>} : vector<20x64xbf16>, vector<64x64xbf16>, vector<20x64xf32> -> vector<20x64xf32>
    %254 = vector.extract_strided_slice %0 {offsets = [4, 0], sizes = [1, 64], strides = [1, 1]} : vector<18x64xf32> to vector<1x64xf32>
    %255 = vector.broadcast %254 : vector<1x64xf32> to vector<20x64xf32>
    %256 = arith.addf %253, %255 : vector<20x64xf32>
    %257 = arith.truncf %16 : vector<20x64xf32> to vector<20x64xbf16>
    %c5 = arith.constant 5 : index
    %c0_73 = arith.constant 0 : index
    %c0_74 = arith.constant 0 : index
    %258 = vector.load %arg3[%c5, %c0_73, %c0_74] : memref<10x64x64xbf16, #tpu.memory_space<vmem>>, vector<1x64x64xbf16>
    %259 = vector.shape_cast %258 : vector<1x64x64xbf16> to vector<64x64xbf16>
    %cst_75 = arith.constant dense<0.000000e+00> : vector<20x64xf32>
    %260 = tpu.matmul %257, %259, %cst_75 {dimension_numbers = #tpu.dot_dimension_numbers<[1], [0], [0], [1], [0, 0, 1, 1], [], []>} : vector<20x64xbf16>, vector<64x64xbf16>, vector<20x64xf32> -> vector<20x64xf32>
    %261 = vector.extract_strided_slice %0 {offsets = [5, 0], sizes = [1, 64], strides = [1, 1]} : vector<18x64xf32> to vector<1x64xf32>
    %262 = vector.broadcast %261 : vector<1x64xf32> to vector<20x64xf32>
    %263 = arith.addf %260, %262 : vector<20x64xf32>
    %c9 = arith.constant 9 : index
    %c0_76 = arith.constant 0 : index
    %c0_77 = arith.constant 0 : index
    %264 = vector.load %arg3[%c9, %c0_76, %c0_77] : memref<10x64x64xbf16, #tpu.memory_space<vmem>>, vector<1x64x64xbf16>
    %265 = vector.shape_cast %264 : vector<1x64x64xbf16> to vector<64x64xbf16>
    %266 = vector.extract_strided_slice %249 {offsets = [0, 0], sizes = [8, 64], strides = [1, 1]} : vector<16x64xf32> to vector<8x64xf32>
    %267 = arith.truncf %266 : vector<8x64xf32> to vector<8x64xbf16>
    %268 = vector.extract_strided_slice %256 {offsets = [0, 0], sizes = [10, 64], strides = [1, 1]} : vector<20x64xf32> to vector<10x64xf32>
    %269 = arith.truncf %268 : vector<10x64xf32> to vector<10x64xbf16>
    %270 = vector.extract_strided_slice %263 {offsets = [0, 0], sizes = [10, 64], strides = [1, 1]} : vector<20x64xf32> to vector<10x64xf32>
    %271 = arith.truncf %270 : vector<10x64xf32> to vector<10x64xbf16>
    %cst_78 = arith.constant 0.000000e+00 : f32
    %272 = vector.broadcast %cst_78 : f32 to vector<8x64xf32>
    %273 = vector.extract_strided_slice %267 {offsets = [0, 0], sizes = [8, 16], strides = [1, 1]} : vector<8x64xbf16> to vector<8x16xbf16>
    %274 = vector.extract_strided_slice %269 {offsets = [0, 0], sizes = [10, 16], strides = [1, 1]} : vector<10x64xbf16> to vector<10x16xbf16>
    %275 = vector.extract_strided_slice %271 {offsets = [0, 0], sizes = [10, 16], strides = [1, 1]} : vector<10x64xbf16> to vector<10x16xbf16>
    %cst_79 = arith.constant dense<0.000000e+00> : vector<8x10xf32>
    %276 = tpu.matmul %273, %274, %cst_79 {dimension_numbers = #tpu.dot_dimension_numbers<[1], [1], [0], [0], [0, 0, 1, 0], [], []>} : vector<8x16xbf16>, vector<10x16xbf16>, vector<8x10xf32> -> vector<8x10xf32>
    %cst_80 = arith.constant dense<0xFF800000> : vector<8xf32>
    %277 = vector.multi_reduction <maximumf>, %276, %cst_80 [1] : vector<8x10xf32> to vector<8xf32>
    %278 = vector.shape_cast %277 : vector<8xf32> to vector<8x1xf32>
    %279 = vector.broadcast %278 : vector<8x1xf32> to vector<8x10xf32>
    %280 = arith.subf %276, %279 : vector<8x10xf32>
    %281 = math.exp %280 : vector<8x10xf32>
    %cst_81 = arith.constant dense<0.000000e+00> : vector<8xf32>
    %282 = vector.multi_reduction <add>, %281, %cst_81 [1] : vector<8x10xf32> to vector<8xf32>
    %283 = vector.shape_cast %282 : vector<8xf32> to vector<8x1xf32>
    %284 = tpu.reciprocal %283 : vector<8x1xf32> -> vector<8x1xf32>
    %285 = vector.broadcast %284 : vector<8x1xf32> to vector<8x10xf32>
    %286 = arith.mulf %281, %285 : vector<8x10xf32>
    %287 = arith.truncf %286 : vector<8x10xf32> to vector<8x10xbf16>
    %cst_82 = arith.constant dense<0.000000e+00> : vector<8x16xf32>
    %288 = tpu.matmul %287, %275, %cst_82 {dimension_numbers = #tpu.dot_dimension_numbers<[1], [0], [0], [1], [0, 0, 1, 1], [], []>} : vector<8x10xbf16>, vector<10x16xbf16>, vector<8x16xf32> -> vector<8x16xf32>
    %289 = arith.truncf %288 : vector<8x16xf32> to vector<8x16xbf16>
    %290 = vector.extract_strided_slice %265 {offsets = [0, 0], sizes = [16, 64], strides = [1, 1]} : vector<64x64xbf16> to vector<16x64xbf16>
    %cst_83 = arith.constant dense<0.000000e+00> : vector<8x64xf32>
    %291 = tpu.matmul %289, %290, %cst_83 {dimension_numbers = #tpu.dot_dimension_numbers<[1], [0], [0], [1], [0, 0, 1, 1], [], []>} : vector<8x16xbf16>, vector<16x64xbf16>, vector<8x64xf32> -> vector<8x64xf32>
    %292 = arith.addf %272, %291 : vector<8x64xf32>
    %293 = vector.extract_strided_slice %267 {offsets = [0, 16], sizes = [8, 16], strides = [1, 1]} : vector<8x64xbf16> to vector<8x16xbf16>
    %294 = vector.extract_strided_slice %269 {offsets = [0, 16], sizes = [10, 16], strides = [1, 1]} : vector<10x64xbf16> to vector<10x16xbf16>
    %295 = vector.extract_strided_slice %271 {offsets = [0, 16], sizes = [10, 16], strides = [1, 1]} : vector<10x64xbf16> to vector<10x16xbf16>
    %cst_84 = arith.constant dense<0.000000e+00> : vector<8x10xf32>
    %296 = tpu.matmul %293, %294, %cst_84 {dimension_numbers = #tpu.dot_dimension_numbers<[1], [1], [0], [0], [0, 0, 1, 0], [], []>} : vector<8x16xbf16>, vector<10x16xbf16>, vector<8x10xf32> -> vector<8x10xf32>
    %cst_85 = arith.constant dense<0xFF800000> : vector<8xf32>
    %297 = vector.multi_reduction <maximumf>, %296, %cst_85 [1] : vector<8x10xf32> to vector<8xf32>
    %298 = vector.shape_cast %297 : vector<8xf32> to vector<8x1xf32>
    %299 = vector.broadcast %298 : vector<8x1xf32> to vector<8x10xf32>
    %300 = arith.subf %296, %299 : vector<8x10xf32>
    %301 = math.exp %300 : vector<8x10xf32>
    %cst_86 = arith.constant dense<0.000000e+00> : vector<8xf32>
    %302 = vector.multi_reduction <add>, %301, %cst_86 [1] : vector<8x10xf32> to vector<8xf32>
    %303 = vector.shape_cast %302 : vector<8xf32> to vector<8x1xf32>
    %304 = tpu.reciprocal %303 : vector<8x1xf32> -> vector<8x1xf32>
    %305 = vector.broadcast %304 : vector<8x1xf32> to vector<8x10xf32>
    %306 = arith.mulf %301, %305 : vector<8x10xf32>
    %307 = arith.truncf %306 : vector<8x10xf32> to vector<8x10xbf16>
    %cst_87 = arith.constant dense<0.000000e+00> : vector<8x16xf32>
    %308 = tpu.matmul %307, %295, %cst_87 {dimension_numbers = #tpu.dot_dimension_numbers<[1], [0], [0], [1], [0, 0, 1, 1], [], []>} : vector<8x10xbf16>, vector<10x16xbf16>, vector<8x16xf32> -> vector<8x16xf32>
    %309 = arith.truncf %308 : vector<8x16xf32> to vector<8x16xbf16>
    %310 = vector.extract_strided_slice %265 {offsets = [16, 0], sizes = [16, 64], strides = [1, 1]} : vector<64x64xbf16> to vector<16x64xbf16>
    %cst_88 = arith.constant dense<0.000000e+00> : vector<8x64xf32>
    %311 = tpu.matmul %309, %310, %cst_88 {dimension_numbers = #tpu.dot_dimension_numbers<[1], [0], [0], [1], [0, 0, 1, 1], [], []>} : vector<8x16xbf16>, vector<16x64xbf16>, vector<8x64xf32> -> vector<8x64xf32>
    %312 = arith.addf %292, %311 : vector<8x64xf32>
    %313 = vector.extract_strided_slice %267 {offsets = [0, 32], sizes = [8, 16], strides = [1, 1]} : vector<8x64xbf16> to vector<8x16xbf16>
    %314 = vector.extract_strided_slice %269 {offsets = [0, 32], sizes = [10, 16], strides = [1, 1]} : vector<10x64xbf16> to vector<10x16xbf16>
    %315 = vector.extract_strided_slice %271 {offsets = [0, 32], sizes = [10, 16], strides = [1, 1]} : vector<10x64xbf16> to vector<10x16xbf16>
    %cst_89 = arith.constant dense<0.000000e+00> : vector<8x10xf32>
    %316 = tpu.matmul %313, %314, %cst_89 {dimension_numbers = #tpu.dot_dimension_numbers<[1], [1], [0], [0], [0, 0, 1, 0], [], []>} : vector<8x16xbf16>, vector<10x16xbf16>, vector<8x10xf32> -> vector<8x10xf32>
    %cst_90 = arith.constant dense<0xFF800000> : vector<8xf32>
    %317 = vector.multi_reduction <maximumf>, %316, %cst_90 [1] : vector<8x10xf32> to vector<8xf32>
    %318 = vector.shape_cast %317 : vector<8xf32> to vector<8x1xf32>
    %319 = vector.broadcast %318 : vector<8x1xf32> to vector<8x10xf32>
    %320 = arith.subf %316, %319 : vector<8x10xf32>
    %321 = math.exp %320 : vector<8x10xf32>
    %cst_91 = arith.constant dense<0.000000e+00> : vector<8xf32>
    %322 = vector.multi_reduction <add>, %321, %cst_91 [1] : vector<8x10xf32> to vector<8xf32>
    %323 = vector.shape_cast %322 : vector<8xf32> to vector<8x1xf32>
    %324 = tpu.reciprocal %323 : vector<8x1xf32> -> vector<8x1xf32>
    %325 = vector.broadcast %324 : vector<8x1xf32> to vector<8x10xf32>
    %326 = arith.mulf %321, %325 : vector<8x10xf32>
    %327 = arith.truncf %326 : vector<8x10xf32> to vector<8x10xbf16>
    %cst_92 = arith.constant dense<0.000000e+00> : vector<8x16xf32>
    %328 = tpu.matmul %327, %315, %cst_92 {dimension_numbers = #tpu.dot_dimension_numbers<[1], [0], [0], [1], [0, 0, 1, 1], [], []>} : vector<8x10xbf16>, vector<10x16xbf16>, vector<8x16xf32> -> vector<8x16xf32>
    %329 = arith.truncf %328 : vector<8x16xf32> to vector<8x16xbf16>
    %330 = vector.extract_strided_slice %265 {offsets = [32, 0], sizes = [16, 64], strides = [1, 1]} : vector<64x64xbf16> to vector<16x64xbf16>
    %cst_93 = arith.constant dense<0.000000e+00> : vector<8x64xf32>
    %331 = tpu.matmul %329, %330, %cst_93 {dimension_numbers = #tpu.dot_dimension_numbers<[1], [0], [0], [1], [0, 0, 1, 1], [], []>} : vector<8x16xbf16>, vector<16x64xbf16>, vector<8x64xf32> -> vector<8x64xf32>
    %332 = arith.addf %312, %331 : vector<8x64xf32>
    %333 = vector.extract_strided_slice %267 {offsets = [0, 48], sizes = [8, 16], strides = [1, 1]} : vector<8x64xbf16> to vector<8x16xbf16>
    %334 = vector.extract_strided_slice %269 {offsets = [0, 48], sizes = [10, 16], strides = [1, 1]} : vector<10x64xbf16> to vector<10x16xbf16>
    %335 = vector.extract_strided_slice %271 {offsets = [0, 48], sizes = [10, 16], strides = [1, 1]} : vector<10x64xbf16> to vector<10x16xbf16>
    %cst_94 = arith.constant dense<0.000000e+00> : vector<8x10xf32>
    %336 = tpu.matmul %333, %334, %cst_94 {dimension_numbers = #tpu.dot_dimension_numbers<[1], [1], [0], [0], [0, 0, 1, 0], [], []>} : vector<8x16xbf16>, vector<10x16xbf16>, vector<8x10xf32> -> vector<8x10xf32>
    %cst_95 = arith.constant dense<0xFF800000> : vector<8xf32>
    %337 = vector.multi_reduction <maximumf>, %336, %cst_95 [1] : vector<8x10xf32> to vector<8xf32>
    %338 = vector.shape_cast %337 : vector<8xf32> to vector<8x1xf32>
    %339 = vector.broadcast %338 : vector<8x1xf32> to vector<8x10xf32>
    %340 = arith.subf %336, %339 : vector<8x10xf32>
    %341 = math.exp %340 : vector<8x10xf32>
    %cst_96 = arith.constant dense<0.000000e+00> : vector<8xf32>
    %342 = vector.multi_reduction <add>, %341, %cst_96 [1] : vector<8x10xf32> to vector<8xf32>
    %343 = vector.shape_cast %342 : vector<8xf32> to vector<8x1xf32>
    %344 = tpu.reciprocal %343 : vector<8x1xf32> -> vector<8x1xf32>
    %345 = vector.broadcast %344 : vector<8x1xf32> to vector<8x10xf32>
    %346 = arith.mulf %341, %345 : vector<8x10xf32>
    %347 = arith.truncf %346 : vector<8x10xf32> to vector<8x10xbf16>
    %cst_97 = arith.constant dense<0.000000e+00> : vector<8x16xf32>
    %348 = tpu.matmul %347, %335, %cst_97 {dimension_numbers = #tpu.dot_dimension_numbers<[1], [0], [0], [1], [0, 0, 1, 1], [], []>} : vector<8x10xbf16>, vector<10x16xbf16>, vector<8x16xf32> -> vector<8x16xf32>
    %349 = arith.truncf %348 : vector<8x16xf32> to vector<8x16xbf16>
    %350 = vector.extract_strided_slice %265 {offsets = [48, 0], sizes = [16, 64], strides = [1, 1]} : vector<64x64xbf16> to vector<16x64xbf16>
    %cst_98 = arith.constant dense<0.000000e+00> : vector<8x64xf32>
    %351 = tpu.matmul %349, %350, %cst_98 {dimension_numbers = #tpu.dot_dimension_numbers<[1], [0], [0], [1], [0, 0, 1, 1], [], []>} : vector<8x16xbf16>, vector<16x64xbf16>, vector<8x64xf32> -> vector<8x64xf32>
    %352 = arith.addf %332, %351 : vector<8x64xf32>
    %353 = vector.extract_strided_slice %249 {offsets = [8, 0], sizes = [8, 64], strides = [1, 1]} : vector<16x64xf32> to vector<8x64xf32>
    %354 = arith.truncf %353 : vector<8x64xf32> to vector<8x64xbf16>
    %355 = vector.extract_strided_slice %256 {offsets = [10, 0], sizes = [10, 64], strides = [1, 1]} : vector<20x64xf32> to vector<10x64xf32>
    %356 = arith.truncf %355 : vector<10x64xf32> to vector<10x64xbf16>
    %357 = vector.extract_strided_slice %263 {offsets = [10, 0], sizes = [10, 64], strides = [1, 1]} : vector<20x64xf32> to vector<10x64xf32>
    %358 = arith.truncf %357 : vector<10x64xf32> to vector<10x64xbf16>
    %cst_99 = arith.constant 0.000000e+00 : f32
    %359 = vector.broadcast %cst_99 : f32 to vector<8x64xf32>
    %360 = vector.extract_strided_slice %354 {offsets = [0, 0], sizes = [8, 16], strides = [1, 1]} : vector<8x64xbf16> to vector<8x16xbf16>
    %361 = vector.extract_strided_slice %356 {offsets = [0, 0], sizes = [10, 16], strides = [1, 1]} : vector<10x64xbf16> to vector<10x16xbf16>
    %362 = vector.extract_strided_slice %358 {offsets = [0, 0], sizes = [10, 16], strides = [1, 1]} : vector<10x64xbf16> to vector<10x16xbf16>
    %cst_100 = arith.constant dense<0.000000e+00> : vector<8x10xf32>
    %363 = tpu.matmul %360, %361, %cst_100 {dimension_numbers = #tpu.dot_dimension_numbers<[1], [1], [0], [0], [0, 0, 1, 0], [], []>} : vector<8x16xbf16>, vector<10x16xbf16>, vector<8x10xf32> -> vector<8x10xf32>
    %cst_101 = arith.constant dense<0xFF800000> : vector<8xf32>
    %364 = vector.multi_reduction <maximumf>, %363, %cst_101 [1] : vector<8x10xf32> to vector<8xf32>
    %365 = vector.shape_cast %364 : vector<8xf32> to vector<8x1xf32>
    %366 = vector.broadcast %365 : vector<8x1xf32> to vector<8x10xf32>
    %367 = arith.subf %363, %366 : vector<8x10xf32>
    %368 = math.exp %367 : vector<8x10xf32>
    %cst_102 = arith.constant dense<0.000000e+00> : vector<8xf32>
    %369 = vector.multi_reduction <add>, %368, %cst_102 [1] : vector<8x10xf32> to vector<8xf32>
    %370 = vector.shape_cast %369 : vector<8xf32> to vector<8x1xf32>
    %371 = tpu.reciprocal %370 : vector<8x1xf32> -> vector<8x1xf32>
    %372 = vector.broadcast %371 : vector<8x1xf32> to vector<8x10xf32>
    %373 = arith.mulf %368, %372 : vector<8x10xf32>
    %374 = arith.truncf %373 : vector<8x10xf32> to vector<8x10xbf16>
    %cst_103 = arith.constant dense<0.000000e+00> : vector<8x16xf32>
    %375 = tpu.matmul %374, %362, %cst_103 {dimension_numbers = #tpu.dot_dimension_numbers<[1], [0], [0], [1], [0, 0, 1, 1], [], []>} : vector<8x10xbf16>, vector<10x16xbf16>, vector<8x16xf32> -> vector<8x16xf32>
    %376 = arith.truncf %375 : vector<8x16xf32> to vector<8x16xbf16>
    %377 = vector.extract_strided_slice %265 {offsets = [0, 0], sizes = [16, 64], strides = [1, 1]} : vector<64x64xbf16> to vector<16x64xbf16>
    %cst_104 = arith.constant dense<0.000000e+00> : vector<8x64xf32>
    %378 = tpu.matmul %376, %377, %cst_104 {dimension_numbers = #tpu.dot_dimension_numbers<[1], [0], [0], [1], [0, 0, 1, 1], [], []>} : vector<8x16xbf16>, vector<16x64xbf16>, vector<8x64xf32> -> vector<8x64xf32>
    %379 = arith.addf %359, %378 : vector<8x64xf32>
    %380 = vector.extract_strided_slice %354 {offsets = [0, 16], sizes = [8, 16], strides = [1, 1]} : vector<8x64xbf16> to vector<8x16xbf16>
    %381 = vector.extract_strided_slice %356 {offsets = [0, 16], sizes = [10, 16], strides = [1, 1]} : vector<10x64xbf16> to vector<10x16xbf16>
    %382 = vector.extract_strided_slice %358 {offsets = [0, 16], sizes = [10, 16], strides = [1, 1]} : vector<10x64xbf16> to vector<10x16xbf16>
    %cst_105 = arith.constant dense<0.000000e+00> : vector<8x10xf32>
    %383 = tpu.matmul %380, %381, %cst_105 {dimension_numbers = #tpu.dot_dimension_numbers<[1], [1], [0], [0], [0, 0, 1, 0], [], []>} : vector<8x16xbf16>, vector<10x16xbf16>, vector<8x10xf32> -> vector<8x10xf32>
    %cst_106 = arith.constant dense<0xFF800000> : vector<8xf32>
    %384 = vector.multi_reduction <maximumf>, %383, %cst_106 [1] : vector<8x10xf32> to vector<8xf32>
    %385 = vector.shape_cast %384 : vector<8xf32> to vector<8x1xf32>
    %386 = vector.broadcast %385 : vector<8x1xf32> to vector<8x10xf32>
    %387 = arith.subf %383, %386 : vector<8x10xf32>
    %388 = math.exp %387 : vector<8x10xf32>
    %cst_107 = arith.constant dense<0.000000e+00> : vector<8xf32>
    %389 = vector.multi_reduction <add>, %388, %cst_107 [1] : vector<8x10xf32> to vector<8xf32>
    %390 = vector.shape_cast %389 : vector<8xf32> to vector<8x1xf32>
    %391 = tpu.reciprocal %390 : vector<8x1xf32> -> vector<8x1xf32>
    %392 = vector.broadcast %391 : vector<8x1xf32> to vector<8x10xf32>
    %393 = arith.mulf %388, %392 : vector<8x10xf32>
    %394 = arith.truncf %393 : vector<8x10xf32> to vector<8x10xbf16>
    %cst_108 = arith.constant dense<0.000000e+00> : vector<8x16xf32>
    %395 = tpu.matmul %394, %382, %cst_108 {dimension_numbers = #tpu.dot_dimension_numbers<[1], [0], [0], [1], [0, 0, 1, 1], [], []>} : vector<8x10xbf16>, vector<10x16xbf16>, vector<8x16xf32> -> vector<8x16xf32>
    %396 = arith.truncf %395 : vector<8x16xf32> to vector<8x16xbf16>
    %397 = vector.extract_strided_slice %265 {offsets = [16, 0], sizes = [16, 64], strides = [1, 1]} : vector<64x64xbf16> to vector<16x64xbf16>
    %cst_109 = arith.constant dense<0.000000e+00> : vector<8x64xf32>
    %398 = tpu.matmul %396, %397, %cst_109 {dimension_numbers = #tpu.dot_dimension_numbers<[1], [0], [0], [1], [0, 0, 1, 1], [], []>} : vector<8x16xbf16>, vector<16x64xbf16>, vector<8x64xf32> -> vector<8x64xf32>
    %399 = arith.addf %379, %398 : vector<8x64xf32>
    %400 = vector.extract_strided_slice %354 {offsets = [0, 32], sizes = [8, 16], strides = [1, 1]} : vector<8x64xbf16> to vector<8x16xbf16>
    %401 = vector.extract_strided_slice %356 {offsets = [0, 32], sizes = [10, 16], strides = [1, 1]} : vector<10x64xbf16> to vector<10x16xbf16>
    %402 = vector.extract_strided_slice %358 {offsets = [0, 32], sizes = [10, 16], strides = [1, 1]} : vector<10x64xbf16> to vector<10x16xbf16>
    %cst_110 = arith.constant dense<0.000000e+00> : vector<8x10xf32>
    %403 = tpu.matmul %400, %401, %cst_110 {dimension_numbers = #tpu.dot_dimension_numbers<[1], [1], [0], [0], [0, 0, 1, 0], [], []>} : vector<8x16xbf16>, vector<10x16xbf16>, vector<8x10xf32> -> vector<8x10xf32>
    %cst_111 = arith.constant dense<0xFF800000> : vector<8xf32>
    %404 = vector.multi_reduction <maximumf>, %403, %cst_111 [1] : vector<8x10xf32> to vector<8xf32>
    %405 = vector.shape_cast %404 : vector<8xf32> to vector<8x1xf32>
    %406 = vector.broadcast %405 : vector<8x1xf32> to vector<8x10xf32>
    %407 = arith.subf %403, %406 : vector<8x10xf32>
    %408 = math.exp %407 : vector<8x10xf32>
    %cst_112 = arith.constant dense<0.000000e+00> : vector<8xf32>
    %409 = vector.multi_reduction <add>, %408, %cst_112 [1] : vector<8x10xf32> to vector<8xf32>
    %410 = vector.shape_cast %409 : vector<8xf32> to vector<8x1xf32>
    %411 = tpu.reciprocal %410 : vector<8x1xf32> -> vector<8x1xf32>
    %412 = vector.broadcast %411 : vector<8x1xf32> to vector<8x10xf32>
    %413 = arith.mulf %408, %412 : vector<8x10xf32>
    %414 = arith.truncf %413 : vector<8x10xf32> to vector<8x10xbf16>
    %cst_113 = arith.constant dense<0.000000e+00> : vector<8x16xf32>
    %415 = tpu.matmul %414, %402, %cst_113 {dimension_numbers = #tpu.dot_dimension_numbers<[1], [0], [0], [1], [0, 0, 1, 1], [], []>} : vector<8x10xbf16>, vector<10x16xbf16>, vector<8x16xf32> -> vector<8x16xf32>
    %416 = arith.truncf %415 : vector<8x16xf32> to vector<8x16xbf16>
    %417 = vector.extract_strided_slice %265 {offsets = [32, 0], sizes = [16, 64], strides = [1, 1]} : vector<64x64xbf16> to vector<16x64xbf16>
    %cst_114 = arith.constant dense<0.000000e+00> : vector<8x64xf32>
    %418 = tpu.matmul %416, %417, %cst_114 {dimension_numbers = #tpu.dot_dimension_numbers<[1], [0], [0], [1], [0, 0, 1, 1], [], []>} : vector<8x16xbf16>, vector<16x64xbf16>, vector<8x64xf32> -> vector<8x64xf32>
    %419 = arith.addf %399, %418 : vector<8x64xf32>
    %420 = vector.extract_strided_slice %354 {offsets = [0, 48], sizes = [8, 16], strides = [1, 1]} : vector<8x64xbf16> to vector<8x16xbf16>
    %421 = vector.extract_strided_slice %356 {offsets = [0, 48], sizes = [10, 16], strides = [1, 1]} : vector<10x64xbf16> to vector<10x16xbf16>
    %422 = vector.extract_strided_slice %358 {offsets = [0, 48], sizes = [10, 16], strides = [1, 1]} : vector<10x64xbf16> to vector<10x16xbf16>
    %cst_115 = arith.constant dense<0.000000e+00> : vector<8x10xf32>
    %423 = tpu.matmul %420, %421, %cst_115 {dimension_numbers = #tpu.dot_dimension_numbers<[1], [1], [0], [0], [0, 0, 1, 0], [], []>} : vector<8x16xbf16>, vector<10x16xbf16>, vector<8x10xf32> -> vector<8x10xf32>
    %cst_116 = arith.constant dense<0xFF800000> : vector<8xf32>
    %424 = vector.multi_reduction <maximumf>, %423, %cst_116 [1] : vector<8x10xf32> to vector<8xf32>
    %425 = vector.shape_cast %424 : vector<8xf32> to vector<8x1xf32>
    %426 = vector.broadcast %425 : vector<8x1xf32> to vector<8x10xf32>
    %427 = arith.subf %423, %426 : vector<8x10xf32>
    %428 = math.exp %427 : vector<8x10xf32>
    %cst_117 = arith.constant dense<0.000000e+00> : vector<8xf32>
    %429 = vector.multi_reduction <add>, %428, %cst_117 [1] : vector<8x10xf32> to vector<8xf32>
    %430 = vector.shape_cast %429 : vector<8xf32> to vector<8x1xf32>
    %431 = tpu.reciprocal %430 : vector<8x1xf32> -> vector<8x1xf32>
    %432 = vector.broadcast %431 : vector<8x1xf32> to vector<8x10xf32>
    %433 = arith.mulf %428, %432 : vector<8x10xf32>
    %434 = arith.truncf %433 : vector<8x10xf32> to vector<8x10xbf16>
    %cst_118 = arith.constant dense<0.000000e+00> : vector<8x16xf32>
    %435 = tpu.matmul %434, %422, %cst_118 {dimension_numbers = #tpu.dot_dimension_numbers<[1], [0], [0], [1], [0, 0, 1, 1], [], []>} : vector<8x10xbf16>, vector<10x16xbf16>, vector<8x16xf32> -> vector<8x16xf32>
    %436 = arith.truncf %435 : vector<8x16xf32> to vector<8x16xbf16>
    %437 = vector.extract_strided_slice %265 {offsets = [48, 0], sizes = [16, 64], strides = [1, 1]} : vector<64x64xbf16> to vector<16x64xbf16>
    %cst_119 = arith.constant dense<0.000000e+00> : vector<8x64xf32>
    %438 = tpu.matmul %436, %437, %cst_119 {dimension_numbers = #tpu.dot_dimension_numbers<[1], [0], [0], [1], [0, 0, 1, 1], [], []>} : vector<8x16xbf16>, vector<16x64xbf16>, vector<8x64xf32> -> vector<8x64xf32>
    %439 = arith.addf %419, %438 : vector<8x64xf32>
    %440 = tpu.concatenate %352, %439 in 0 : vector<8x64xf32>, vector<8x64xf32> -> vector<16x64xf32>
    %441 = vector.extract_strided_slice %0 {offsets = [9, 0], sizes = [1, 64], strides = [1, 1]} : vector<18x64xf32> to vector<1x64xf32>
    %442 = vector.broadcast %441 : vector<1x64xf32> to vector<16x64xf32>
    %443 = arith.addf %440, %442 : vector<16x64xf32>
    %444 = arith.addf %242, %443 : vector<16x64xf32>
    %cst_120 = arith.constant dense<0.000000e+00> : vector<16xf32>
    %445 = vector.multi_reduction <add>, %444, %cst_120 [1] : vector<16x64xf32> to vector<16xf32>
    %446 = vector.shape_cast %445 : vector<16xf32> to vector<16x1xf32>
    %447 = arith.mulf %444, %444 : vector<16x64xf32>
    %cst_121 = arith.constant dense<0.000000e+00> : vector<16xf32>
    %448 = vector.multi_reduction <add>, %447, %cst_121 [1] : vector<16x64xf32> to vector<16xf32>
    %449 = vector.shape_cast %448 : vector<16xf32> to vector<16x1xf32>
    %cst_122 = arith.constant 0.0166666675 : f32
    %450 = vector.broadcast %cst_122 : f32 to vector<16x1xf32>
    %451 = arith.mulf %446, %450 : vector<16x1xf32>
    %cst_123 = arith.constant 0.0166666675 : f32
    %452 = vector.broadcast %cst_123 : f32 to vector<16x1xf32>
    %453 = arith.mulf %449, %452 : vector<16x1xf32>
    %454 = arith.mulf %451, %451 : vector<16x1xf32>
    %455 = arith.subf %453, %454 : vector<16x1xf32>
    %456 = vector.broadcast %451 : vector<16x1xf32> to vector<16x64xf32>
    %457 = arith.subf %444, %456 : vector<16x64xf32>
    %cst_124 = arith.constant 9.99999974E-6 : f32
    %458 = vector.broadcast %cst_124 : f32 to vector<16x1xf32>
    %459 = arith.addf %455, %458 : vector<16x1xf32>
    %460 = math.rsqrt %459 : vector<16x1xf32>
    %461 = vector.broadcast %460 : vector<16x1xf32> to vector<16x64xf32>
    %462 = arith.mulf %457, %461 : vector<16x64xf32>
    %463 = vector.extract_strided_slice %0 {offsets = [12, 0], sizes = [1, 64], strides = [1, 1]} : vector<18x64xf32> to vector<1x64xf32>
    %464 = vector.broadcast %463 : vector<1x64xf32> to vector<16x64xf32>
    %465 = arith.mulf %462, %464 : vector<16x64xf32>
    %466 = vector.extract_strided_slice %0 {offsets = [13, 0], sizes = [1, 64], strides = [1, 1]} : vector<18x64xf32> to vector<1x64xf32>
    %467 = vector.broadcast %466 : vector<1x64xf32> to vector<16x64xf32>
    %468 = arith.addf %465, %467 : vector<16x64xf32>
    %469 = arith.truncf %468 : vector<16x64xf32> to vector<16x64xbf16>
    %c6 = arith.constant 6 : index
    %c0_125 = arith.constant 0 : index
    %c0_126 = arith.constant 0 : index
    %470 = vector.load %arg3[%c6, %c0_125, %c0_126] : memref<10x64x64xbf16, #tpu.memory_space<vmem>>, vector<1x64x64xbf16>
    %471 = vector.shape_cast %470 : vector<1x64x64xbf16> to vector<64x64xbf16>
    %cst_127 = arith.constant dense<0.000000e+00> : vector<16x64xf32>
    %472 = tpu.matmul %469, %471, %cst_127 {dimension_numbers = #tpu.dot_dimension_numbers<[1], [0], [0], [1], [0, 0, 1, 1], [], []>} : vector<16x64xbf16>, vector<64x64xbf16>, vector<16x64xf32> -> vector<16x64xf32>
    %473 = vector.extract_strided_slice %0 {offsets = [6, 0], sizes = [1, 64], strides = [1, 1]} : vector<18x64xf32> to vector<1x64xf32>
    %474 = vector.broadcast %473 : vector<1x64xf32> to vector<16x64xf32>
    %475 = arith.addf %472, %474 : vector<16x64xf32>
    %476 = arith.truncf %475 : vector<16x64xf32> to vector<16x64xbf16>
    %c7 = arith.constant 7 : index
    %c0_128 = arith.constant 0 : index
    %c0_129 = arith.constant 0 : index
    %477 = vector.load %arg3[%c7, %c0_128, %c0_129] : memref<10x64x64xbf16, #tpu.memory_space<vmem>>, vector<1x64x64xbf16>
    %478 = vector.shape_cast %477 : vector<1x64x64xbf16> to vector<64x64xbf16>
    %cst_130 = arith.constant dense<0.000000e+00> : vector<16x64xf32>
    %479 = tpu.matmul %476, %478, %cst_130 {dimension_numbers = #tpu.dot_dimension_numbers<[1], [0], [0], [1], [0, 0, 1, 1], [], []>} : vector<16x64xbf16>, vector<64x64xbf16>, vector<16x64xf32> -> vector<16x64xf32>
    %480 = vector.extract_strided_slice %0 {offsets = [7, 0], sizes = [1, 64], strides = [1, 1]} : vector<18x64xf32> to vector<1x64xf32>
    %481 = vector.broadcast %480 : vector<1x64xf32> to vector<16x64xf32>
    %482 = arith.addf %479, %481 : vector<16x64xf32>
    %483 = arith.addf %468, %482 : vector<16x64xf32>
    %cst_131 = arith.constant dense<0.000000e+00> : vector<16xf32>
    %484 = vector.multi_reduction <add>, %483, %cst_131 [1] : vector<16x64xf32> to vector<16xf32>
    %485 = vector.shape_cast %484 : vector<16xf32> to vector<16x1xf32>
    %486 = arith.mulf %483, %483 : vector<16x64xf32>
    %cst_132 = arith.constant dense<0.000000e+00> : vector<16xf32>
    %487 = vector.multi_reduction <add>, %486, %cst_132 [1] : vector<16x64xf32> to vector<16xf32>
    %488 = vector.shape_cast %487 : vector<16xf32> to vector<16x1xf32>
    %cst_133 = arith.constant 0.0166666675 : f32
    %489 = vector.broadcast %cst_133 : f32 to vector<16x1xf32>
    %490 = arith.mulf %485, %489 : vector<16x1xf32>
    %cst_134 = arith.constant 0.0166666675 : f32
    %491 = vector.broadcast %cst_134 : f32 to vector<16x1xf32>
    %492 = arith.mulf %488, %491 : vector<16x1xf32>
    %493 = arith.mulf %490, %490 : vector<16x1xf32>
    %494 = arith.subf %492, %493 : vector<16x1xf32>
    %495 = vector.broadcast %490 : vector<16x1xf32> to vector<16x64xf32>
    %496 = arith.subf %483, %495 : vector<16x64xf32>
    %cst_135 = arith.constant 9.99999974E-6 : f32
    %497 = vector.broadcast %cst_135 : f32 to vector<16x1xf32>
    %498 = arith.addf %494, %497 : vector<16x1xf32>
    %499 = math.rsqrt %498 : vector<16x1xf32>
    %500 = vector.broadcast %499 : vector<16x1xf32> to vector<16x64xf32>
    %501 = arith.mulf %496, %500 : vector<16x64xf32>
    %502 = vector.extract_strided_slice %0 {offsets = [14, 0], sizes = [1, 64], strides = [1, 1]} : vector<18x64xf32> to vector<1x64xf32>
    %503 = vector.broadcast %502 : vector<1x64xf32> to vector<16x64xf32>
    %504 = arith.mulf %501, %503 : vector<16x64xf32>
    %505 = vector.extract_strided_slice %0 {offsets = [15, 0], sizes = [1, 64], strides = [1, 1]} : vector<18x64xf32> to vector<1x64xf32>
    %506 = vector.broadcast %505 : vector<1x64xf32> to vector<16x64xf32>
    %507 = arith.addf %504, %506 : vector<16x64xf32>
    %508 = arith.truncf %507 : vector<16x64xf32> to vector<16x64xbf16>
    %c6_136 = arith.constant 6 : index
    %c0_137 = arith.constant 0 : index
    %c0_138 = arith.constant 0 : index
    %509 = vector.load %arg3[%c6_136, %c0_137, %c0_138] : memref<10x64x64xbf16, #tpu.memory_space<vmem>>, vector<1x64x64xbf16>
    %510 = vector.shape_cast %509 : vector<1x64x64xbf16> to vector<64x64xbf16>
    %cst_139 = arith.constant dense<0.000000e+00> : vector<16x64xf32>
    %511 = tpu.matmul %508, %510, %cst_139 {dimension_numbers = #tpu.dot_dimension_numbers<[1], [0], [0], [1], [0, 0, 1, 1], [], []>} : vector<16x64xbf16>, vector<64x64xbf16>, vector<16x64xf32> -> vector<16x64xf32>
    %512 = vector.extract_strided_slice %0 {offsets = [6, 0], sizes = [1, 64], strides = [1, 1]} : vector<18x64xf32> to vector<1x64xf32>
    %513 = vector.broadcast %512 : vector<1x64xf32> to vector<16x64xf32>
    %514 = arith.addf %511, %513 : vector<16x64xf32>
    %515 = arith.truncf %514 : vector<16x64xf32> to vector<16x64xbf16>
    %c7_140 = arith.constant 7 : index
    %c0_141 = arith.constant 0 : index
    %c0_142 = arith.constant 0 : index
    %516 = vector.load %arg3[%c7_140, %c0_141, %c0_142] : memref<10x64x64xbf16, #tpu.memory_space<vmem>>, vector<1x64x64xbf16>
    %517 = vector.shape_cast %516 : vector<1x64x64xbf16> to vector<64x64xbf16>
    %cst_143 = arith.constant dense<0.000000e+00> : vector<16x64xf32>
    %518 = tpu.matmul %515, %517, %cst_143 {dimension_numbers = #tpu.dot_dimension_numbers<[1], [0], [0], [1], [0, 0, 1, 1], [], []>} : vector<16x64xbf16>, vector<64x64xbf16>, vector<16x64xf32> -> vector<16x64xf32>
    %519 = vector.extract_strided_slice %0 {offsets = [7, 0], sizes = [1, 64], strides = [1, 1]} : vector<18x64xf32> to vector<1x64xf32>
    %520 = vector.broadcast %519 : vector<1x64xf32> to vector<16x64xf32>
    %521 = arith.addf %518, %520 : vector<16x64xf32>
    %522 = arith.addf %507, %521 : vector<16x64xf32>
    %cst_144 = arith.constant dense<0.000000e+00> : vector<16xf32>
    %523 = vector.multi_reduction <add>, %522, %cst_144 [1] : vector<16x64xf32> to vector<16xf32>
    %524 = vector.shape_cast %523 : vector<16xf32> to vector<16x1xf32>
    %525 = arith.mulf %522, %522 : vector<16x64xf32>
    %cst_145 = arith.constant dense<0.000000e+00> : vector<16xf32>
    %526 = vector.multi_reduction <add>, %525, %cst_145 [1] : vector<16x64xf32> to vector<16xf32>
    %527 = vector.shape_cast %526 : vector<16xf32> to vector<16x1xf32>
    %cst_146 = arith.constant 0.0166666675 : f32
    %528 = vector.broadcast %cst_146 : f32 to vector<16x1xf32>
    %529 = arith.mulf %524, %528 : vector<16x1xf32>
    %cst_147 = arith.constant 0.0166666675 : f32
    %530 = vector.broadcast %cst_147 : f32 to vector<16x1xf32>
    %531 = arith.mulf %527, %530 : vector<16x1xf32>
    %532 = arith.mulf %529, %529 : vector<16x1xf32>
    %533 = arith.subf %531, %532 : vector<16x1xf32>
    %534 = vector.broadcast %529 : vector<16x1xf32> to vector<16x64xf32>
    %535 = arith.subf %522, %534 : vector<16x64xf32>
    %cst_148 = arith.constant 9.99999974E-6 : f32
    %536 = vector.broadcast %cst_148 : f32 to vector<16x1xf32>
    %537 = arith.addf %533, %536 : vector<16x1xf32>
    %538 = math.rsqrt %537 : vector<16x1xf32>
    %539 = vector.broadcast %538 : vector<16x1xf32> to vector<16x64xf32>
    %540 = arith.mulf %535, %539 : vector<16x64xf32>
    %541 = vector.extract_strided_slice %0 {offsets = [16, 0], sizes = [1, 64], strides = [1, 1]} : vector<18x64xf32> to vector<1x64xf32>
    %542 = vector.broadcast %541 : vector<1x64xf32> to vector<16x64xf32>
    %543 = arith.mulf %540, %542 : vector<16x64xf32>
    %544 = vector.extract_strided_slice %0 {offsets = [17, 0], sizes = [1, 64], strides = [1, 1]} : vector<18x64xf32> to vector<1x64xf32>
    %545 = vector.broadcast %544 : vector<1x64xf32> to vector<16x64xf32>
    %546 = arith.addf %543, %545 : vector<16x64xf32>
    %547 = vector.extract_strided_slice %546 {offsets = [0, 0], sizes = [8, 60], strides = [1, 1]} : vector<16x64xf32> to vector<8x60xf32>
    %548 = vector.extract_strided_slice %546 {offsets = [8, 0], sizes = [8, 60], strides = [1, 1]} : vector<16x64xf32> to vector<8x60xf32>
    %549 = vector.shape_cast %547 : vector<8x60xf32> to vector<8x1x60xf32>
    %550 = vector.shape_cast %548 : vector<8x60xf32> to vector<8x1x60xf32>
    %551 = tpu.concatenate %549, %550 in 1 : vector<8x1x60xf32>, vector<8x1x60xf32> -> vector<8x2x60xf32>
    %c0_149 = arith.constant 0 : index
    %c0_150 = arith.constant 0 : index
    %c0_151 = arith.constant 0 : index
    %552 = vector.load %arg5[%c0_149, %c0_150, %c0_151] : memref<8x2x60xf32, #tpu.memory_space<vmem>>, vector<8x2x60xf32>
    tpu.vector_store %arg5[%c0_149, %c0_150, %c0_151], %551 {strides = array<i32>} : memref<8x2x60xf32, #tpu.memory_space<vmem>>, vector<8x2x60xf32>,
    return
  }
  func.func @transform_0(%arg0: i32) -> (i32, i32, i32) {
    %c0_i32 = arith.constant 0 : i32
    %c0_i32_0 = arith.constant 0 : i32
    %c0_i32_1 = arith.constant 0 : i32
    %c0_i32_2 = arith.constant 0 : i32
    return %c0_i32, %c0_i32_0, %c0_i32_1 : i32, i32, i32
  }
  func.func @transform_1(%arg0: i32) -> (i32, i32, i32) {
    %c0_i32 = arith.constant 0 : i32
    %c0_i32_0 = arith.constant 0 : i32
    %c0_i32_1 = arith.constant 0 : i32
    %c0_i32_2 = arith.constant 0 : i32
    return %c0_i32, %c0_i32_0, %c0_i32_1 : i32, i32, i32
  }
  func.func @transform_2(%arg0: i32) -> (i32, i32, i32) {
    %c0_i32 = arith.constant 0 : i32
    %c0_i32_0 = arith.constant 0 : i32
    %c0_i32_1 = arith.constant 0 : i32
    %c0_i32_2 = arith.constant 0 : i32
    return %c0_i32, %c0_i32_0, %c0_i32_1 : i32, i32, i32
  }
  func.func @transform_3(%arg0: i32) -> (i32, i32) {
    %c0_i32 = arith.constant 0 : i32
    %c0_i32_0 = arith.constant 0 : i32
    %c0_i32_1 = arith.constant 0 : i32
    return %c0_i32, %c0_i32_0 : i32, i32
  }
  func.func @transform_4(%arg0: i32) -> (i32, i32, i32) {
    %c0_i32 = arith.constant 0 : i32
    %c0_i32_0 = arith.constant 0 : i32
    %c0_i32_1 = arith.constant 0 : i32
    %c0_i32_2 = arith.constant 0 : i32
    return %c0_i32, %c0_i32_0, %c0_i32_1 : i32, i32, i32
  }
}

</mosaic_0001>

<llo_original>
// kernel: transformer_decoder_forward.1
$region0: #{transformer_decoder_forward.1}
  #allocation0 [shape = 'u32[]', space=smem, size = 0x4, offset = 0x4, fixed_abs, tag = 'smem constant byte address 0x4 - core index']
  #allocation1 [shape = 'u32[144,128]{1,0:T(1,128)}', space=vmem, size = 0x12000, scoped, tag = 'internal scratch']
  %s0 = inlined_call_operand.hbm [shape: f32[8,2,60], index: 0, kind: input, shape index: {}]
  %s1 = inlined_call_operand.hbm [shape: f32[10,2,60], index: 1, kind: input, shape index: {}]
  %s2 = inlined_call_operand.hbm [shape: bf16[10,64,64], index: 2, kind: input, shape index: {}]
  %s3 = inlined_call_operand.hbm [shape: f32[18,64], index: 3, kind: input, shape index: {}]
  %s4 = inlined_call_operand.hbm [shape: f32[8,2,60], index: 4, kind: output, shape index: {}]
  %s5 = sld [smem:[#allocation0]]
  $region42: #{transformer_decoder_forward.1} parent=0
    _
  %s7 = ssub.s32 1, %s5
  %s8 = scalar_select 0, %s7, %s5
  $region1: #{transformer_decoder_forward.1} parent=0
    #allocation2 [shape = 'u8[8192]{0}', space=vmem, size = 0x2000, scoped, tag = 'input window, operand 0, single buffered']
    #allocation3 [shape = 's32[1]{0}', space=sflag, size = 0x4, scoped, tag = 'scoped memory for transformer_decoder_forward.1']
    #allocation4 [shape = 's32[1]{0}', space=sflag, size = 0x4, scoped, tag = 'scoped memory for transformer_decoder_forward.1']
    #allocation5 [shape = 'u8[10240]{0}', space=vmem, size = 0x2800, scoped, tag = 'input window, operand 1, single buffered']
    #allocation6 [shape = 's32[1]{0}', space=sflag, size = 0x4, scoped, tag = 'scoped memory for transformer_decoder_forward.1']
    #allocation7 [shape = 'u8[163840]{0}', space=vmem, size = 0x28000, scoped, tag = 'input window, operand 2, single buffered']
    #allocation8 [shape = 'u8[12288]{0}', space=vmem, size = 0x3000, scoped, tag = 'input window, operand 3, single buffered']
    #allocation9 [shape = 's32[1]{0}', space=sflag, size = 0x4, scoped, tag = 'scoped memory for transformer_decoder_forward.1']
    #allocation10 [shape = 'u8[8192]{0}', space=vmem, size = 0x2000, scoped, tag = 'output window, operand 0, single buffered']
    %9 = vsyncpa [#allocation3], 0
    %10 = vsyncpa [#allocation6], 0
    %11 = vsyncpa [#allocation9], 0
    %12 = vsyncpa [#allocation4], 0
    // Predicated region
    $region2: #{transformer_decoder_forward.1} parent=1 // pred_check
      _
    $region3: #{transformer_decoder_forward.1} parent=1 // pred_check_branch
      %14 = sbr.rel (0) target = $region5
    $region4: #{transformer_decoder_forward.1} parent=1 // pred_region
      %s16 = ssub.s32 256, 256
      %17 = vsyncadd [#allocation3], %s16
      %s18 = sshll.u32 [#allocation2], 4
      %s19 = int_to_ptr.vmem [resolvable:$true] %s18
      %24 = dma.hbm_to_vmem [thread:$0]  %s0, 256, %s19, [#allocation3], 32, 32, 2
    $region5: #{transformer_decoder_forward.1} parent=1 // pred_fallthru
      _
    // Predicated region
    $region6: #{transformer_decoder_forward.1} parent=1 // pred_check
      _
    $region7: #{transformer_decoder_forward.1} parent=1 // pred_check_branch
      %26 = sbr.rel (0) target = $region9
    $region8: #{transformer_decoder_forward.1} parent=1 // pred_region
      %s28 = ssub.s32 320, 320
      %29 = vsyncadd [#allocation6], %s28
      %s30 = sshll.u32 [#allocation5], 4
      %s31 = int_to_ptr.vmem [resolvable:$true] %s30
      %36 = dma.hbm_to_vmem [thread:$0]  %s1, 320, %s31, [#allocation6], 32, 32, 2
    $region9: #{transformer_decoder_forward.1} parent=1 // pred_fallthru
      _
    // Predicated region
    $region10: #{transformer_decoder_forward.1} parent=1 // pred_check
      _
    $region11: #{transformer_decoder_forward.1} parent=1 // pred_check_branch
      %38 = sbr.rel (0) target = $region13
    $region12: #{transformer_decoder_forward.1} parent=1 // pred_region
      %s40 = ssub.s32 5120, 5120
      %41 = vsyncadd [#allocation6], %s40
      %s42 = sshll.u32 [#allocation7], 4
      %s43 = int_to_ptr.vmem [resolvable:$true] %s42
      %48 = dma.hbm_to_vmem [thread:$0]  %s2, 5120, %s43, [#allocation6], 64, 64, 4
    $region13: #{transformer_decoder_forward.1} parent=1 // pred_fallthru
      _
    // Predicated region
    $region14: #{transformer_decoder_forward.1} parent=1 // pred_check
      _
    $region15: #{transformer_decoder_forward.1} parent=1 // pred_check_branch
      %50 = sbr.rel (0) target = $region17
    $region16: #{transformer_decoder_forward.1} parent=1 // pred_region
      %s52 = ssub.s32 384, 384
      %53 = vsyncadd [#allocation9], %s52
      %s54 = sshll.u32 [#allocation8], 4
      %s55 = int_to_ptr.vmem [resolvable:$true] %s54
      %60 = dma.hbm_to_vmem [thread:$0]  %s3, 384, %s55, [#allocation9], 128, 128, 8
    $region17: #{transformer_decoder_forward.1} parent=1 // pred_fallthru
      _
    // Predicated region
    $region18: #{transformer_decoder_forward.1} parent=1 // pred_check
      _
    $region19: #{transformer_decoder_forward.1} parent=1 // pred_check_branch
      %62 = sbr.rel (0) target = $region21
    $region20: #{transformer_decoder_forward.1} parent=1 // pred_region
      %63 = dma.done [#allocation3], 256
    $region21: #{transformer_decoder_forward.1} parent=1 // pred_fallthru
      _
    // Predicated region
    $region22: #{transformer_decoder_forward.1} parent=1 // pred_check
      _
    $region23: #{transformer_decoder_forward.1} parent=1 // pred_check_branch
      %65 = sbr.rel (0) target = $region25
    $region24: #{transformer_decoder_forward.1} parent=1 // pred_region
      %66 = dma.done [#allocation6], 320
    $region25: #{transformer_decoder_forward.1} parent=1 // pred_fallthru
      _
    // Predicated region
    $region26: #{transformer_decoder_forward.1} parent=1 // pred_check
      _
    $region27: #{transformer_decoder_forward.1} parent=1 // pred_check_branch
      %68 = sbr.rel (0) target = $region29
    $region28: #{transformer_decoder_forward.1} parent=1 // pred_region
      %69 = dma.done [#allocation6], 5120
    $region29: #{transformer_decoder_forward.1} parent=1 // pred_fallthru
      _
    // Predicated region
    $region30: #{transformer_decoder_forward.1} parent=1 // pred_check
      _
    $region31: #{transformer_decoder_forward.1} parent=1 // pred_check_branch
      %71 = sbr.rel (0) target = $region33
    $region32: #{transformer_decoder_forward.1} parent=1 // pred_region
      %72 = dma.done [#allocation9], 384
    $region33: #{transformer_decoder_forward.1} parent=1 // pred_fallthru
      _
    %v74 = vld [vmem:[#allocation8] sm:$0xff]
    %v75 = vld [vmem:[#allocation8 + $0x8] sm:$0xff]
    %v76 = vld [vmem:[#allocation8 + $0x10] sm:$0x3]
    %v77 = vld [vmem:[#allocation2] sm:$0x3]
    %v78 = vld [vmem:[#allocation2 + $0x2] sm:$0x3]
    %v79 = vld [vmem:[#allocation2 + $0x4] sm:$0x3]
    %v80 = vld [vmem:[#allocation2 + $0x6] sm:$0x3]
    %v81 = vld [vmem:[#allocation2 + $0x8] sm:$0x3]
    %v82 = vld [vmem:[#allocation2 + $0xa] sm:$0x3]
    %v83 = vld [vmem:[#allocation2 + $0xc] sm:$0x3]
    %v84 = vld [vmem:[#allocation2 + $0xe] sm:$0x3]
    %v93 = vrot.slane %v78, 7
    %vm94 = vcmask 1041409
    %v95 = vsel %vm94, %v93, %v77
    %v96 = vrot.slane %v79, 6
    %vm97 = vcmask 1042434
    %v98 = vsel %vm97, %v96, %v95
    %v99 = vrot.slane %v80, 5
    %vm100 = vcmask 1043459
    %v101 = vsel %vm100, %v99, %v98
    %v102 = vrot.slane %v81, 4
    %vm103 = vcmask 1044484
    %v104 = vsel %vm103, %v102, %v101
    %v105 = vrot.slane %v82, 3
    %vm106 = vcmask 1045509
    %v107 = vsel %vm106, %v105, %v104
    %v108 = vrot.slane %v83, 2
    %vm109 = vcmask 1046534
    %v110 = vsel %vm109, %v108, %v107
    %v111 = vrot.slane %v84, 1
    %vm112 = vcmask 1047559
    %v113 = vsel %vm112, %v111, %v110
    %v115 = vrot.slane %v77, 1
    %v116 = vsel %vm94, %v78, %v115
    %v117 = vrot.slane %v79, 7
    %v118 = vsel %vm97, %v117, %v116
    %v119 = vrot.slane %v80, 6
    %v120 = vsel %vm100, %v119, %v118
    %v121 = vrot.slane %v81, 5
    %v122 = vsel %vm103, %v121, %v120
    %v123 = vrot.slane %v82, 4
    %v124 = vsel %vm106, %v123, %v122
    %v125 = vrot.slane %v83, 3
    %v126 = vsel %vm109, %v125, %v124
    %v127 = vrot.slane %v84, 2
    %v128 = vsel %vm112, %v127, %v126
    %vm130 = vcmask 490496
    %v131 = vsel %vm130, %v113, 0.0
    %v132 = vsel %vm130, %v128, 0.0
    %v133 = vld [vmem:[#allocation5] sm:$0x3]
    %v134 = vld [vmem:[#allocation5 + $0x2] sm:$0x3]
    %v135 = vld [vmem:[#allocation5 + $0x4] sm:$0x3]
    %v136 = vld [vmem:[#allocation5 + $0x6] sm:$0x3]
    %v137 = vld [vmem:[#allocation5 + $0x8] sm:$0x3]
    %v138 = vld [vmem:[#allocation5 + $0xa] sm:$0x3]
    %v139 = vld [vmem:[#allocation5 + $0xc] sm:$0x3]
    %v140 = vld [vmem:[#allocation5 + $0xe] sm:$0x3]
    %v141 = vld [vmem:[#allocation5 + $0x10] sm:$0x3]
    %v142 = vld [vmem:[#allocation5 + $0x12] sm:$0x3]
    %v153 = vrot.slane %v134, 7
    %v154 = vsel %vm94, %v153, %v133
    %v155 = vrot.slane %v135, 6
    %v156 = vsel %vm97, %v155, %v154
    %v157 = vrot.slane %v136, 5
    %v158 = vsel %vm100, %v157, %v156
    %v159 = vrot.slane %v137, 4
    %v160 = vsel %vm103, %v159, %v158
    %v161 = vrot.slane %v138, 3
    %v162 = vsel %vm106, %v161, %v160
    %v163 = vrot.slane %v139, 2
    %v164 = vsel %vm109, %v163, %v162
    %v165 = vrot.slane %v140, 1
    %v166 = vsel %vm112, %v165, %v164
    %v167 = vrot.slane %v142, 7
    %v168 = vsel %vm94, %v167, %v141
    %v171 = vrot.slane %v133, 7
    %v172 = vrot.slane %v134, 6
    %v173 = vsel %vm100, %v172, %v171
    %v174 = vrot.slane %v135, 5
    %v175 = vsel %vm103, %v174, %v173
    %v176 = vrot.slane %v136, 4
    %v177 = vsel %vm106, %v176, %v175
    %v178 = vrot.slane %v137, 3
    %v179 = vsel %vm109, %v178, %v177
    %v180 = vrot.slane %v138, 2
    %v181 = vsel %vm112, %v180, %v179
    %v182 = vrot.slane %v139, 1
    %v183 = vsel %vm94, %v140, %v182
    %v184 = vrot.slane %v141, 7
    %v185 = vsel %vm97, %v184, %v183
    %v186 = vrot.slane %v142, 6
    %v187 = vsel %vm100, %v186, %v185
    %vm190 = vcmask 1041408
    %v191 = vsel %vm190, %v168, %v181
    %v192 = vsel %vm130, %v166, 0.0
    %v193 = vsel %vm130, %v191, 0.0
    %v194 = vsel %vm130, %v187, 0.0
    %v195 = vpack.c.bf16 %v132, %v131
    %v196 = vld [vmem:[#allocation7] sm:$0xf]
    %v197 = vld [vmem:[#allocation7 + $0x4] sm:$0xf]
    %v198 = vld [vmem:[#allocation7 + $0x8] sm:$0xf]
    %v199 = vld [vmem:[#allocation7 + $0xc] sm:$0xf]
    %v200 = vld [vmem:[#allocation7 + $0x10] sm:$0xf]
    %v201 = vld [vmem:[#allocation7 + $0x14] sm:$0xf]
    %v202 = vld [vmem:[#allocation7 + $0x18] sm:$0xf]
    %v203 = vld [vmem:[#allocation7 + $0x1c] sm:$0xf]
    %v204 = vlaneseq
    %v205 = vshrl.u32 %v204, 7
    %v206 = vsub.s32 0, %v205
    %v207 = vrot.slane %v74, %v206
    %v216 = vunpack.c.l.b16 %v196
    %v217 = vunpack.c.l.b16 %v197
    %v218 = vunpack.c.l.b16 %v198
    %v219 = vunpack.c.l.b16 %v199
    %v220 = vunpack.c.l.b16 %v200
    %v221 = vunpack.c.l.b16 %v201
    %v222 = vunpack.c.l.b16 %v202
    %v223 = vunpack.c.l.b16 %v203
    %v224 = vpack.c.b16 %v217, %v216
    %v225 = vpack.c.b16 %v219, %v218
    %v226 = vpack.c.b16 %v221, %v220
    %v227 = vpack.c.b16 %v223, %v222
    %vm232 = vcmask 523264
    %v234 = vsel %vm232, %v195, 0
    %236 = vmatprep.subr.bf16.mxu0 0
    %237 = vmatpush1.bf16.msra.mxu0 0
    %238 = vmatprep.subr.bf16.mxu0 0
    %239 = vmatpush1.bf16.msra.mxu0 0
    %240 = vmatprep.subr.bf16.mxu0 0
    %241 = vmatpush1.bf16.msra.mxu0 0
    %242 = vmatprep.subr.bf16.mxu0 0
    %243 = vmatpush1.bf16.msra.mxu0 0
    %244 = vmatprep.subr.bf16.mxu0 0
    %245 = vmatpush1.bf16.msra.mxu0 %v227
    %246 = vmatprep.subr.bf16.mxu0 0
    %247 = vmatpush1.bf16.msra.mxu0 %v226
    %248 = vmatprep.subr.bf16.mxu0 0
    %249 = vmatpush1.bf16.msra.mxu0 %v225
    %250 = vmatprep.subr.bf16.mxu0 0
    %251 = vmatpush1.bf16.msra.mxu0 %v224
    %252 = vmatprep.subr.bf16.mxu0 0
    %253 = vmatpush2.bf16.msra.mxu0 0
    %254 = vmatprep.subr.bf16.mxu0 0
    %255 = vmatpush2.bf16.msra.mxu0 0
    %256 = vmatprep.subr.bf16.mxu0 0
    %257 = vmatpush2.bf16.msra.mxu0 0
    %258 = vmatprep.subr.bf16.mxu0 0
    %259 = vmatpush2.bf16.msra.mxu0 0
    %260 = vmatprep.subr.bf16.mxu0 0
    %261 = vmatpush2.bf16.msra.mxu0 0
    %262 = vmatprep.subr.bf16.mxu0 0
    %263 = vmatpush2.bf16.msra.mxu0 0
    %264 = vmatprep.subr.bf16.mxu0 0
    %265 = vmatpush2.bf16.msra.mxu0 0
    %266 = vmatprep.subr.bf16.mxu0 0
    %267 = vmatpush2.bf16.msra.mxu0 0
    %268 = vmatprep.mubr.bf16.mxu0 0
    %269 = vmatmul.mubr.bf16.gmra.mxu0 %v234
    %v270 = vpop.f32.mrf.mxu0
    %v271 = vadd.f32 %v207, %v270
    %v272 = vpop.f32.mrf.mxu0
    %v273 = vpop.f32.mrf.mxu0
    %v274 = vadd.f32 %v207, %v273
    %v275 = vpop.f32.mrf.mxu0
    %276 = vdwg.mxu0
    %s277 = scalar_lea.vmem [#allocation7], 32
    %v278 = vld [vmem:[%s277] sm:$0xf]
    %v279 = vld [vmem:[%s277 + $0x4] sm:$0xf]
    %v280 = vld [vmem:[%s277 + $0x8] sm:$0xf]
    %v281 = vld [vmem:[%s277 + $0xc] sm:$0xf]
    %v282 = vld [vmem:[%s277 + $0x10] sm:$0xf]
    %v283 = vld [vmem:[%s277 + $0x14] sm:$0xf]
    %v284 = vld [vmem:[%s277 + $0x18] sm:$0xf]
    %v285 = vld [vmem:[%s277 + $0x1c] sm:$0xf]
    %v286 = vlaneseq
    %v287 = vshrl.u32 %v286, 7
    %v288 = vsub.s32 1, %v287
    %v289 = vrot.slane %v74, %v288
    %v298 = vunpack.c.l.b16 %v278
    %v299 = vunpack.c.l.b16 %v279
    %v300 = vunpack.c.l.b16 %v280
    %v301 = vunpack.c.l.b16 %v281
    %v302 = vunpack.c.l.b16 %v282
    %v303 = vunpack.c.l.b16 %v283
    %v304 = vunpack.c.l.b16 %v284
    %v305 = vunpack.c.l.b16 %v285
    %v306 = vpack.c.b16 %v299, %v298
    %v307 = vpack.c.b16 %v301, %v300
    %v308 = vpack.c.b16 %v303, %v302
    %v309 = vpack.c.b16 %v305, %v304
    %314 = vmatprep.subr.bf16.mxu0 0
    %315 = vmatpush1.bf16.msra.mxu0 0
    %316 = vmatprep.subr.bf16.mxu0 0
    %317 = vmatpush1.bf16.msra.mxu0 0
    %318 = vmatprep.subr.bf16.mxu0 0
    %319 = vmatpush1.bf16.msra.mxu0 0
    %320 = vmatprep.subr.bf16.mxu0 0
    %321 = vmatpush1.bf16.msra.mxu0 0
    %322 = vmatprep.subr.bf16.mxu0 0
    %323 = vmatpush1.bf16.msra.mxu0 %v309
    %324 = vmatprep.subr.bf16.mxu0 0
    %325 = vmatpush1.bf16.msra.mxu0 %v308
    %326 = vmatprep.subr.bf16.mxu0 0
    %327 = vmatpush1.bf16.msra.mxu0 %v307
    %328 = vmatprep.subr.bf16.mxu0 0
    %329 = vmatpush1.bf16.msra.mxu0 %v306
    %330 = vmatprep.subr.bf16.mxu0 0
    %331 = vmatpush2.bf16.msra.mxu0 0
    %332 = vmatprep.subr.bf16.mxu0 0
    %333 = vmatpush2.bf16.msra.mxu0 0
    %334 = vmatprep.subr.bf16.mxu0 0
    %335 = vmatpush2.bf16.msra.mxu0 0
    %336 = vmatprep.subr.bf16.mxu0 0
    %337 = vmatpush2.bf16.msra.mxu0 0
    %338 = vmatprep.subr.bf16.mxu0 0
    %339 = vmatpush2.bf16.msra.mxu0 0
    %340 = vmatprep.subr.bf16.mxu0 0
    %341 = vmatpush2.bf16.msra.mxu0 0
    %342 = vmatprep.subr.bf16.mxu0 0
    %343 = vmatpush2.bf16.msra.mxu0 0
    %344 = vmatprep.subr.bf16.mxu0 0
    %345 = vmatpush2.bf16.msra.mxu0 0
    %346 = vmatprep.mubr.bf16.mxu0 0
    %347 = vmatmul.mubr.bf16.gmra.mxu0 %v234
    %v348 = vpop.f32.mrf.mxu0
    %v349 = vadd.f32 %v289, %v348
    %v350 = vpop.f32.mrf.mxu0
    %v351 = vpop.f32.mrf.mxu0
    %v352 = vadd.f32 %v289, %v351
    %v353 = vpop.f32.mrf.mxu0
    %354 = vdwg.mxu0
    %s355 = scalar_lea.vmem [#allocation7], 64
    %v356 = vld [vmem:[%s355] sm:$0xf]
    %v357 = vld [vmem:[%s355 + $0x4] sm:$0xf]
    %v358 = vld [vmem:[%s355 + $0x8] sm:$0xf]
    %v359 = vld [vmem:[%s355 + $0xc] sm:$0xf]
    %v360 = vld [vmem:[%s355 + $0x10] sm:$0xf]
    %v361 = vld [vmem:[%s355 + $0x14] sm:$0xf]
    %v362 = vld [vmem:[%s355 + $0x18] sm:$0xf]
    %v363 = vld [vmem:[%s355 + $0x1c] sm:$0xf]
    %v364 = vlaneseq
    %v365 = vshrl.u32 %v364, 7
    %v366 = vsub.s32 2, %v365
    %v367 = vrot.slane %v74, %v366
    %v376 = vunpack.c.l.b16 %v356
    %v377 = vunpack.c.l.b16 %v357
    %v378 = vunpack.c.l.b16 %v358
    %v379 = vunpack.c.l.b16 %v359
    %v380 = vunpack.c.l.b16 %v360
    %v381 = vunpack.c.l.b16 %v361
    %v382 = vunpack.c.l.b16 %v362
    %v383 = vunpack.c.l.b16 %v363
    %v384 = vpack.c.b16 %v377, %v376
    %v385 = vpack.c.b16 %v379, %v378
    %v386 = vpack.c.b16 %v381, %v380
    %v387 = vpack.c.b16 %v383, %v382
    %392 = vmatprep.subr.bf16.mxu0 0
    %393 = vmatpush1.bf16.msra.mxu0 0
    %394 = vmatprep.subr.bf16.mxu0 0
    %395 = vmatpush1.bf16.msra.mxu0 0
    %396 = vmatprep.subr.bf16.mxu0 0
    %397 = vmatpush1.bf16.msra.mxu0 0
    %398 = vmatprep.subr.bf16.mxu0 0
    %399 = vmatpush1.bf16.msra.mxu0 0
    %400 = vmatprep.subr.bf16.mxu0 0
    %401 = vmatpush1.bf16.msra.mxu0 %v387
    %402 = vmatprep.subr.bf16.mxu0 0
    %403 = vmatpush1.bf16.msra.mxu0 %v386
    %404 = vmatprep.subr.bf16.mxu0 0
    %405 = vmatpush1.bf16.msra.mxu0 %v385
    %406 = vmatprep.subr.bf16.mxu0 0
    %407 = vmatpush1.bf16.msra.mxu0 %v384
    %408 = vmatprep.subr.bf16.mxu0 0
    %409 = vmatpush2.bf16.msra.mxu0 0
    %410 = vmatprep.subr.bf16.mxu0 0
    %411 = vmatpush2.bf16.msra.mxu0 0
    %412 = vmatprep.subr.bf16.mxu0 0
    %413 = vmatpush2.bf16.msra.mxu0 0
    %414 = vmatprep.subr.bf16.mxu0 0
    %415 = vmatpush2.bf16.msra.mxu0 0
    %416 = vmatprep.subr.bf16.mxu0 0
    %417 = vmatpush2.bf16.msra.mxu0 0
    %418 = vmatprep.subr.bf16.mxu0 0
    %419 = vmatpush2.bf16.msra.mxu0 0
    %420 = vmatprep.subr.bf16.mxu0 0
    %421 = vmatpush2.bf16.msra.mxu0 0
    %422 = vmatprep.subr.bf16.mxu0 0
    %423 = vmatpush2.bf16.msra.mxu0 0
    %424 = vmatprep.mubr.bf16.mxu0 0
    %425 = vmatmul.mubr.bf16.gmra.mxu0 %v234
    %v426 = vpop.f32.mrf.mxu0
    %v427 = vadd.f32 %v367, %v426
    %v428 = vpop.f32.mrf.mxu0
    %v429 = vpop.f32.mrf.mxu0
    %v430 = vadd.f32 %v367, %v429
    %v431 = vpop.f32.mrf.mxu0
    %432 = vdwg.mxu0
    %s433 = scalar_lea.vmem [#allocation7], 256
    %v434 = vld [vmem:[%s433] sm:$0xf]
    %v435 = vld [vmem:[%s433 + $0x4] sm:$0xf]
    %v436 = vld [vmem:[%s433 + $0x8] sm:$0xf]
    %v437 = vld [vmem:[%s433 + $0xc] sm:$0xf]
    %v438 = vld [vmem:[%s433 + $0x10] sm:$0xf]
    %v439 = vld [vmem:[%s433 + $0x14] sm:$0xf]
    %v440 = vld [vmem:[%s433 + $0x18] sm:$0xf]
    %v441 = vld [vmem:[%s433 + $0x1c] sm:$0xf]
    %v442 = vpack.c.bf16 %v271, %v271
    %v443 = vpack.c.bf16 %v349, %v349
    %v444 = vpack.c.bf16 %v427, %v427
    %vm445 = vcmask 130048
    %v447 = vsel %vm445, %v442, 0
    %v450 = vsel %vm445, %v443, 0
    %452 = vmatprep.subr.bf16.mxu0 0
    %453 = vmatpush1.bf16.xpose.msra.mxu0 0
    %454 = vmatprep.subr.bf16.mxu0 0
    %455 = vmatpush1.bf16.xpose.msra.mxu0 0
    %456 = vmatprep.subr.bf16.mxu0 0
    %457 = vmatpush1.bf16.xpose.msra.mxu0 0
    %458 = vmatprep.subr.bf16.mxu0 0
    %459 = vmatpush1.bf16.xpose.msra.mxu0 0
    %460 = vmatprep.subr.bf16.mxu0 0
    %461 = vmatpush1.bf16.xpose.msra.mxu0 0
    %462 = vmatprep.subr.bf16.mxu0 0
    %463 = vmatpush1.bf16.xpose.msra.mxu0 0
    %464 = vmatprep.subr.bf16.mxu0 0
    %465 = vmatpush1.bf16.xpose.msra.mxu0 0
    %466 = vmatprep.subr.bf16.mxu0 0
    %467 = vmatpush1.bf16.xpose.msra.mxu0 %v450
    %468 = vmatprep.subr.bf16.mxu0 0
    %469 = vmatpush2.bf16.xpose.msra.mxu0 0
    %470 = vmatprep.subr.bf16.mxu0 0
    %471 = vmatpush2.bf16.xpose.msra.mxu0 0
    %472 = vmatprep.subr.bf16.mxu0 0
    %473 = vmatpush2.bf16.xpose.msra.mxu0 0
    %474 = vmatprep.subr.bf16.mxu0 0
    %475 = vmatpush2.bf16.xpose.msra.mxu0 0
    %476 = vmatprep.subr.bf16.mxu0 0
    %477 = vmatpush2.bf16.xpose.msra.mxu0 0
    %478 = vmatprep.subr.bf16.mxu0 0
    %479 = vmatpush2.bf16.xpose.msra.mxu0 0
    %480 = vmatprep.subr.bf16.mxu0 0
    %481 = vmatpush2.bf16.xpose.msra.mxu0 0
    %482 = vmatprep.subr.bf16.mxu0 0
    %483 = vmatpush2.bf16.xpose.msra.mxu0 0
    %484 = vmatprep.mubr.bf16.mxu0 0
    %485 = vmatmul.mubr.bf16.gmra.mxu0 %v447
    %v486 = vpop.f32.mrf.mxu0
    %v487 = vadd.f32 0.0, %v486
    %v488 = vpop.f32.mrf.mxu0
    %v489 = vpop.f32.mrf.mxu0
    %v490 = vpop.f32.mrf.mxu0
    %491 = vdwg.mxu0
    %vm492 = vcmask 64512
    %v493 = vsel %vm492, %v487, -inf
    %494 = vmax.xlane.f32.xlu0 %v493
    %v495 = vpop.xlane.xlu0 %494
    %v496 = vsub.f32 %v487, %v495
    %v497 = vmul.f32 %v496, 1.442695
    %v498 = vpow.pop %v497
    %v499 = vsel %vm492, %v498, 0.0
    %500 = vadd.xlane.f32.xlu0 %v499
    %v501 = vpop.xlane.xlu0 %500
    %v502 = vrcp.pop %v501
    %v503 = vmul.f32 %v498, %v502
    %v504 = vpack.c.bf16 %v503, %v503
    %v506 = vsel %vm492, %v504, 0
    %vm508 = vcmask 1043456
    %v510 = vsel %vm508, %v444, 0
    %512 = vmatprep.subr.bf16.mxu0 0
    %513 = vmatpush1.bf16.msra.mxu0 0
    %514 = vmatprep.subr.bf16.mxu0 0
    %515 = vmatpush1.bf16.msra.mxu0 0
    %516 = vmatprep.subr.bf16.mxu0 0
    %517 = vmatpush1.bf16.msra.mxu0 0
    %518 = vmatprep.subr.bf16.mxu0 0
    %519 = vmatpush1.bf16.msra.mxu0 0
    %520 = vmatprep.subr.bf16.mxu0 0
    %521 = vmatpush1.bf16.msra.mxu0 0
    %522 = vmatprep.subr.bf16.mxu0 0
    %523 = vmatpush1.bf16.msra.mxu0 0
    %524 = vmatprep.subr.bf16.mxu0 0
    %525 = vmatpush1.bf16.msra.mxu0 0
    %526 = vmatprep.subr.bf16.mxu0 0
    %527 = vmatpush1.bf16.msra.mxu0 %v510
    %528 = vmatprep.subr.bf16.mxu0 0
    %529 = vmatpush2.bf16.msra.mxu0 0
    %530 = vmatprep.subr.bf16.mxu0 0
    %531 = vmatpush2.bf16.msra.mxu0 0
    %532 = vmatprep.subr.bf16.mxu0 0
    %533 = vmatpush2.bf16.msra.mxu0 0
    %534 = vmatprep.subr.bf16.mxu0 0
    %535 = vmatpush2.bf16.msra.mxu0 0
    %536 = vmatprep.subr.bf16.mxu0 0
    %537 = vmatpush2.bf16.msra.mxu0 0
    %538 = vmatprep.subr.bf16.mxu0 0
    %539 = vmatpush2.bf16.msra.mxu0 0
    %540 = vmatprep.subr.bf16.mxu0 0
    %541 = vmatpush2.bf16.msra.mxu0 0
    %542 = vmatprep.subr.bf16.mxu0 0
    %543 = vmatpush2.bf16.msra.mxu0 0
    %544 = vmatprep.mubr.bf16.mxu0 0
    %545 = vmatmul.mubr.bf16.gmra.mxu0 %v506
    %v546 = vpop.f32.mrf.mxu0
    %v547 = vadd.f32 0.0, %v546
    %v548 = vpop.f32.mrf.mxu0
    %v549 = vpop.f32.mrf.mxu0
    %v550 = vpop.f32.mrf.mxu0
    %551 = vdwg.mxu0
    %v552 = vpack.c.bf16 %v547, %v547
    %554 = vrot.lane.b32.xlu0 %v442, 112
    %v555 = vpop.permute.xlu0 %554
    %557 = vrot.lane.b32.xlu0 %v443, 112
    %v558 = vpop.permute.xlu0 %557
    %v560 = vsel %vm445, %v555, 0
    %v563 = vsel %vm445, %v558, 0
    %565 = vmatprep.subr.bf16.mxu0 0
    %566 = vmatpush1.bf16.xpose.msra.mxu0 0
    %567 = vmatprep.subr.bf16.mxu0 0
    %568 = vmatpush1.bf16.xpose.msra.mxu0 0
    %569 = vmatprep.subr.bf16.mxu0 0
    %570 = vmatpush1.bf16.xpose.msra.mxu0 0
    %571 = vmatprep.subr.bf16.mxu0 0
    %572 = vmatpush1.bf16.xpose.msra.mxu0 0
    %573 = vmatprep.subr.bf16.mxu0 0
    %574 = vmatpush1.bf16.xpose.msra.mxu0 0
    %575 = vmatprep.subr.bf16.mxu0 0
    %576 = vmatpush1.bf16.xpose.msra.mxu0 0
    %577 = vmatprep.subr.bf16.mxu0 0
    %578 = vmatpush1.bf16.xpose.msra.mxu0 0
    %579 = vmatprep.subr.bf16.mxu0 0
    %580 = vmatpush1.bf16.xpose.msra.mxu0 %v563
    %581 = vmatprep.subr.bf16.mxu0 0
    %582 = vmatpush2.bf16.xpose.msra.mxu0 0
    %583 = vmatprep.subr.bf16.mxu0 0
    %584 = vmatpush2.bf16.xpose.msra.mxu0 0
    %585 = vmatprep.subr.bf16.mxu0 0
    %586 = vmatpush2.bf16.xpose.msra.mxu0 0
    %587 = vmatprep.subr.bf16.mxu0 0
    %588 = vmatpush2.bf16.xpose.msra.mxu0 0
    %589 = vmatprep.subr.bf16.mxu0 0
    %590 = vmatpush2.bf16.xpose.msra.mxu0 0
    %591 = vmatprep.subr.bf16.mxu0 0
    %592 = vmatpush2.bf16.xpose.msra.mxu0 0
    %593 = vmatprep.subr.bf16.mxu0 0
    %594 = vmatpush2.bf16.xpose.msra.mxu0 0
    %595 = vmatprep.subr.bf16.mxu0 0
    %596 = vmatpush2.bf16.xpose.msra.mxu0 0
    %597 = vmatprep.mubr.bf16.mxu0 0
    %598 = vmatmul.mubr.bf16.gmra.mxu0 %v560
    %v599 = vpop.f32.mrf.mxu0
    %v600 = vadd.f32 0.0, %v599
    %v601 = vpop.f32.mrf.mxu0
    %v602 = vpop.f32.mrf.mxu0
    %v603 = vpop.f32.mrf.mxu0
    %604 = vdwg.mxu0
    %v605 = vsel %vm492, %v600, -inf
    %606 = vmax.xlane.f32.xlu0 %v605
    %v607 = vpop.xlane.xlu0 %606
    %v608 = vsub.f32 %v600, %v607
    %v609 = vmul.f32 %v608, 1.442695
    %v610 = vpow.pop %v609
    %v611 = vsel %vm492, %v610, 0.0
    %612 = vadd.xlane.f32.xlu0 %v611
    %v613 = vpop.xlane.xlu0 %612
    %v614 = vrcp.pop %v613
    %v615 = vmul.f32 %v610, %v614
    %v616 = vpack.c.bf16 %v615, %v615
    %618 = vrot.lane.b32.xlu0 %v444, 112
    %v619 = vpop.permute.xlu0 %618
    %v621 = vsel %vm492, %v616, 0
    %v624 = vsel %vm508, %v619, 0
    %626 = vmatprep.subr.bf16.mxu0 0
    %627 = vmatpush1.bf16.msra.mxu0 0
    %628 = vmatprep.subr.bf16.mxu0 0
    %629 = vmatpush1.bf16.msra.mxu0 0
    %630 = vmatprep.subr.bf16.mxu0 0
    %631 = vmatpush1.bf16.msra.mxu0 0
    %632 = vmatprep.subr.bf16.mxu0 0
    %633 = vmatpush1.bf16.msra.mxu0 0
    %634 = vmatprep.subr.bf16.mxu0 0
    %635 = vmatpush1.bf16.msra.mxu0 0
    %636 = vmatprep.subr.bf16.mxu0 0
    %637 = vmatpush1.bf16.msra.mxu0 0
    %638 = vmatprep.subr.bf16.mxu0 0
    %639 = vmatpush1.bf16.msra.mxu0 0
    %640 = vmatprep.subr.bf16.mxu0 0
    %641 = vmatpush1.bf16.msra.mxu0 %v624
    %642 = vmatprep.subr.bf16.mxu0 0
    %643 = vmatpush2.bf16.msra.mxu0 0
    %644 = vmatprep.subr.bf16.mxu0 0
    %645 = vmatpush2.bf16.msra.mxu0 0
    %646 = vmatprep.subr.bf16.mxu0 0
    %647 = vmatpush2.bf16.msra.mxu0 0
    %648 = vmatprep.subr.bf16.mxu0 0
    %649 = vmatpush2.bf16.msra.mxu0 0
    %650 = vmatprep.subr.bf16.mxu0 0
    %651 = vmatpush2.bf16.msra.mxu0 0
    %652 = vmatprep.subr.bf16.mxu0 0
    %653 = vmatpush2.bf16.msra.mxu0 0
    %654 = vmatprep.subr.bf16.mxu0 0
    %655 = vmatpush2.bf16.msra.mxu0 0
    %656 = vmatprep.subr.bf16.mxu0 0
    %657 = vmatpush2.bf16.msra.mxu0 0
    %658 = vmatprep.mubr.bf16.mxu0 0
    %659 = vmatmul.mubr.bf16.gmra.mxu0 %v621
    %v660 = vpop.f32.mrf.mxu0
    %v661 = vadd.f32 0.0, %v660
    %v662 = vpop.f32.mrf.mxu0
    %v663 = vpop.f32.mrf.mxu0
    %v664 = vpop.f32.mrf.mxu0
    %665 = vdwg.mxu0
    %v666 = vpack.c.bf16 %v661, %v661
    %v669 = vunpack.c.l.b16 %v436
    %v670 = vunpack.c.l.b16 %v437
    %v671 = vpack.c.b16 %v670, %v669
    %v674 = vsel %vm445, %v666, 0
    %676 = vmatprep.subr.bf16.mxu0 0
    %677 = vmatpush1.bf16.msra.mxu0 0
    %678 = vmatprep.subr.bf16.mxu0 0
    %679 = vmatpush1.bf16.msra.mxu0 0
    %680 = vmatprep.subr.bf16.mxu0 0
    %681 = vmatpush1.bf16.msra.mxu0 0
    %682 = vmatprep.subr.bf16.mxu0 0
    %683 = vmatpush1.bf16.msra.mxu0 0
    %684 = vmatprep.subr.bf16.mxu0 0
    %685 = vmatpush1.bf16.msra.mxu0 0
    %686 = vmatprep.subr.bf16.mxu0 0
    %687 = vmatpush1.bf16.msra.mxu0 0
    %688 = vmatprep.subr.bf16.mxu0 0
    %689 = vmatpush1.bf16.msra.mxu0 0
    %690 = vmatprep.subr.bf16.mxu0 0
    %691 = vmatpush1.bf16.msra.mxu0 %v671
    %692 = vmatprep.subr.bf16.mxu0 0
    %693 = vmatpush2.bf16.msra.mxu0 0
    %694 = vmatprep.subr.bf16.mxu0 0
    %695 = vmatpush2.bf16.msra.mxu0 0
    %696 = vmatprep.subr.bf16.mxu0 0
    %697 = vmatpush2.bf16.msra.mxu0 0
    %698 = vmatprep.subr.bf16.mxu0 0
    %699 = vmatpush2.bf16.msra.mxu0 0
    %700 = vmatprep.subr.bf16.mxu0 0
    %701 = vmatpush2.bf16.msra.mxu0 0
    %702 = vmatprep.subr.bf16.mxu0 0
    %703 = vmatpush2.bf16.msra.mxu0 0
    %704 = vmatprep.subr.bf16.mxu0 0
    %705 = vmatpush2.bf16.msra.mxu0 0
    %706 = vmatprep.subr.bf16.mxu0 0
    %707 = vmatpush2.bf16.msra.mxu0 0
    %708 = vmatprep.mubr.bf16.mxu0 0
    %709 = vmatmul.mubr.bf16.gmra.mxu0 %v674
    %v710 = vpop.f32.mrf.mxu0
    %v711 = vadd.f32 0.0, %v710
    %v712 = vpop.f32.mrf.mxu0
    %v713 = vpop.f32.mrf.mxu0
    %v714 = vpop.f32.mrf.mxu0
    %715 = vdwg.mxu0
    %v718 = vunpack.c.l.b16 %v434
    %v719 = vunpack.c.l.b16 %v435
    %v720 = vpack.c.b16 %v719, %v718
    %v723 = vsel %vm445, %v552, 0
    %725 = vmatprep.subr.bf16.mxu0 0
    %726 = vmatpush1.bf16.msra.mxu0 0
    %727 = vmatprep.subr.bf16.mxu0 0
    %728 = vmatpush1.bf16.msra.mxu0 0
    %729 = vmatprep.subr.bf16.mxu0 0
    %730 = vmatpush1.bf16.msra.mxu0 0
    %731 = vmatprep.subr.bf16.mxu0 0
    %732 = vmatpush1.bf16.msra.mxu0 0
    %733 = vmatprep.subr.bf16.mxu0 0
    %734 = vmatpush1.bf16.msra.mxu0 0
    %735 = vmatprep.subr.bf16.mxu0 0
    %736 = vmatpush1.bf16.msra.mxu0 0
    %737 = vmatprep.subr.bf16.mxu0 0
    %738 = vmatpush1.bf16.msra.mxu0 0
    %739 = vmatprep.subr.bf16.mxu0 0
    %740 = vmatpush1.bf16.msra.mxu0 %v720
    %741 = vmatprep.subr.bf16.mxu0 0
    %742 = vmatpush2.bf16.msra.mxu0 0
    %743 = vmatprep.subr.bf16.mxu0 0
    %744 = vmatpush2.bf16.msra.mxu0 0
    %745 = vmatprep.subr.bf16.mxu0 0
    %746 = vmatpush2.bf16.msra.mxu0 0
    %747 = vmatprep.subr.bf16.mxu0 0
    %748 = vmatpush2.bf16.msra.mxu0 0
    %749 = vmatprep.subr.bf16.mxu0 0
    %750 = vmatpush2.bf16.msra.mxu0 0
    %751 = vmatprep.subr.bf16.mxu0 0
    %752 = vmatpush2.bf16.msra.mxu0 0
    %753 = vmatprep.subr.bf16.mxu0 0
    %754 = vmatpush2.bf16.msra.mxu0 0
    %755 = vmatprep.subr.bf16.mxu0 0
    %756 = vmatpush2.bf16.msra.mxu0 0
    %757 = vmatprep.mubr.bf16.mxu0 0
    %758 = vmatmul.mubr.bf16.gmra.mxu0 %v723
    %v759 = vpop.f32.mrf.mxu0
    %v760 = vadd.f32 %v711, %v759
    %v761 = vpop.f32.mrf.mxu0
    %v762 = vpop.f32.mrf.mxu0
    %v763 = vpop.f32.mrf.mxu0
    %764 = vdwg.mxu0
    %765 = vrot.lane.b32.xlu0 %v442, 96
    %v766 = vpop.permute.xlu0 %765
    %767 = vrot.lane.b32.xlu0 %v443, 96
    %v768 = vpop.permute.xlu0 %767
    %v770 = vsel %vm445, %v766, 0
    %v773 = vsel %vm445, %v768, 0
    %775 = vmatprep.subr.bf16.mxu0 0
    %776 = vmatpush1.bf16.xpose.msra.mxu0 0
    %777 = vmatprep.subr.bf16.mxu0 0
    %778 = vmatpush1.bf16.xpose.msra.mxu0 0
    %779 = vmatprep.subr.bf16.mxu0 0
    %780 = vmatpush1.bf16.xpose.msra.mxu0 0
    %781 = vmatprep.subr.bf16.mxu0 0
    %782 = vmatpush1.bf16.xpose.msra.mxu0 0
    %783 = vmatprep.subr.bf16.mxu0 0
    %784 = vmatpush1.bf16.xpose.msra.mxu0 0
    %785 = vmatprep.subr.bf16.mxu0 0
    %786 = vmatpush1.bf16.xpose.msra.mxu0 0
    %787 = vmatprep.subr.bf16.mxu0 0
    %788 = vmatpush1.bf16.xpose.msra.mxu0 0
    %789 = vmatprep.subr.bf16.mxu0 0
    %790 = vmatpush1.bf16.xpose.msra.mxu0 %v773
    %791 = vmatprep.subr.bf16.mxu0 0
    %792 = vmatpush2.bf16.xpose.msra.mxu0 0
    %793 = vmatprep.subr.bf16.mxu0 0
    %794 = vmatpush2.bf16.xpose.msra.mxu0 0
    %795 = vmatprep.subr.bf16.mxu0 0
    %796 = vmatpush2.bf16.xpose.msra.mxu0 0
    %797 = vmatprep.subr.bf16.mxu0 0
    %798 = vmatpush2.bf16.xpose.msra.mxu0 0
    %799 = vmatprep.subr.bf16.mxu0 0
    %800 = vmatpush2.bf16.xpose.msra.mxu0 0
    %801 = vmatprep.subr.bf16.mxu0 0
    %802 = vmatpush2.bf16.xpose.msra.mxu0 0
    %803 = vmatprep.subr.bf16.mxu0 0
    %804 = vmatpush2.bf16.xpose.msra.mxu0 0
    %805 = vmatprep.subr.bf16.mxu0 0
    %806 = vmatpush2.bf16.xpose.msra.mxu0 0
    %807 = vmatprep.mubr.bf16.mxu0 0
    %808 = vmatmul.mubr.bf16.gmra.mxu0 %v770
    %v809 = vpop.f32.mrf.mxu0
    %v810 = vadd.f32 0.0, %v809
    %v811 = vpop.f32.mrf.mxu0
    %v812 = vpop.f32.mrf.mxu0
    %v813 = vpop.f32.mrf.mxu0
    %814 = vdwg.mxu0
    %v815 = vsel %vm492, %v810, -inf
    %816 = vmax.xlane.f32.xlu0 %v815
    %v817 = vpop.xlane.xlu0 %816
    %v818 = vsub.f32 %v810, %v817
    %v819 = vmul.f32 %v818, 1.442695
    %v820 = vpow.pop %v819
    %v821 = vsel %vm492, %v820, 0.0
    %822 = vadd.xlane.f32.xlu0 %v821
    %v823 = vpop.xlane.xlu0 %822
    %v824 = vrcp.pop %v823
    %v825 = vmul.f32 %v820, %v824
    %v826 = vpack.c.bf16 %v825, %v825
    %827 = vrot.lane.b32.xlu0 %v444, 96
    %v828 = vpop.permute.xlu0 %827
    %v830 = vsel %vm492, %v826, 0
    %v833 = vsel %vm508, %v828, 0
    %835 = vmatprep.subr.bf16.mxu0 0
    %836 = vmatpush1.bf16.msra.mxu0 0
    %837 = vmatprep.subr.bf16.mxu0 0
    %838 = vmatpush1.bf16.msra.mxu0 0
    %839 = vmatprep.subr.bf16.mxu0 0
    %840 = vmatpush1.bf16.msra.mxu0 0
    %841 = vmatprep.subr.bf16.mxu0 0
    %842 = vmatpush1.bf16.msra.mxu0 0
    %843 = vmatprep.subr.bf16.mxu0 0
    %844 = vmatpush1.bf16.msra.mxu0 0
    %845 = vmatprep.subr.bf16.mxu0 0
    %846 = vmatpush1.bf16.msra.mxu0 0
    %847 = vmatprep.subr.bf16.mxu0 0
    %848 = vmatpush1.bf16.msra.mxu0 0
    %849 = vmatprep.subr.bf16.mxu0 0
    %850 = vmatpush1.bf16.msra.mxu0 %v833
    %851 = vmatprep.subr.bf16.mxu0 0
    %852 = vmatpush2.bf16.msra.mxu0 0
    %853 = vmatprep.subr.bf16.mxu0 0
    %854 = vmatpush2.bf16.msra.mxu0 0
    %855 = vmatprep.subr.bf16.mxu0 0
    %856 = vmatpush2.bf16.msra.mxu0 0
    %857 = vmatprep.subr.bf16.mxu0 0
    %858 = vmatpush2.bf16.msra.mxu0 0
    %859 = vmatprep.subr.bf16.mxu0 0
    %860 = vmatpush2.bf16.msra.mxu0 0
    %861 = vmatprep.subr.bf16.mxu0 0
    %862 = vmatpush2.bf16.msra.mxu0 0
    %863 = vmatprep.subr.bf16.mxu0 0
    %864 = vmatpush2.bf16.msra.mxu0 0
    %865 = vmatprep.subr.bf16.mxu0 0
    %866 = vmatpush2.bf16.msra.mxu0 0
    %867 = vmatprep.mubr.bf16.mxu0 0
    %868 = vmatmul.mubr.bf16.gmra.mxu0 %v830
    %v869 = vpop.f32.mrf.mxu0
    %v870 = vadd.f32 0.0, %v869
    %v871 = vpop.f32.mrf.mxu0
    %v872 = vpop.f32.mrf.mxu0
    %v873 = vpop.f32.mrf.mxu0
    %874 = vdwg.mxu0
    %v875 = vpack.c.bf16 %v870, %v870
    %v878 = vunpack.c.l.b16 %v438
    %v879 = vunpack.c.l.b16 %v439
    %v880 = vpack.c.b16 %v879, %v878
    %v883 = vsel %vm445, %v875, 0
    %885 = vmatprep.subr.bf16.mxu0 0
    %886 = vmatpush1.bf16.msra.mxu0 0
    %887 = vmatprep.subr.bf16.mxu0 0
    %888 = vmatpush1.bf16.msra.mxu0 0
    %889 = vmatprep.subr.bf16.mxu0 0
    %890 = vmatpush1.bf16.msra.mxu0 0
    %891 = vmatprep.subr.bf16.mxu0 0
    %892 = vmatpush1.bf16.msra.mxu0 0
    %893 = vmatprep.subr.bf16.mxu0 0
    %894 = vmatpush1.bf16.msra.mxu0 0
    %895 = vmatprep.subr.bf16.mxu0 0
    %896 = vmatpush1.bf16.msra.mxu0 0
    %897 = vmatprep.subr.bf16.mxu0 0
    %898 = vmatpush1.bf16.msra.mxu0 0
    %899 = vmatprep.subr.bf16.mxu0 0
    %900 = vmatpush1.bf16.msra.mxu0 %v880
    %901 = vmatprep.subr.bf16.mxu0 0
    %902 = vmatpush2.bf16.msra.mxu0 0
    %903 = vmatprep.subr.bf16.mxu0 0
    %904 = vmatpush2.bf16.msra.mxu0 0
    %905 = vmatprep.subr.bf16.mxu0 0
    %906 = vmatpush2.bf16.msra.mxu0 0
    %907 = vmatprep.subr.bf16.mxu0 0
    %908 = vmatpush2.bf16.msra.mxu0 0
    %909 = vmatprep.subr.bf16.mxu0 0
    %910 = vmatpush2.bf16.msra.mxu0 0
    %911 = vmatprep.subr.bf16.mxu0 0
    %912 = vmatpush2.bf16.msra.mxu0 0
    %913 = vmatprep.subr.bf16.mxu0 0
    %914 = vmatpush2.bf16.msra.mxu0 0
    %915 = vmatprep.subr.bf16.mxu0 0
    %916 = vmatpush2.bf16.msra.mxu0 0
    %917 = vmatprep.mubr.bf16.mxu0 0
    %918 = vmatmul.mubr.bf16.gmra.mxu0 %v883
    %v919 = vpop.f32.mrf.mxu0
    %v920 = vadd.f32 0.0, %v919
    %v921 = vpop.f32.mrf.mxu0
    %v922 = vpop.f32.mrf.mxu0
    %v923 = vpop.f32.mrf.mxu0
    %924 = vdwg.mxu0
    %v925 = vadd.f32 %v760, %v920
    %926 = vrot.lane.b32.xlu0 %v442, 80
    %v927 = vpop.permute.xlu0 %926
    %928 = vrot.lane.b32.xlu0 %v443, 80
    %v929 = vpop.permute.xlu0 %928
    %v931 = vsel %vm445, %v927, 0
    %v934 = vsel %vm445, %v929, 0
    %936 = vmatprep.subr.bf16.mxu0 0
    %937 = vmatpush1.bf16.xpose.msra.mxu0 0
    %938 = vmatprep.subr.bf16.mxu0 0
    %939 = vmatpush1.bf16.xpose.msra.mxu0 0
    %940 = vmatprep.subr.bf16.mxu0 0
    %941 = vmatpush1.bf16.xpose.msra.mxu0 0
    %942 = vmatprep.subr.bf16.mxu0 0
    %943 = vmatpush1.bf16.xpose.msra.mxu0 0
    %944 = vmatprep.subr.bf16.mxu0 0
    %945 = vmatpush1.bf16.xpose.msra.mxu0 0
    %946 = vmatprep.subr.bf16.mxu0 0
    %947 = vmatpush1.bf16.xpose.msra.mxu0 0
    %948 = vmatprep.subr.bf16.mxu0 0
    %949 = vmatpush1.bf16.xpose.msra.mxu0 0
    %950 = vmatprep.subr.bf16.mxu0 0
    %951 = vmatpush1.bf16.xpose.msra.mxu0 %v934
    %952 = vmatprep.subr.bf16.mxu0 0
    %953 = vmatpush2.bf16.xpose.msra.mxu0 0
    %954 = vmatprep.subr.bf16.mxu0 0
    %955 = vmatpush2.bf16.xpose.msra.mxu0 0
    %956 = vmatprep.subr.bf16.mxu0 0
    %957 = vmatpush2.bf16.xpose.msra.mxu0 0
    %958 = vmatprep.subr.bf16.mxu0 0
    %959 = vmatpush2.bf16.xpose.msra.mxu0 0
    %960 = vmatprep.subr.bf16.mxu0 0
    %961 = vmatpush2.bf16.xpose.msra.mxu0 0
    %962 = vmatprep.subr.bf16.mxu0 0
    %963 = vmatpush2.bf16.xpose.msra.mxu0 0
    %964 = vmatprep.subr.bf16.mxu0 0
    %965 = vmatpush2.bf16.xpose.msra.mxu0 0
    %966 = vmatprep.subr.bf16.mxu0 0
    %967 = vmatpush2.bf16.xpose.msra.mxu0 0
    %968 = vmatprep.mubr.bf16.mxu0 0
    %969 = vmatmul.mubr.bf16.gmra.mxu0 %v931
    %v970 = vpop.f32.mrf.mxu0
    %v971 = vadd.f32 0.0, %v970
    %v972 = vpop.f32.mrf.mxu0
    %v973 = vpop.f32.mrf.mxu0
    %v974 = vpop.f32.mrf.mxu0
    %975 = vdwg.mxu0
    %v976 = vsel %vm492, %v971, -inf
    %977 = vmax.xlane.f32.xlu0 %v976
    %v978 = vpop.xlane.xlu0 %977
    %v979 = vsub.f32 %v971, %v978
    %v980 = vmul.f32 %v979, 1.442695
    %v981 = vpow.pop %v980
    %v982 = vsel %vm492, %v981, 0.0
    %983 = vadd.xlane.f32.xlu0 %v982
    %v984 = vpop.xlane.xlu0 %983
    %v985 = vrcp.pop %v984
    %v986 = vmul.f32 %v981, %v985
    %v987 = vpack.c.bf16 %v986, %v986
    %988 = vrot.lane.b32.xlu0 %v444, 80
    %v989 = vpop.permute.xlu0 %988
    %v991 = vsel %vm492, %v987, 0
    %v994 = vsel %vm508, %v989, 0
    %996 = vmatprep.subr.bf16.mxu0 0
    %997 = vmatpush1.bf16.msra.mxu0 0
    %998 = vmatprep.subr.bf16.mxu0 0
    %999 = vmatpush1.bf16.msra.mxu0 0
    %1000 = vmatprep.subr.bf16.mxu0 0
    %1001 = vmatpush1.bf16.msra.mxu0 0
    %1002 = vmatprep.subr.bf16.mxu0 0
    %1003 = vmatpush1.bf16.msra.mxu0 0
    %1004 = vmatprep.subr.bf16.mxu0 0
    %1005 = vmatpush1.bf16.msra.mxu0 0
    %1006 = vmatprep.subr.bf16.mxu0 0
    %1007 = vmatpush1.bf16.msra.mxu0 0
    %1008 = vmatprep.subr.bf16.mxu0 0
    %1009 = vmatpush1.bf16.msra.mxu0 0
    %1010 = vmatprep.subr.bf16.mxu0 0
    %1011 = vmatpush1.bf16.msra.mxu0 %v994
    %1012 = vmatprep.subr.bf16.mxu0 0
    %1013 = vmatpush2.bf16.msra.mxu0 0
    %1014 = vmatprep.subr.bf16.mxu0 0
    %1015 = vmatpush2.bf16.msra.mxu0 0
    %1016 = vmatprep.subr.bf16.mxu0 0
    %1017 = vmatpush2.bf16.msra.mxu0 0
    %1018 = vmatprep.subr.bf16.mxu0 0
    %1019 = vmatpush2.bf16.msra.mxu0 0
    %1020 = vmatprep.subr.bf16.mxu0 0
    %1021 = vmatpush2.bf16.msra.mxu0 0
    %1022 = vmatprep.subr.bf16.mxu0 0
    %1023 = vmatpush2.bf16.msra.mxu0 0
    %1024 = vmatprep.subr.bf16.mxu0 0
    %1025 = vmatpush2.bf16.msra.mxu0 0
    %1026 = vmatprep.subr.bf16.mxu0 0
    %1027 = vmatpush2.bf16.msra.mxu0 0
    %1028 = vmatprep.mubr.bf16.mxu0 0
    %1029 = vmatmul.mubr.bf16.gmra.mxu0 %v991
    %v1030 = vpop.f32.mrf.mxu0
    %v1031 = vadd.f32 0.0, %v1030
    %v1032 = vpop.f32.mrf.mxu0
    %v1033 = vpop.f32.mrf.mxu0
    %v1034 = vpop.f32.mrf.mxu0
    %1035 = vdwg.mxu0
    %v1036 = vpack.c.bf16 %v1031, %v1031
    %v1039 = vunpack.c.l.b16 %v440
    %v1040 = vunpack.c.l.b16 %v441
    %v1041 = vpack.c.b16 %v1040, %v1039
    %v1044 = vsel %vm445, %v1036, 0
    %1046 = vmatprep.subr.bf16.mxu0 0
    %1047 = vmatpush1.bf16.msra.mxu0 0
    %1048 = vmatprep.subr.bf16.mxu0 0
    %1049 = vmatpush1.bf16.msra.mxu0 0
    %1050 = vmatprep.subr.bf16.mxu0 0
    %1051 = vmatpush1.bf16.msra.mxu0 0
    %1052 = vmatprep.subr.bf16.mxu0 0
    %1053 = vmatpush1.bf16.msra.mxu0 0
    %1054 = vmatprep.subr.bf16.mxu0 0
    %1055 = vmatpush1.bf16.msra.mxu0 0
    %1056 = vmatprep.subr.bf16.mxu0 0
    %1057 = vmatpush1.bf16.msra.mxu0 0
    %1058 = vmatprep.subr.bf16.mxu0 0
    %1059 = vmatpush1.bf16.msra.mxu0 0
    %1060 = vmatprep.subr.bf16.mxu0 0
    %1061 = vmatpush1.bf16.msra.mxu0 %v1041
    %1062 = vmatprep.subr.bf16.mxu0 0
    %1063 = vmatpush2.bf16.msra.mxu0 0
    %1064 = vmatprep.subr.bf16.mxu0 0
    %1065 = vmatpush2.bf16.msra.mxu0 0
    %1066 = vmatprep.subr.bf16.mxu0 0
    %1067 = vmatpush2.bf16.msra.mxu0 0
    %1068 = vmatprep.subr.bf16.mxu0 0
    %1069 = vmatpush2.bf16.msra.mxu0 0
    %1070 = vmatprep.subr.bf16.mxu0 0
    %1071 = vmatpush2.bf16.msra.mxu0 0
    %1072 = vmatprep.subr.bf16.mxu0 0
    %1073 = vmatpush2.bf16.msra.mxu0 0
    %1074 = vmatprep.subr.bf16.mxu0 0
    %1075 = vmatpush2.bf16.msra.mxu0 0
    %1076 = vmatprep.subr.bf16.mxu0 0
    %1077 = vmatpush2.bf16.msra.mxu0 0
    %1078 = vmatprep.mubr.bf16.mxu0 0
    %1079 = vmatmul.mubr.bf16.gmra.mxu0 %v1044
    %v1080 = vpop.f32.mrf.mxu0
    %v1081 = vadd.f32 0.0, %v1080
    %v1082 = vpop.f32.mrf.mxu0
    %v1083 = vpop.f32.mrf.mxu0
    %v1084 = vpop.f32.mrf.mxu0
    %1085 = vdwg.mxu0
    %v1086 = vadd.f32 %v925, %v1081
    %v1087 = vpack.c.bf16 %v274, %v274
    %v1088 = vpack.c.bf16 %v352, %v352
    %v1089 = vpack.c.bf16 %v430, %v430
    %v1091 = vsel %vm445, %v1087, 0
    %v1094 = vsel %vm445, %v1088, 0
    %1096 = vmatprep.subr.bf16.mxu0 0
    %1097 = vmatpush1.bf16.xpose.msra.mxu0 0
    %1098 = vmatprep.subr.bf16.mxu0 0
    %1099 = vmatpush1.bf16.xpose.msra.mxu0 0
    %1100 = vmatprep.subr.bf16.mxu0 0
    %1101 = vmatpush1.bf16.xpose.msra.mxu0 0
    %1102 = vmatprep.subr.bf16.mxu0 0
    %1103 = vmatpush1.bf16.xpose.msra.mxu0 0
    %1104 = vmatprep.subr.bf16.mxu0 0
    %1105 = vmatpush1.bf16.xpose.msra.mxu0 0
    %1106 = vmatprep.subr.bf16.mxu0 0
    %1107 = vmatpush1.bf16.xpose.msra.mxu0 0
    %1108 = vmatprep.subr.bf16.mxu0 0
    %1109 = vmatpush1.bf16.xpose.msra.mxu0 0
    %1110 = vmatprep.subr.bf16.mxu0 0
    %1111 = vmatpush1.bf16.xpose.msra.mxu0 %v1094
    %1112 = vmatprep.subr.bf16.mxu0 0
    %1113 = vmatpush2.bf16.xpose.msra.mxu0 0
    %1114 = vmatprep.subr.bf16.mxu0 0
    %1115 = vmatpush2.bf16.xpose.msra.mxu0 0
    %1116 = vmatprep.subr.bf16.mxu0 0
    %1117 = vmatpush2.bf16.xpose.msra.mxu0 0
    %1118 = vmatprep.subr.bf16.mxu0 0
    %1119 = vmatpush2.bf16.xpose.msra.mxu0 0
    %1120 = vmatprep.subr.bf16.mxu0 0
    %1121 = vmatpush2.bf16.xpose.msra.mxu0 0
    %1122 = vmatprep.subr.bf16.mxu0 0
    %1123 = vmatpush2.bf16.xpose.msra.mxu0 0
    %1124 = vmatprep.subr.bf16.mxu0 0
    %1125 = vmatpush2.bf16.xpose.msra.mxu0 0
    %1126 = vmatprep.subr.bf16.mxu0 0
    %1127 = vmatpush2.bf16.xpose.msra.mxu0 0
    %1128 = vmatprep.mubr.bf16.mxu0 0
    %1129 = vmatmul.mubr.bf16.gmra.mxu0 %v1091
    %v1130 = vpop.f32.mrf.mxu0
    %v1131 = vadd.f32 0.0, %v1130
    %v1132 = vpop.f32.mrf.mxu0
    %v1133 = vpop.f32.mrf.mxu0
    %v1134 = vpop.f32.mrf.mxu0
    %1135 = vdwg.mxu0
    %v1136 = vsel %vm492, %v1131, -inf
    %1137 = vmax.xlane.f32.xlu0 %v1136
    %v1138 = vpop.xlane.xlu0 %1137
    %v1139 = vsub.f32 %v1131, %v1138
    %v1140 = vmul.f32 %v1139, 1.442695
    %v1141 = vpow.pop %v1140
    %v1142 = vsel %vm492, %v1141, 0.0
    %1143 = vadd.xlane.f32.xlu0 %v1142
    %v1144 = vpop.xlane.xlu0 %1143
    %v1145 = vrcp.pop %v1144
    %v1146 = vmul.f32 %v1141, %v1145
    %v1147 = vpack.c.bf16 %v1146, %v1146
    %v1149 = vsel %vm492, %v1147, 0
    %v1152 = vsel %vm508, %v1089, 0
    %1154 = vmatprep.subr.bf16.mxu0 0
    %1155 = vmatpush1.bf16.msra.mxu0 0
    %1156 = vmatprep.subr.bf16.mxu0 0
    %1157 = vmatpush1.bf16.msra.mxu0 0
    %1158 = vmatprep.subr.bf16.mxu0 0
    %1159 = vmatpush1.bf16.msra.mxu0 0
    %1160 = vmatprep.subr.bf16.mxu0 0
    %1161 = vmatpush1.bf16.msra.mxu0 0
    %1162 = vmatprep.subr.bf16.mxu0 0
    %1163 = vmatpush1.bf16.msra.mxu0 0
    %1164 = vmatprep.subr.bf16.mxu0 0
    %1165 = vmatpush1.bf16.msra.mxu0 0
    %1166 = vmatprep.subr.bf16.mxu0 0
    %1167 = vmatpush1.bf16.msra.mxu0 0
    %1168 = vmatprep.subr.bf16.mxu0 0
    %1169 = vmatpush1.bf16.msra.mxu0 %v1152
    %1170 = vmatprep.subr.bf16.mxu0 0
    %1171 = vmatpush2.bf16.msra.mxu0 0
    %1172 = vmatprep.subr.bf16.mxu0 0
    %1173 = vmatpush2.bf16.msra.mxu0 0
    %1174 = vmatprep.subr.bf16.mxu0 0
    %1175 = vmatpush2.bf16.msra.mxu0 0
    %1176 = vmatprep.subr.bf16.mxu0 0
    %1177 = vmatpush2.bf16.msra.mxu0 0
    %1178 = vmatprep.subr.bf16.mxu0 0
    %1179 = vmatpush2.bf16.msra.mxu0 0
    %1180 = vmatprep.subr.bf16.mxu0 0
    %1181 = vmatpush2.bf16.msra.mxu0 0
    %1182 = vmatprep.subr.bf16.mxu0 0
    %1183 = vmatpush2.bf16.msra.mxu0 0
    %1184 = vmatprep.subr.bf16.mxu0 0
    %1185 = vmatpush2.bf16.msra.mxu0 0
    %1186 = vmatprep.mubr.bf16.mxu0 0
    %1187 = vmatmul.mubr.bf16.gmra.mxu0 %v1149
    %v1188 = vpop.f32.mrf.mxu0
    %v1189 = vadd.f32 0.0, %v1188
    %v1190 = vpop.f32.mrf.mxu0
    %v1191 = vpop.f32.mrf.mxu0
    %v1192 = vpop.f32.mrf.mxu0
    %1193 = vdwg.mxu0
    %v1194 = vpack.c.bf16 %v1189, %v1189
    %1196 = vrot.lane.b32.xlu0 %v1087, 112
    %v1197 = vpop.permute.xlu0 %1196
    %1199 = vrot.lane.b32.xlu0 %v1088, 112
    %v1200 = vpop.permute.xlu0 %1199
    %v1202 = vsel %vm445, %v1197, 0
    %v1205 = vsel %vm445, %v1200, 0
    %1207 = vmatprep.subr.bf16.mxu0 0
    %1208 = vmatpush1.bf16.xpose.msra.mxu0 0
    %1209 = vmatprep.subr.bf16.mxu0 0
    %1210 = vmatpush1.bf16.xpose.msra.mxu0 0
    %1211 = vmatprep.subr.bf16.mxu0 0
    %1212 = vmatpush1.bf16.xpose.msra.mxu0 0
    %1213 = vmatprep.subr.bf16.mxu0 0
    %1214 = vmatpush1.bf16.xpose.msra.mxu0 0
    %1215 = vmatprep.subr.bf16.mxu0 0
    %1216 = vmatpush1.bf16.xpose.msra.mxu0 0
    %1217 = vmatprep.subr.bf16.mxu0 0
    %1218 = vmatpush1.bf16.xpose.msra.mxu0 0
    %1219 = vmatprep.subr.bf16.mxu0 0
    %1220 = vmatpush1.bf16.xpose.msra.mxu0 0
    %1221 = vmatprep.subr.bf16.mxu0 0
    %1222 = vmatpush1.bf16.xpose.msra.mxu0 %v1205
    %1223 = vmatprep.subr.bf16.mxu0 0
    %1224 = vmatpush2.bf16.xpose.msra.mxu0 0
    %1225 = vmatprep.subr.bf16.mxu0 0
    %1226 = vmatpush2.bf16.xpose.msra.mxu0 0
    %1227 = vmatprep.subr.bf16.mxu0 0
    %1228 = vmatpush2.bf16.xpose.msra.mxu0 0
    %1229 = vmatprep.subr.bf16.mxu0 0
    %1230 = vmatpush2.bf16.xpose.msra.mxu0 0
    %1231 = vmatprep.subr.bf16.mxu0 0
    %1232 = vmatpush2.bf16.xpose.msra.mxu0 0
    %1233 = vmatprep.subr.bf16.mxu0 0
    %1234 = vmatpush2.bf16.xpose.msra.mxu0 0
    %1235 = vmatprep.subr.bf16.mxu0 0
    %1236 = vmatpush2.bf16.xpose.msra.mxu0 0
    %1237 = vmatprep.subr.bf16.mxu0 0
    %1238 = vmatpush2.bf16.xpose.msra.mxu0 0
    %1239 = vmatprep.mubr.bf16.mxu0 0
    %1240 = vmatmul.mubr.bf16.gmra.mxu0 %v1202
    %v1241 = vpop.f32.mrf.mxu0
    %v1242 = vadd.f32 0.0, %v1241
    %v1243 = vpop.f32.mrf.mxu0
    %v1244 = vpop.f32.mrf.mxu0
    %v1245 = vpop.f32.mrf.mxu0
    %1246 = vdwg.mxu0
    %v1247 = vsel %vm492, %v1242, -inf
    %1248 = vmax.xlane.f32.xlu0 %v1247
    %v1249 = vpop.xlane.xlu0 %1248
    %v1250 = vsub.f32 %v1242, %v1249
    %v1251 = vmul.f32 %v1250, 1.442695
    %v1252 = vpow.pop %v1251
    %v1253 = vsel %vm492, %v1252, 0.0
    %1254 = vadd.xlane.f32.xlu0 %v1253
    %v1255 = vpop.xlane.xlu0 %1254
    %v1256 = vrcp.pop %v1255
    %v1257 = vmul.f32 %v1252, %v1256
    %v1258 = vpack.c.bf16 %v1257, %v1257
    %1260 = vrot.lane.b32.xlu0 %v1089, 112
    %v1261 = vpop.permute.xlu0 %1260
    %v1263 = vsel %vm492, %v1258, 0
    %v1266 = vsel %vm508, %v1261, 0
    %1268 = vmatprep.subr.bf16.mxu0 0
    %1269 = vmatpush1.bf16.msra.mxu0 0
    %1270 = vmatprep.subr.bf16.mxu0 0
    %1271 = vmatpush1.bf16.msra.mxu0 0
    %1272 = vmatprep.subr.bf16.mxu0 0
    %1273 = vmatpush1.bf16.msra.mxu0 0
    %1274 = vmatprep.subr.bf16.mxu0 0
    %1275 = vmatpush1.bf16.msra.mxu0 0
    %1276 = vmatprep.subr.bf16.mxu0 0
    %1277 = vmatpush1.bf16.msra.mxu0 0
    %1278 = vmatprep.subr.bf16.mxu0 0
    %1279 = vmatpush1.bf16.msra.mxu0 0
    %1280 = vmatprep.subr.bf16.mxu0 0
    %1281 = vmatpush1.bf16.msra.mxu0 0
    %1282 = vmatprep.subr.bf16.mxu0 0
    %1283 = vmatpush1.bf16.msra.mxu0 %v1266
    %1284 = vmatprep.subr.bf16.mxu0 0
    %1285 = vmatpush2.bf16.msra.mxu0 0
    %1286 = vmatprep.subr.bf16.mxu0 0
    %1287 = vmatpush2.bf16.msra.mxu0 0
    %1288 = vmatprep.subr.bf16.mxu0 0
    %1289 = vmatpush2.bf16.msra.mxu0 0
    %1290 = vmatprep.subr.bf16.mxu0 0
    %1291 = vmatpush2.bf16.msra.mxu0 0
    %1292 = vmatprep.subr.bf16.mxu0 0
    %1293 = vmatpush2.bf16.msra.mxu0 0
    %1294 = vmatprep.subr.bf16.mxu0 0
    %1295 = vmatpush2.bf16.msra.mxu0 0
    %1296 = vmatprep.subr.bf16.mxu0 0
    %1297 = vmatpush2.bf16.msra.mxu0 0
    %1298 = vmatprep.subr.bf16.mxu0 0
    %1299 = vmatpush2.bf16.msra.mxu0 0
    %1300 = vmatprep.mubr.bf16.mxu0 0
    %1301 = vmatmul.mubr.bf16.gmra.mxu0 %v1263
    %v1302 = vpop.f32.mrf.mxu0
    %v1303 = vadd.f32 0.0, %v1302
    %v1304 = vpop.f32.mrf.mxu0
    %v1305 = vpop.f32.mrf.mxu0
    %v1306 = vpop.f32.mrf.mxu0
    %1307 = vdwg.mxu0
    %v1308 = vpack.c.bf16 %v1303, %v1303
    %v1310 = vsel %vm445, %v1308, 0
    %1312 = vmatprep.subr.bf16.mxu0 0
    %1313 = vmatpush1.bf16.msra.mxu0 0
    %1314 = vmatprep.subr.bf16.mxu0 0
    %1315 = vmatpush1.bf16.msra.mxu0 0
    %1316 = vmatprep.subr.bf16.mxu0 0
    %1317 = vmatpush1.bf16.msra.mxu0 0
    %1318 = vmatprep.subr.bf16.mxu0 0
    %1319 = vmatpush1.bf16.msra.mxu0 0
    %1320 = vmatprep.subr.bf16.mxu0 0
    %1321 = vmatpush1.bf16.msra.mxu0 0
    %1322 = vmatprep.subr.bf16.mxu0 0
    %1323 = vmatpush1.bf16.msra.mxu0 0
    %1324 = vmatprep.subr.bf16.mxu0 0
    %1325 = vmatpush1.bf16.msra.mxu0 0
    %1326 = vmatprep.subr.bf16.mxu0 0
    %1327 = vmatpush1.bf16.msra.mxu0 %v671
    %1328 = vmatprep.subr.bf16.mxu0 0
    %1329 = vmatpush2.bf16.msra.mxu0 0
    %1330 = vmatprep.subr.bf16.mxu0 0
    %1331 = vmatpush2.bf16.msra.mxu0 0
    %1332 = vmatprep.subr.bf16.mxu0 0
    %1333 = vmatpush2.bf16.msra.mxu0 0
    %1334 = vmatprep.subr.bf16.mxu0 0
    %1335 = vmatpush2.bf16.msra.mxu0 0
    %1336 = vmatprep.subr.bf16.mxu0 0
    %1337 = vmatpush2.bf16.msra.mxu0 0
    %1338 = vmatprep.subr.bf16.mxu0 0
    %1339 = vmatpush2.bf16.msra.mxu0 0
    %1340 = vmatprep.subr.bf16.mxu0 0
    %1341 = vmatpush2.bf16.msra.mxu0 0
    %1342 = vmatprep.subr.bf16.mxu0 0
    %1343 = vmatpush2.bf16.msra.mxu0 0
    %1344 = vmatprep.mubr.bf16.mxu0 0
    %1345 = vmatmul.mubr.bf16.gmra.mxu0 %v1310
    %v1346 = vpop.f32.mrf.mxu0
    %v1347 = vadd.f32 0.0, %v1346
    %v1348 = vpop.f32.mrf.mxu0
    %v1349 = vpop.f32.mrf.mxu0
    %v1350 = vpop.f32.mrf.mxu0
    %1351 = vdwg.mxu0
    %v1353 = vsel %vm445, %v1194, 0
    %1355 = vmatprep.subr.bf16.mxu0 0
    %1356 = vmatpush1.bf16.msra.mxu0 0
    %1357 = vmatprep.subr.bf16.mxu0 0
    %1358 = vmatpush1.bf16.msra.mxu0 0
    %1359 = vmatprep.subr.bf16.mxu0 0
    %1360 = vmatpush1.bf16.msra.mxu0 0
    %1361 = vmatprep.subr.bf16.mxu0 0
    %1362 = vmatpush1.bf16.msra.mxu0 0
    %1363 = vmatprep.subr.bf16.mxu0 0
    %1364 = vmatpush1.bf16.msra.mxu0 0
    %1365 = vmatprep.subr.bf16.mxu0 0
    %1366 = vmatpush1.bf16.msra.mxu0 0
    %1367 = vmatprep.subr.bf16.mxu0 0
    %1368 = vmatpush1.bf16.msra.mxu0 0
    %1369 = vmatprep.subr.bf16.mxu0 0
    %1370 = vmatpush1.bf16.msra.mxu0 %v720
    %1371 = vmatprep.subr.bf16.mxu0 0
    %1372 = vmatpush2.bf16.msra.mxu0 0
    %1373 = vmatprep.subr.bf16.mxu0 0
    %1374 = vmatpush2.bf16.msra.mxu0 0
    %1375 = vmatprep.subr.bf16.mxu0 0
    %1376 = vmatpush2.bf16.msra.mxu0 0
    %1377 = vmatprep.subr.bf16.mxu0 0
    %1378 = vmatpush2.bf16.msra.mxu0 0
    %1379 = vmatprep.subr.bf16.mxu0 0
    %1380 = vmatpush2.bf16.msra.mxu0 0
    %1381 = vmatprep.subr.bf16.mxu0 0
    %1382 = vmatpush2.bf16.msra.mxu0 0
    %1383 = vmatprep.subr.bf16.mxu0 0
    %1384 = vmatpush2.bf16.msra.mxu0 0
    %1385 = vmatprep.subr.bf16.mxu0 0
    %1386 = vmatpush2.bf16.msra.mxu0 0
    %1387 = vmatprep.mubr.bf16.mxu0 0
    %1388 = vmatmul.mubr.bf16.gmra.mxu0 %v1353
    %v1389 = vpop.f32.mrf.mxu0
    %v1390 = vadd.f32 %v1347, %v1389
    %v1391 = vpop.f32.mrf.mxu0
    %v1392 = vpop.f32.mrf.mxu0
    %v1393 = vpop.f32.mrf.mxu0
    %1394 = vdwg.mxu0
    %1395 = vrot.lane.b32.xlu0 %v1087, 96
    %v1396 = vpop.permute.xlu0 %1395
    %1397 = vrot.lane.b32.xlu0 %v1088, 96
    %v1398 = vpop.permute.xlu0 %1397
    %v1400 = vsel %vm445, %v1396, 0
    %v1403 = vsel %vm445, %v1398, 0
    %1405 = vmatprep.subr.bf16.mxu0 0
    %1406 = vmatpush1.bf16.xpose.msra.mxu0 0
    %1407 = vmatprep.subr.bf16.mxu0 0
    %1408 = vmatpush1.bf16.xpose.msra.mxu0 0
    %1409 = vmatprep.subr.bf16.mxu0 0
    %1410 = vmatpush1.bf16.xpose.msra.mxu0 0
    %1411 = vmatprep.subr.bf16.mxu0 0
    %1412 = vmatpush1.bf16.xpose.msra.mxu0 0
    %1413 = vmatprep.subr.bf16.mxu0 0
    %1414 = vmatpush1.bf16.xpose.msra.mxu0 0
    %1415 = vmatprep.subr.bf16.mxu0 0
    %1416 = vmatpush1.bf16.xpose.msra.mxu0 0
    %1417 = vmatprep.subr.bf16.mxu0 0
    %1418 = vmatpush1.bf16.xpose.msra.mxu0 0
    %1419 = vmatprep.subr.bf16.mxu0 0
    %1420 = vmatpush1.bf16.xpose.msra.mxu0 %v1403
    %1421 = vmatprep.subr.bf16.mxu0 0
    %1422 = vmatpush2.bf16.xpose.msra.mxu0 0
    %1423 = vmatprep.subr.bf16.mxu0 0
    %1424 = vmatpush2.bf16.xpose.msra.mxu0 0
    %1425 = vmatprep.subr.bf16.mxu0 0
    %1426 = vmatpush2.bf16.xpose.msra.mxu0 0
    %1427 = vmatprep.subr.bf16.mxu0 0
    %1428 = vmatpush2.bf16.xpose.msra.mxu0 0
    %1429 = vmatprep.subr.bf16.mxu0 0
    %1430 = vmatpush2.bf16.xpose.msra.mxu0 0
    %1431 = vmatprep.subr.bf16.mxu0 0
    %1432 = vmatpush2.bf16.xpose.msra.mxu0 0
    %1433 = vmatprep.subr.bf16.mxu0 0
    %1434 = vmatpush2.bf16.xpose.msra.mxu0 0
    %1435 = vmatprep.subr.bf16.mxu0 0
    %1436 = vmatpush2.bf16.xpose.msra.mxu0 0
    %1437 = vmatprep.mubr.bf16.mxu0 0
    %1438 = vmatmul.mubr.bf16.gmra.mxu0 %v1400
    %v1439 = vpop.f32.mrf.mxu0
    %v1440 = vadd.f32 0.0, %v1439
    %v1441 = vpop.f32.mrf.mxu0
    %v1442 = vpop.f32.mrf.mxu0
    %v1443 = vpop.f32.mrf.mxu0
    %1444 = vdwg.mxu0
    %v1445 = vsel %vm492, %v1440, -inf
    %1446 = vmax.xlane.f32.xlu0 %v1445
    %v1447 = vpop.xlane.xlu0 %1446
    %v1448 = vsub.f32 %v1440, %v1447
    %v1449 = vmul.f32 %v1448, 1.442695
    %v1450 = vpow.pop %v1449
    %v1451 = vsel %vm492, %v1450, 0.0
    %1452 = vadd.xlane.f32.xlu0 %v1451
    %v1453 = vpop.xlane.xlu0 %1452
    %v1454 = vrcp.pop %v1453
    %v1455 = vmul.f32 %v1450, %v1454
    %v1456 = vpack.c.bf16 %v1455, %v1455
    %1457 = vrot.lane.b32.xlu0 %v1089, 96
    %v1458 = vpop.permute.xlu0 %1457
    %v1460 = vsel %vm492, %v1456, 0
    %v1463 = vsel %vm508, %v1458, 0
    %1465 = vmatprep.subr.bf16.mxu0 0
    %1466 = vmatpush1.bf16.msra.mxu0 0
    %1467 = vmatprep.subr.bf16.mxu0 0
    %1468 = vmatpush1.bf16.msra.mxu0 0
    %1469 = vmatprep.subr.bf16.mxu0 0
    %1470 = vmatpush1.bf16.msra.mxu0 0
    %1471 = vmatprep.subr.bf16.mxu0 0
    %1472 = vmatpush1.bf16.msra.mxu0 0
    %1473 = vmatprep.subr.bf16.mxu0 0
    %1474 = vmatpush1.bf16.msra.mxu0 0
    %1475 = vmatprep.subr.bf16.mxu0 0
    %1476 = vmatpush1.bf16.msra.mxu0 0
    %1477 = vmatprep.subr.bf16.mxu0 0
    %1478 = vmatpush1.bf16.msra.mxu0 0
    %1479 = vmatprep.subr.bf16.mxu0 0
    %1480 = vmatpush1.bf16.msra.mxu0 %v1463
    %1481 = vmatprep.subr.bf16.mxu0 0
    %1482 = vmatpush2.bf16.msra.mxu0 0
    %1483 = vmatprep.subr.bf16.mxu0 0
    %1484 = vmatpush2.bf16.msra.mxu0 0
    %1485 = vmatprep.subr.bf16.mxu0 0
    %1486 = vmatpush2.bf16.msra.mxu0 0
    %1487 = vmatprep.subr.bf16.mxu0 0
    %1488 = vmatpush2.bf16.msra.mxu0 0
    %1489 = vmatprep.subr.bf16.mxu0 0
    %1490 = vmatpush2.bf16.msra.mxu0 0
    %1491 = vmatprep.subr.bf16.mxu0 0
    %1492 = vmatpush2.bf16.msra.mxu0 0
    %1493 = vmatprep.subr.bf16.mxu0 0
    %1494 = vmatpush2.bf16.msra.mxu0 0
    %1495 = vmatprep.subr.bf16.mxu0 0
    %1496 = vmatpush2.bf16.msra.mxu0 0
    %1497 = vmatprep.mubr.bf16.mxu0 0
    %1498 = vmatmul.mubr.bf16.gmra.mxu0 %v1460
    %v1499 = vpop.f32.mrf.mxu0
    %v1500 = vadd.f32 0.0, %v1499
    %v1501 = vpop.f32.mrf.mxu0
    %v1502 = vpop.f32.mrf.mxu0
    %v1503 = vpop.f32.mrf.mxu0
    %1504 = vdwg.mxu0
    %v1505 = vpack.c.bf16 %v1500, %v1500
    %v1507 = vsel %vm445, %v1505, 0
    %1509 = vmatprep.subr.bf16.mxu0 0
    %1510 = vmatpush1.bf16.msra.mxu0 0
    %1511 = vmatprep.subr.bf16.mxu0 0
    %1512 = vmatpush1.bf16.msra.mxu0 0
    %1513 = vmatprep.subr.bf16.mxu0 0
    %1514 = vmatpush1.bf16.msra.mxu0 0
    %1515 = vmatprep.subr.bf16.mxu0 0
    %1516 = vmatpush1.bf16.msra.mxu0 0
    %1517 = vmatprep.subr.bf16.mxu0 0
    %1518 = vmatpush1.bf16.msra.mxu0 0
    %1519 = vmatprep.subr.bf16.mxu0 0
    %1520 = vmatpush1.bf16.msra.mxu0 0
    %1521 = vmatprep.subr.bf16.mxu0 0
    %1522 = vmatpush1.bf16.msra.mxu0 0
    %1523 = vmatprep.subr.bf16.mxu0 0
    %1524 = vmatpush1.bf16.msra.mxu0 %v880
    %1525 = vmatprep.subr.bf16.mxu0 0
    %1526 = vmatpush2.bf16.msra.mxu0 0
    %1527 = vmatprep.subr.bf16.mxu0 0
    %1528 = vmatpush2.bf16.msra.mxu0 0
    %1529 = vmatprep.subr.bf16.mxu0 0
    %1530 = vmatpush2.bf16.msra.mxu0 0
    %1531 = vmatprep.subr.bf16.mxu0 0
    %1532 = vmatpush2.bf16.msra.mxu0 0
    %1533 = vmatprep.subr.bf16.mxu0 0
    %1534 = vmatpush2.bf16.msra.mxu0 0
    %1535 = vmatprep.subr.bf16.mxu0 0
    %1536 = vmatpush2.bf16.msra.mxu0 0
    %1537 = vmatprep.subr.bf16.mxu0 0
    %1538 = vmatpush2.bf16.msra.mxu0 0
    %1539 = vmatprep.subr.bf16.mxu0 0
    %1540 = vmatpush2.bf16.msra.mxu0 0
    %1541 = vmatprep.mubr.bf16.mxu0 0
    %1542 = vmatmul.mubr.bf16.gmra.mxu0 %v1507
    %v1543 = vpop.f32.mrf.mxu0
    %v1544 = vadd.f32 0.0, %v1543
    %v1545 = vpop.f32.mrf.mxu0
    %v1546 = vpop.f32.mrf.mxu0
    %v1547 = vpop.f32.mrf.mxu0
    %1548 = vdwg.mxu0
    %v1549 = vadd.f32 %v1390, %v1544
    %1550 = vrot.lane.b32.xlu0 %v1087, 80
    %v1551 = vpop.permute.xlu0 %1550
    %1552 = vrot.lane.b32.xlu0 %v1088, 80
    %v1553 = vpop.permute.xlu0 %1552
    %v1555 = vsel %vm445, %v1551, 0
    %v1558 = vsel %vm445, %v1553, 0
    %1560 = vmatprep.subr.bf16.mxu0 0
    %1561 = vmatpush1.bf16.xpose.msra.mxu0 0
    %1562 = vmatprep.subr.bf16.mxu0 0
    %1563 = vmatpush1.bf16.xpose.msra.mxu0 0
    %1564 = vmatprep.subr.bf16.mxu0 0
    %1565 = vmatpush1.bf16.xpose.msra.mxu0 0
    %1566 = vmatprep.subr.bf16.mxu0 0
    %1567 = vmatpush1.bf16.xpose.msra.mxu0 0
    %1568 = vmatprep.subr.bf16.mxu0 0
    %1569 = vmatpush1.bf16.xpose.msra.mxu0 0
    %1570 = vmatprep.subr.bf16.mxu0 0
    %1571 = vmatpush1.bf16.xpose.msra.mxu0 0
    %1572 = vmatprep.subr.bf16.mxu0 0
    %1573 = vmatpush1.bf16.xpose.msra.mxu0 0
    %1574 = vmatprep.subr.bf16.mxu0 0
    %1575 = vmatpush1.bf16.xpose.msra.mxu0 %v1558
    %1576 = vmatprep.subr.bf16.mxu0 0
    %1577 = vmatpush2.bf16.xpose.msra.mxu0 0
    %1578 = vmatprep.subr.bf16.mxu0 0
    %1579 = vmatpush2.bf16.xpose.msra.mxu0 0
    %1580 = vmatprep.subr.bf16.mxu0 0
    %1581 = vmatpush2.bf16.xpose.msra.mxu0 0
    %1582 = vmatprep.subr.bf16.mxu0 0
    %1583 = vmatpush2.bf16.xpose.msra.mxu0 0
    %1584 = vmatprep.subr.bf16.mxu0 0
    %1585 = vmatpush2.bf16.xpose.msra.mxu0 0
    %1586 = vmatprep.subr.bf16.mxu0 0
    %1587 = vmatpush2.bf16.xpose.msra.mxu0 0
    %1588 = vmatprep.subr.bf16.mxu0 0
    %1589 = vmatpush2.bf16.xpose.msra.mxu0 0
    %1590 = vmatprep.subr.bf16.mxu0 0
    %1591 = vmatpush2.bf16.xpose.msra.mxu0 0
    %1592 = vmatprep.mubr.bf16.mxu0 0
    %1593 = vmatmul.mubr.bf16.gmra.mxu0 %v1555
    %v1594 = vpop.f32.mrf.mxu0
    %v1595 = vadd.f32 0.0, %v1594
    %v1596 = vpop.f32.mrf.mxu0
    %v1597 = vpop.f32.mrf.mxu0
    %v1598 = vpop.f32.mrf.mxu0
    %1599 = vdwg.mxu0
    %v1600 = vsel %vm492, %v1595, -inf
    %1601 = vmax.xlane.f32.xlu0 %v1600
    %v1602 = vpop.xlane.xlu0 %1601
    %v1603 = vsub.f32 %v1595, %v1602
    %v1604 = vmul.f32 %v1603, 1.442695
    %v1605 = vpow.pop %v1604
    %v1606 = vsel %vm492, %v1605, 0.0
    %1607 = vadd.xlane.f32.xlu0 %v1606
    %v1608 = vpop.xlane.xlu0 %1607
    %v1609 = vrcp.pop %v1608
    %v1610 = vmul.f32 %v1605, %v1609
    %v1611 = vpack.c.bf16 %v1610, %v1610
    %1612 = vrot.lane.b32.xlu0 %v1089, 80
    %v1613 = vpop.permute.xlu0 %1612
    %v1615 = vsel %vm492, %v1611, 0
    %v1618 = vsel %vm508, %v1613, 0
    %1620 = vmatprep.subr.bf16.mxu0 0
    %1621 = vmatpush1.bf16.msra.mxu0 0
    %1622 = vmatprep.subr.bf16.mxu0 0
    %1623 = vmatpush1.bf16.msra.mxu0 0
    %1624 = vmatprep.subr.bf16.mxu0 0
    %1625 = vmatpush1.bf16.msra.mxu0 0
    %1626 = vmatprep.subr.bf16.mxu0 0
    %1627 = vmatpush1.bf16.msra.mxu0 0
    %1628 = vmatprep.subr.bf16.mxu0 0
    %1629 = vmatpush1.bf16.msra.mxu0 0
    %1630 = vmatprep.subr.bf16.mxu0 0
    %1631 = vmatpush1.bf16.msra.mxu0 0
    %1632 = vmatprep.subr.bf16.mxu0 0
    %1633 = vmatpush1.bf16.msra.mxu0 0
    %1634 = vmatprep.subr.bf16.mxu0 0
    %1635 = vmatpush1.bf16.msra.mxu0 %v1618
    %1636 = vmatprep.subr.bf16.mxu0 0
    %1637 = vmatpush2.bf16.msra.mxu0 0
    %1638 = vmatprep.subr.bf16.mxu0 0
    %1639 = vmatpush2.bf16.msra.mxu0 0
    %1640 = vmatprep.subr.bf16.mxu0 0
    %1641 = vmatpush2.bf16.msra.mxu0 0
    %1642 = vmatprep.subr.bf16.mxu0 0
    %1643 = vmatpush2.bf16.msra.mxu0 0
    %1644 = vmatprep.subr.bf16.mxu0 0
    %1645 = vmatpush2.bf16.msra.mxu0 0
    %1646 = vmatprep.subr.bf16.mxu0 0
    %1647 = vmatpush2.bf16.msra.mxu0 0
    %1648 = vmatprep.subr.bf16.mxu0 0
    %1649 = vmatpush2.bf16.msra.mxu0 0
    %1650 = vmatprep.subr.bf16.mxu0 0
    %1651 = vmatpush2.bf16.msra.mxu0 0
    %1652 = vmatprep.mubr.bf16.mxu0 0
    %1653 = vmatmul.mubr.bf16.gmra.mxu0 %v1615
    %v1654 = vpop.f32.mrf.mxu0
    %v1655 = vadd.f32 0.0, %v1654
    %v1656 = vpop.f32.mrf.mxu0
    %v1657 = vpop.f32.mrf.mxu0
    %v1658 = vpop.f32.mrf.mxu0
    %1659 = vdwg.mxu0
    %v1660 = vpack.c.bf16 %v1655, %v1655
    %v1662 = vsel %vm445, %v1660, 0
    %1664 = vmatprep.subr.bf16.mxu0 0
    %1665 = vmatpush1.bf16.msra.mxu0 0
    %1666 = vmatprep.subr.bf16.mxu0 0
    %1667 = vmatpush1.bf16.msra.mxu0 0
    %1668 = vmatprep.subr.bf16.mxu0 0
    %1669 = vmatpush1.bf16.msra.mxu0 0
    %1670 = vmatprep.subr.bf16.mxu0 0
    %1671 = vmatpush1.bf16.msra.mxu0 0
    %1672 = vmatprep.subr.bf16.mxu0 0
    %1673 = vmatpush1.bf16.msra.mxu0 0
    %1674 = vmatprep.subr.bf16.mxu0 0
    %1675 = vmatpush1.bf16.msra.mxu0 0
    %1676 = vmatprep.subr.bf16.mxu0 0
    %1677 = vmatpush1.bf16.msra.mxu0 0
    %1678 = vmatprep.subr.bf16.mxu0 0
    %1679 = vmatpush1.bf16.msra.mxu0 %v1041
    %1680 = vmatprep.subr.bf16.mxu0 0
    %1681 = vmatpush2.bf16.msra.mxu0 0
    %1682 = vmatprep.subr.bf16.mxu0 0
    %1683 = vmatpush2.bf16.msra.mxu0 0
    %1684 = vmatprep.subr.bf16.mxu0 0
    %1685 = vmatpush2.bf16.msra.mxu0 0
    %1686 = vmatprep.subr.bf16.mxu0 0
    %1687 = vmatpush2.bf16.msra.mxu0 0
    %1688 = vmatprep.subr.bf16.mxu0 0
    %1689 = vmatpush2.bf16.msra.mxu0 0
    %1690 = vmatprep.subr.bf16.mxu0 0
    %1691 = vmatpush2.bf16.msra.mxu0 0
    %1692 = vmatprep.subr.bf16.mxu0 0
    %1693 = vmatpush2.bf16.msra.mxu0 0
    %1694 = vmatprep.subr.bf16.mxu0 0
    %1695 = vmatpush2.bf16.msra.mxu0 0
    %1696 = vmatprep.mubr.bf16.mxu0 0
    %1697 = vmatmul.mubr.bf16.gmra.mxu0 %v1662
    %v1698 = vpop.f32.mrf.mxu0
    %v1699 = vadd.f32 0.0, %v1698
    %v1700 = vpop.f32.mrf.mxu0
    %v1701 = vpop.f32.mrf.mxu0
    %v1702 = vpop.f32.mrf.mxu0
    %1703 = vdwg.mxu0
    %v1704 = vadd.f32 %v1549, %v1699
    %v1705 = vlaneseq
    %v1706 = vshrl.u32 %v1705, 7
    %v1707 = vsub.s32 0, %v1706
    %v1708 = vrot.slane %v75, %v1707
    %v1709 = vadd.f32 %v1086, %v1708
    %v1710 = vadd.f32 %v1704, %v1708
    %v1711 = vadd.f32 %v131, %v1709
    %v1712 = vadd.f32 %v132, %v1710
    %v1713 = vsel %vm232, %v1711, 0.0
    %1714 = vadd.xlane.f32.xlu0 %v1713
    %v1715 = vpop.xlane.xlu0 %1714
    %v1716 = vsel %vm232, %v1712, 0.0
    %1717 = vadd.xlane.f32.xlu0 %v1716
    %v1718 = vpop.xlane.xlu0 %1717
    %v1719 = vmul.f32 %v1711, %v1711
    %v1720 = vmul.f32 %v1712, %v1712
    %v1721 = vsel %vm232, %v1719, 0.0
    %1722 = vadd.xlane.f32.xlu0 %v1721
    %v1723 = vpop.xlane.xlu0 %1722
    %v1724 = vsel %vm232, %v1720, 0.0
    %1725 = vadd.xlane.f32.xlu0 %v1724
    %v1726 = vpop.xlane.xlu0 %1725
    %v1727 = vmul.f32 %v1715, 0.016666668
    %v1728 = vmul.f32 %v1718, 0.016666668
    %v1729 = vmul.f32 %v1723, 0.016666668
    %v1730 = vmul.f32 %v1726, 0.016666668
    %v1731 = vmul.f32 %v1727, %v1727
    %v1732 = vmul.f32 %v1728, %v1728
    %v1733 = vsub.f32 %v1729, %v1731
    %v1734 = vsub.f32 %v1730, %v1732
    %v1735 = vsub.f32 %v1711, %v1727
    %v1736 = vsub.f32 %v1712, %v1728
    %v1737 = vadd.f32 %v1733, 1e-05
    %v1738 = vadd.f32 %v1734, 1e-05
    %v1739 = vrsqrt.pop %v1737
    %v1740 = vrsqrt.pop %v1738
    %v1741 = vmul.f32 %v1735, %v1739
    %v1742 = vmul.f32 %v1736, %v1740
    %v1743 = vlaneseq
    %v1744 = vshrl.u32 %v1743, 7
    %v1745 = vsub.s32 2, %v1744
    %v1746 = vrot.slane %v75, %v1745
    %v1747 = vmul.f32 %v1741, %v1746
    %v1748 = vmul.f32 %v1742, %v1746
    %v1749 = vlaneseq
    %v1750 = vshrl.u32 %v1749, 7
    %v1751 = vsub.s32 3, %v1750
    %v1752 = vrot.slane %v75, %v1751
    %v1753 = vadd.f32 %v1747, %v1752
    %v1754 = vadd.f32 %v1748, %v1752
    %v1755 = vpack.c.bf16 %v1754, %v1753
    %s1756 = scalar_lea.vmem [#allocation7], 96
    %v1757 = vld [vmem:[%s1756] sm:$0xf]
    %v1758 = vld [vmem:[%s1756 + $0x4] sm:$0xf]
    %v1759 = vld [vmem:[%s1756 + $0x8] sm:$0xf]
    %v1760 = vld [vmem:[%s1756 + $0xc] sm:$0xf]
    %v1761 = vld [vmem:[%s1756 + $0x10] sm:$0xf]
    %v1762 = vld [vmem:[%s1756 + $0x14] sm:$0xf]
    %v1763 = vld [vmem:[%s1756 + $0x18] sm:$0xf]
    %v1764 = vld [vmem:[%s1756 + $0x1c] sm:$0xf]
    %v1765 = vlaneseq
    %v1766 = vshrl.u32 %v1765, 7
    %v1767 = vsub.s32 3, %v1766
    %v1768 = vrot.slane %v74, %v1767
    %v1777 = vunpack.c.l.b16 %v1757
    %v1778 = vunpack.c.l.b16 %v1758
    %v1779 = vunpack.c.l.b16 %v1759
    %v1780 = vunpack.c.l.b16 %v1760
    %v1781 = vunpack.c.l.b16 %v1761
    %v1782 = vunpack.c.l.b16 %v1762
    %v1783 = vunpack.c.l.b16 %v1763
    %v1784 = vunpack.c.l.b16 %v1764
    %v1785 = vpack.c.b16 %v1778, %v1777
    %v1786 = vpack.c.b16 %v1780, %v1779
    %v1787 = vpack.c.b16 %v1782, %v1781
    %v1788 = vpack.c.b16 %v1784, %v1783
    %v1794 = vsel %vm232, %v1755, 0
    %1796 = vmatprep.subr.bf16.mxu0 0
    %1797 = vmatpush1.bf16.msra.mxu0 0
    %1798 = vmatprep.subr.bf16.mxu0 0
    %1799 = vmatpush1.bf16.msra.mxu0 0
    %1800 = vmatprep.subr.bf16.mxu0 0
    %1801 = vmatpush1.bf16.msra.mxu0 0
    %1802 = vmatprep.subr.bf16.mxu0 0
    %1803 = vmatpush1.bf16.msra.mxu0 0
    %1804 = vmatprep.subr.bf16.mxu0 0
    %1805 = vmatpush1.bf16.msra.mxu0 %v1788
    %1806 = vmatprep.subr.bf16.mxu0 0
    %1807 = vmatpush1.bf16.msra.mxu0 %v1787
    %1808 = vmatprep.subr.bf16.mxu0 0
    %1809 = vmatpush1.bf16.msra.mxu0 %v1786
    %1810 = vmatprep.subr.bf16.mxu0 0
    %1811 = vmatpush1.bf16.msra.mxu0 %v1785
    %1812 = vmatprep.subr.bf16.mxu0 0
    %1813 = vmatpush2.bf16.msra.mxu0 0
    %1814 = vmatprep.subr.bf16.mxu0 0
    %1815 = vmatpush2.bf16.msra.mxu0 0
    %1816 = vmatprep.subr.bf16.mxu0 0
    %1817 = vmatpush2.bf16.msra.mxu0 0
    %1818 = vmatprep.subr.bf16.mxu0 0
    %1819 = vmatpush2.bf16.msra.mxu0 0
    %1820 = vmatprep.subr.bf16.mxu0 0
    %1821 = vmatpush2.bf16.msra.mxu0 0
    %1822 = vmatprep.subr.bf16.mxu0 0
    %1823 = vmatpush2.bf16.msra.mxu0 0
    %1824 = vmatprep.subr.bf16.mxu0 0
    %1825 = vmatpush2.bf16.msra.mxu0 0
    %1826 = vmatprep.subr.bf16.mxu0 0
    %1827 = vmatpush2.bf16.msra.mxu0 0
    %1828 = vmatprep.mubr.bf16.mxu0 0
    %1829 = vmatmul.mubr.bf16.gmra.mxu0 %v1794
    %v1830 = vpop.f32.mrf.mxu0
    %v1831 = vadd.f32 %v1768, %v1830
    %v1832 = vpop.f32.mrf.mxu0
    %v1833 = vpop.f32.mrf.mxu0
    %v1834 = vadd.f32 %v1768, %v1833
    %v1835 = vpop.f32.mrf.mxu0
    %1836 = vdwg.mxu0
    %v1837 = vpack.c.bf16 %v193, %v192
    %v1838 = vpack.c.bf16 %v194, %v194
    %s1839 = scalar_lea.vmem [#allocation7], 128
    %v1840 = vld [vmem:[%s1839] sm:$0xf]
    %v1841 = vld [vmem:[%s1839 + $0x4] sm:$0xf]
    %v1842 = vld [vmem:[%s1839 + $0x8] sm:$0xf]
    %v1843 = vld [vmem:[%s1839 + $0xc] sm:$0xf]
    %v1844 = vld [vmem:[%s1839 + $0x10] sm:$0xf]
    %v1845 = vld [vmem:[%s1839 + $0x14] sm:$0xf]
    %v1846 = vld [vmem:[%s1839 + $0x18] sm:$0xf]
    %v1847 = vld [vmem:[%s1839 + $0x1c] sm:$0xf]
    %v1848 = vlaneseq
    %v1849 = vshrl.u32 %v1848, 7
    %v1850 = vsub.s32 4, %v1849
    %v1851 = vrot.slane %v74, %v1850
    %v1860 = vunpack.c.l.b16 %v1840
    %v1861 = vunpack.c.l.b16 %v1841
    %v1862 = vunpack.c.l.b16 %v1842
    %v1863 = vunpack.c.l.b16 %v1843
    %v1864 = vunpack.c.l.b16 %v1844
    %v1865 = vunpack.c.l.b16 %v1845
    %v1866 = vunpack.c.l.b16 %v1846
    %v1867 = vunpack.c.l.b16 %v1847
    %v1868 = vpack.c.b16 %v1861, %v1860
    %v1869 = vpack.c.b16 %v1863, %v1862
    %v1870 = vpack.c.b16 %v1865, %v1864
    %v1871 = vpack.c.b16 %v1867, %v1866
    %v1877 = vsel %vm232, %v1837, 0
    %v1880 = vsel %vm232, %v1838, 0
    %1882 = vmatprep.subr.bf16.mxu0 0
    %1883 = vmatpush1.bf16.msra.mxu0 0
    %1884 = vmatprep.subr.bf16.mxu0 0
    %1885 = vmatpush1.bf16.msra.mxu0 0
    %1886 = vmatprep.subr.bf16.mxu0 0
    %1887 = vmatpush1.bf16.msra.mxu0 0
    %1888 = vmatprep.subr.bf16.mxu0 0
    %1889 = vmatpush1.bf16.msra.mxu0 0
    %1890 = vmatprep.subr.bf16.mxu0 0
    %1891 = vmatpush1.bf16.msra.mxu0 %v1871
    %1892 = vmatprep.subr.bf16.mxu0 0
    %1893 = vmatpush1.bf16.msra.mxu0 %v1870
    %1894 = vmatprep.subr.bf16.mxu0 0
    %1895 = vmatpush1.bf16.msra.mxu0 %v1869
    %1896 = vmatprep.subr.bf16.mxu0 0
    %1897 = vmatpush1.bf16.msra.mxu0 %v1868
    %1898 = vmatprep.subr.bf16.mxu0 0
    %1899 = vmatpush2.bf16.msra.mxu0 0
    %1900 = vmatprep.subr.bf16.mxu0 0
    %1901 = vmatpush2.bf16.msra.mxu0 0
    %1902 = vmatprep.subr.bf16.mxu0 0
    %1903 = vmatpush2.bf16.msra.mxu0 0
    %1904 = vmatprep.subr.bf16.mxu0 0
    %1905 = vmatpush2.bf16.msra.mxu0 0
    %1906 = vmatprep.subr.bf16.mxu0 0
    %1907 = vmatpush2.bf16.msra.mxu0 0
    %1908 = vmatprep.subr.bf16.mxu0 0
    %1909 = vmatpush2.bf16.msra.mxu0 0
    %1910 = vmatprep.subr.bf16.mxu0 0
    %1911 = vmatpush2.bf16.msra.mxu0 0
    %1912 = vmatprep.subr.bf16.mxu0 0
    %1913 = vmatpush2.bf16.msra.mxu0 0
    %1914 = vmatprep.mubr.bf16.mxu0 0
    %1915 = vmatmul.mubr.bf16.gmra.mxu0 %v1877
    %v1916 = vpop.f32.mrf.mxu0
    %v1917 = vadd.f32 %v1851, %v1916
    %v1918 = vpop.f32.mrf.mxu0
    %v1919 = vpop.f32.mrf.mxu0
    %v1920 = vadd.f32 %v1851, %v1919
    %v1921 = vpop.f32.mrf.mxu0
    %1922 = vmatprep.mubr.bf16.mxu0 0
    %1923 = vmatmul.mubr.bf16.gmra.mxu0 %v1880
    %v1924 = vpop.f32.mrf.mxu0
    %v1925 = vadd.f32 %v1851, %v1924
    %v1926 = vpop.f32.mrf.mxu0
    %v1927 = vpop.f32.mrf.mxu0
    %v1928 = vpop.f32.mrf.mxu0
    %1929 = vdwg.mxu0
    %s1930 = scalar_lea.vmem [#allocation7], 160
    %v1931 = vld [vmem:[%s1930] sm:$0xf]
    %v1932 = vld [vmem:[%s1930 + $0x4] sm:$0xf]
    %v1933 = vld [vmem:[%s1930 + $0x8] sm:$0xf]
    %v1934 = vld [vmem:[%s1930 + $0xc] sm:$0xf]
    %v1935 = vld [vmem:[%s1930 + $0x10] sm:$0xf]
    %v1936 = vld [vmem:[%s1930 + $0x14] sm:$0xf]
    %v1937 = vld [vmem:[%s1930 + $0x18] sm:$0xf]
    %v1938 = vld [vmem:[%s1930 + $0x1c] sm:$0xf]
    %v1939 = vlaneseq
    %v1940 = vshrl.u32 %v1939, 7
    %v1941 = vsub.s32 5, %v1940
    %v1942 = vrot.slane %v74, %v1941
    %v1951 = vunpack.c.l.b16 %v1931
    %v1952 = vunpack.c.l.b16 %v1932
    %v1953 = vunpack.c.l.b16 %v1933
    %v1954 = vunpack.c.l.b16 %v1934
    %v1955 = vunpack.c.l.b16 %v1935
    %v1956 = vunpack.c.l.b16 %v1936
    %v1957 = vunpack.c.l.b16 %v1937
    %v1958 = vunpack.c.l.b16 %v1938
    %v1959 = vpack.c.b16 %v1952, %v1951
    %v1960 = vpack.c.b16 %v1954, %v1953
    %v1961 = vpack.c.b16 %v1956, %v1955
    %v1962 = vpack.c.b16 %v1958, %v1957
    %1967 = vmatprep.subr.bf16.mxu0 0
    %1968 = vmatpush1.bf16.msra.mxu0 0
    %1969 = vmatprep.subr.bf16.mxu0 0
    %1970 = vmatpush1.bf16.msra.mxu0 0
    %1971 = vmatprep.subr.bf16.mxu0 0
    %1972 = vmatpush1.bf16.msra.mxu0 0
    %1973 = vmatprep.subr.bf16.mxu0 0
    %1974 = vmatpush1.bf16.msra.mxu0 0
    %1975 = vmatprep.subr.bf16.mxu0 0
    %1976 = vmatpush1.bf16.msra.mxu0 %v1962
    %1977 = vmatprep.subr.bf16.mxu0 0
    %1978 = vmatpush1.bf16.msra.mxu0 %v1961
    %1979 = vmatprep.subr.bf16.mxu0 0
    %1980 = vmatpush1.bf16.msra.mxu0 %v1960
    %1981 = vmatprep.subr.bf16.mxu0 0
    %1982 = vmatpush1.bf16.msra.mxu0 %v1959
    %1983 = vmatprep.subr.bf16.mxu0 0
    %1984 = vmatpush2.bf16.msra.mxu0 0
    %1985 = vmatprep.subr.bf16.mxu0 0
    %1986 = vmatpush2.bf16.msra.mxu0 0
    %1987 = vmatprep.subr.bf16.mxu0 0
    %1988 = vmatpush2.bf16.msra.mxu0 0
    %1989 = vmatprep.subr.bf16.mxu0 0
    %1990 = vmatpush2.bf16.msra.mxu0 0
    %1991 = vmatprep.subr.bf16.mxu0 0
    %1992 = vmatpush2.bf16.msra.mxu0 0
    %1993 = vmatprep.subr.bf16.mxu0 0
    %1994 = vmatpush2.bf16.msra.mxu0 0
    %1995 = vmatprep.subr.bf16.mxu0 0
    %1996 = vmatpush2.bf16.msra.mxu0 0
    %1997 = vmatprep.subr.bf16.mxu0 0
    %1998 = vmatpush2.bf16.msra.mxu0 0
    %1999 = vmatprep.mubr.bf16.mxu0 0
    %2000 = vmatmul.mubr.bf16.gmra.mxu0 %v1877
    %v2001 = vpop.f32.mrf.mxu0
    %v2002 = vadd.f32 %v1942, %v2001
    %v2003 = vpop.f32.mrf.mxu0
    %v2004 = vpop.f32.mrf.mxu0
    %v2005 = vadd.f32 %v1942, %v2004
    %v2006 = vpop.f32.mrf.mxu0
    %2007 = vmatprep.mubr.bf16.mxu0 0
    %2008 = vmatmul.mubr.bf16.gmra.mxu0 %v1880
    %v2009 = vpop.f32.mrf.mxu0
    %v2010 = vadd.f32 %v1942, %v2009
    %v2011 = vpop.f32.mrf.mxu0
    %v2012 = vpop.f32.mrf.mxu0
    %v2013 = vpop.f32.mrf.mxu0
    %2014 = vdwg.mxu0
    %s2015 = scalar_lea.vmem [#allocation7], 288
    %v2016 = vld [vmem:[%s2015] sm:$0xf]
    %v2017 = vld [vmem:[%s2015 + $0x4] sm:$0xf]
    %v2018 = vld [vmem:[%s2015 + $0x8] sm:$0xf]
    %v2019 = vld [vmem:[%s2015 + $0xc] sm:$0xf]
    %v2020 = vld [vmem:[%s2015 + $0x10] sm:$0xf]
    %v2021 = vld [vmem:[%s2015 + $0x14] sm:$0xf]
    %v2022 = vld [vmem:[%s2015 + $0x18] sm:$0xf]
    %v2023 = vld [vmem:[%s2015 + $0x1c] sm:$0xf]
    %v2024 = vpack.c.bf16 %v1831, %v1831
    %v2025 = vpack.c.bf16 %v1920, %v1917
    %v2026 = vpack.c.bf16 %v2005, %v2002
    %v2028 = vsel %vm445, %v2024, 0
    %v2031 = vsel %vm445, %v2025, 0
    %2033 = vmatprep.subr.bf16.mxu0 0
    %2034 = vmatpush1.bf16.xpose.msra.mxu0 0
    %2035 = vmatprep.subr.bf16.mxu0 0
    %2036 = vmatpush1.bf16.xpose.msra.mxu0 0
    %2037 = vmatprep.subr.bf16.mxu0 0
    %2038 = vmatpush1.bf16.xpose.msra.mxu0 0
    %2039 = vmatprep.subr.bf16.mxu0 0
    %2040 = vmatpush1.bf16.xpose.msra.mxu0 0
    %2041 = vmatprep.subr.bf16.mxu0 0
    %2042 = vmatpush1.bf16.xpose.msra.mxu0 0
    %2043 = vmatprep.subr.bf16.mxu0 0
    %2044 = vmatpush1.bf16.xpose.msra.mxu0 0
    %2045 = vmatprep.subr.bf16.mxu0 0
    %2046 = vmatpush1.bf16.xpose.msra.mxu0 0
    %2047 = vmatprep.subr.bf16.mxu0 0
    %2048 = vmatpush1.bf16.xpose.msra.mxu0 %v2031
    %2049 = vmatprep.subr.bf16.mxu0 0
    %2050 = vmatpush2.bf16.xpose.msra.mxu0 0
    %2051 = vmatprep.subr.bf16.mxu0 0
    %2052 = vmatpush2.bf16.xpose.msra.mxu0 0
    %2053 = vmatprep.subr.bf16.mxu0 0
    %2054 = vmatpush2.bf16.xpose.msra.mxu0 0
    %2055 = vmatprep.subr.bf16.mxu0 0
    %2056 = vmatpush2.bf16.xpose.msra.mxu0 0
    %2057 = vmatprep.subr.bf16.mxu0 0
    %2058 = vmatpush2.bf16.xpose.msra.mxu0 0
    %2059 = vmatprep.subr.bf16.mxu0 0
    %2060 = vmatpush2.bf16.xpose.msra.mxu0 0
    %2061 = vmatprep.subr.bf16.mxu0 0
    %2062 = vmatpush2.bf16.xpose.msra.mxu0 0
    %2063 = vmatprep.subr.bf16.mxu0 0
    %2064 = vmatpush2.bf16.xpose.msra.mxu0 0
    %2065 = vmatprep.mubr.bf16.mxu0 0
    %2066 = vmatmul.mubr.bf16.gmra.mxu0 %v2028
    %v2067 = vpop.f32.mrf.mxu0
    %v2068 = vadd.f32 0.0, %v2067
    %v2069 = vpop.f32.mrf.mxu0
    %v2070 = vpop.f32.mrf.mxu0
    %v2071 = vpop.f32.mrf.mxu0
    %2072 = vdwg.mxu0
    %vm2073 = vcmask 80896
    %v2074 = vsel %vm2073, %v2068, -inf
    %2075 = vmax.xlane.f32.xlu0 %v2074
    %v2076 = vpop.xlane.xlu0 %2075
    %v2077 = vsub.f32 %v2068, %v2076
    %v2078 = vmul.f32 %v2077, 1.442695
    %v2079 = vpow.pop %v2078
    %v2080 = vsel %vm2073, %v2079, 0.0
    %2081 = vadd.xlane.f32.xlu0 %v2080
    %v2082 = vpop.xlane.xlu0 %2081
    %v2083 = vrcp.pop %v2082
    %v2084 = vmul.f32 %v2079, %v2083
    %v2085 = vpack.c.bf16 %v2084, %v2084
    %v2087 = vsel %vm2073, %v2085, 0
    %vm2089 = vcmask 1044480
    %v2091 = vsel %vm2089, %v2026, 0
    %2093 = vmatprep.subr.bf16.mxu0 0
    %2094 = vmatpush1.bf16.msra.mxu0 0
    %2095 = vmatprep.subr.bf16.mxu0 0
    %2096 = vmatpush1.bf16.msra.mxu0 0
    %2097 = vmatprep.subr.bf16.mxu0 0
    %2098 = vmatpush1.bf16.msra.mxu0 0
    %2099 = vmatprep.subr.bf16.mxu0 0
    %2100 = vmatpush1.bf16.msra.mxu0 0
    %2101 = vmatprep.subr.bf16.mxu0 0
    %2102 = vmatpush1.bf16.msra.mxu0 0
    %2103 = vmatprep.subr.bf16.mxu0 0
    %2104 = vmatpush1.bf16.msra.mxu0 0
    %2105 = vmatprep.subr.bf16.mxu0 0
    %2106 = vmatpush1.bf16.msra.mxu0 0
    %2107 = vmatprep.subr.bf16.mxu0 0
    %2108 = vmatpush1.bf16.msra.mxu0 %v2091
    %2109 = vmatprep.subr.bf16.mxu0 0
    %2110 = vmatpush2.bf16.msra.mxu0 0
    %2111 = vmatprep.subr.bf16.mxu0 0
    %2112 = vmatpush2.bf16.msra.mxu0 0
    %2113 = vmatprep.subr.bf16.mxu0 0
    %2114 = vmatpush2.bf16.msra.mxu0 0
    %2115 = vmatprep.subr.bf16.mxu0 0
    %2116 = vmatpush2.bf16.msra.mxu0 0
    %2117 = vmatprep.subr.bf16.mxu0 0
    %2118 = vmatpush2.bf16.msra.mxu0 0
    %2119 = vmatprep.subr.bf16.mxu0 0
    %2120 = vmatpush2.bf16.msra.mxu0 0
    %2121 = vmatprep.subr.bf16.mxu0 0
    %2122 = vmatpush2.bf16.msra.mxu0 0
    %2123 = vmatprep.subr.bf16.mxu0 0
    %2124 = vmatpush2.bf16.msra.mxu0 0
    %2125 = vmatprep.mubr.bf16.mxu0 0
    %2126 = vmatmul.mubr.bf16.gmra.mxu0 %v2087
    %v2127 = vpop.f32.mrf.mxu0
    %v2128 = vadd.f32 0.0, %v2127
    %v2129 = vpop.f32.mrf.mxu0
    %v2130 = vpop.f32.mrf.mxu0
    %v2131 = vpop.f32.mrf.mxu0
    %2132 = vdwg.mxu0
    %v2133 = vpack.c.bf16 %v2128, %v2128
    %2135 = vrot.lane.b32.xlu0 %v2024, 112
    %v2136 = vpop.permute.xlu0 %2135
    %2138 = vrot.lane.b32.xlu0 %v2025, 112
    %v2139 = vpop.permute.xlu0 %2138
    %v2141 = vsel %vm445, %v2136, 0
    %v2144 = vsel %vm445, %v2139, 0
    %2146 = vmatprep.subr.bf16.mxu0 0
    %2147 = vmatpush1.bf16.xpose.msra.mxu0 0
    %2148 = vmatprep.subr.bf16.mxu0 0
    %2149 = vmatpush1.bf16.xpose.msra.mxu0 0
    %2150 = vmatprep.subr.bf16.mxu0 0
    %2151 = vmatpush1.bf16.xpose.msra.mxu0 0
    %2152 = vmatprep.subr.bf16.mxu0 0
    %2153 = vmatpush1.bf16.xpose.msra.mxu0 0
    %2154 = vmatprep.subr.bf16.mxu0 0
    %2155 = vmatpush1.bf16.xpose.msra.mxu0 0
    %2156 = vmatprep.subr.bf16.mxu0 0
    %2157 = vmatpush1.bf16.xpose.msra.mxu0 0
    %2158 = vmatprep.subr.bf16.mxu0 0
    %2159 = vmatpush1.bf16.xpose.msra.mxu0 0
    %2160 = vmatprep.subr.bf16.mxu0 0
    %2161 = vmatpush1.bf16.xpose.msra.mxu0 %v2144
    %2162 = vmatprep.subr.bf16.mxu0 0
    %2163 = vmatpush2.bf16.xpose.msra.mxu0 0
    %2164 = vmatprep.subr.bf16.mxu0 0
    %2165 = vmatpush2.bf16.xpose.msra.mxu0 0
    %2166 = vmatprep.subr.bf16.mxu0 0
    %2167 = vmatpush2.bf16.xpose.msra.mxu0 0
    %2168 = vmatprep.subr.bf16.mxu0 0
    %2169 = vmatpush2.bf16.xpose.msra.mxu0 0
    %2170 = vmatprep.subr.bf16.mxu0 0
    %2171 = vmatpush2.bf16.xpose.msra.mxu0 0
    %2172 = vmatprep.subr.bf16.mxu0 0
    %2173 = vmatpush2.bf16.xpose.msra.mxu0 0
    %2174 = vmatprep.subr.bf16.mxu0 0
    %2175 = vmatpush2.bf16.xpose.msra.mxu0 0
    %2176 = vmatprep.subr.bf16.mxu0 0
    %2177 = vmatpush2.bf16.xpose.msra.mxu0 0
    %2178 = vmatprep.mubr.bf16.mxu0 0
    %2179 = vmatmul.mubr.bf16.gmra.mxu0 %v2141
    %v2180 = vpop.f32.mrf.mxu0
    %v2181 = vadd.f32 0.0, %v2180
    %v2182 = vpop.f32.mrf.mxu0
    %v2183 = vpop.f32.mrf.mxu0
    %v2184 = vpop.f32.mrf.mxu0
    %2185 = vdwg.mxu0
    %v2186 = vsel %vm2073, %v2181, -inf
    %2187 = vmax.xlane.f32.xlu0 %v2186
    %v2188 = vpop.xlane.xlu0 %2187
    %v2189 = vsub.f32 %v2181, %v2188
    %v2190 = vmul.f32 %v2189, 1.442695
    %v2191 = vpow.pop %v2190
    %v2192 = vsel %vm2073, %v2191, 0.0
    %2193 = vadd.xlane.f32.xlu0 %v2192
    %v2194 = vpop.xlane.xlu0 %2193
    %v2195 = vrcp.pop %v2194
    %v2196 = vmul.f32 %v2191, %v2195
    %v2197 = vpack.c.bf16 %v2196, %v2196
    %2199 = vrot.lane.b32.xlu0 %v2026, 112
    %v2200 = vpop.permute.xlu0 %2199
    %v2202 = vsel %vm2073, %v2197, 0
    %v2205 = vsel %vm2089, %v2200, 0
    %2207 = vmatprep.subr.bf16.mxu0 0
    %2208 = vmatpush1.bf16.msra.mxu0 0
    %2209 = vmatprep.subr.bf16.mxu0 0
    %2210 = vmatpush1.bf16.msra.mxu0 0
    %2211 = vmatprep.subr.bf16.mxu0 0
    %2212 = vmatpush1.bf16.msra.mxu0 0
    %2213 = vmatprep.subr.bf16.mxu0 0
    %2214 = vmatpush1.bf16.msra.mxu0 0
    %2215 = vmatprep.subr.bf16.mxu0 0
    %2216 = vmatpush1.bf16.msra.mxu0 0
    %2217 = vmatprep.subr.bf16.mxu0 0
    %2218 = vmatpush1.bf16.msra.mxu0 0
    %2219 = vmatprep.subr.bf16.mxu0 0
    %2220 = vmatpush1.bf16.msra.mxu0 0
    %2221 = vmatprep.subr.bf16.mxu0 0
    %2222 = vmatpush1.bf16.msra.mxu0 %v2205
    %2223 = vmatprep.subr.bf16.mxu0 0
    %2224 = vmatpush2.bf16.msra.mxu0 0
    %2225 = vmatprep.subr.bf16.mxu0 0
    %2226 = vmatpush2.bf16.msra.mxu0 0
    %2227 = vmatprep.subr.bf16.mxu0 0
    %2228 = vmatpush2.bf16.msra.mxu0 0
    %2229 = vmatprep.subr.bf16.mxu0 0
    %2230 = vmatpush2.bf16.msra.mxu0 0
    %2231 = vmatprep.subr.bf16.mxu0 0
    %2232 = vmatpush2.bf16.msra.mxu0 0
    %2233 = vmatprep.subr.bf16.mxu0 0
    %2234 = vmatpush2.bf16.msra.mxu0 0
    %2235 = vmatprep.subr.bf16.mxu0 0
    %2236 = vmatpush2.bf16.msra.mxu0 0
    %2237 = vmatprep.subr.bf16.mxu0 0
    %2238 = vmatpush2.bf16.msra.mxu0 0
    %2239 = vmatprep.mubr.bf16.mxu0 0
    %2240 = vmatmul.mubr.bf16.gmra.mxu0 %v2202
    %v2241 = vpop.f32.mrf.mxu0
    %v2242 = vadd.f32 0.0, %v2241
    %v2243 = vpop.f32.mrf.mxu0
    %v2244 = vpop.f32.mrf.mxu0
    %v2245 = vpop.f32.mrf.mxu0
    %2246 = vdwg.mxu0
    %v2247 = vpack.c.bf16 %v2242, %v2242
    %v2250 = vunpack.c.l.b16 %v2018
    %v2251 = vunpack.c.l.b16 %v2019
    %v2252 = vpack.c.b16 %v2251, %v2250
    %v2255 = vsel %vm445, %v2247, 0
    %2257 = vmatprep.subr.bf16.mxu0 0
    %2258 = vmatpush1.bf16.msra.mxu0 0
    %2259 = vmatprep.subr.bf16.mxu0 0
    %2260 = vmatpush1.bf16.msra.mxu0 0
    %2261 = vmatprep.subr.bf16.mxu0 0
    %2262 = vmatpush1.bf16.msra.mxu0 0
    %2263 = vmatprep.subr.bf16.mxu0 0
    %2264 = vmatpush1.bf16.msra.mxu0 0
    %2265 = vmatprep.subr.bf16.mxu0 0
    %2266 = vmatpush1.bf16.msra.mxu0 0
    %2267 = vmatprep.subr.bf16.mxu0 0
    %2268 = vmatpush1.bf16.msra.mxu0 0
    %2269 = vmatprep.subr.bf16.mxu0 0
    %2270 = vmatpush1.bf16.msra.mxu0 0
    %2271 = vmatprep.subr.bf16.mxu0 0
    %2272 = vmatpush1.bf16.msra.mxu0 %v2252
    %2273 = vmatprep.subr.bf16.mxu0 0
    %2274 = vmatpush2.bf16.msra.mxu0 0
    %2275 = vmatprep.subr.bf16.mxu0 0
    %2276 = vmatpush2.bf16.msra.mxu0 0
    %2277 = vmatprep.subr.bf16.mxu0 0
    %2278 = vmatpush2.bf16.msra.mxu0 0
    %2279 = vmatprep.subr.bf16.mxu0 0
    %2280 = vmatpush2.bf16.msra.mxu0 0
    %2281 = vmatprep.subr.bf16.mxu0 0
    %2282 = vmatpush2.bf16.msra.mxu0 0
    %2283 = vmatprep.subr.bf16.mxu0 0
    %2284 = vmatpush2.bf16.msra.mxu0 0
    %2285 = vmatprep.subr.bf16.mxu0 0
    %2286 = vmatpush2.bf16.msra.mxu0 0
    %2287 = vmatprep.subr.bf16.mxu0 0
    %2288 = vmatpush2.bf16.msra.mxu0 0
    %2289 = vmatprep.mubr.bf16.mxu0 0
    %2290 = vmatmul.mubr.bf16.gmra.mxu0 %v2255
    %v2291 = vpop.f32.mrf.mxu0
    %v2292 = vadd.f32 0.0, %v2291
    %v2293 = vpop.f32.mrf.mxu0
    %v2294 = vpop.f32.mrf.mxu0
    %v2295 = vpop.f32.mrf.mxu0
    %2296 = vdwg.mxu0
    %v2299 = vunpack.c.l.b16 %v2016
    %v2300 = vunpack.c.l.b16 %v2017
    %v2301 = vpack.c.b16 %v2300, %v2299
    %v2304 = vsel %vm445, %v2133, 0
    %2306 = vmatprep.subr.bf16.mxu0 0
    %2307 = vmatpush1.bf16.msra.mxu0 0
    %2308 = vmatprep.subr.bf16.mxu0 0
    %2309 = vmatpush1.bf16.msra.mxu0 0
    %2310 = vmatprep.subr.bf16.mxu0 0
    %2311 = vmatpush1.bf16.msra.mxu0 0
    %2312 = vmatprep.subr.bf16.mxu0 0
    %2313 = vmatpush1.bf16.msra.mxu0 0
    %2314 = vmatprep.subr.bf16.mxu0 0
    %2315 = vmatpush1.bf16.msra.mxu0 0
    %2316 = vmatprep.subr.bf16.mxu0 0
    %2317 = vmatpush1.bf16.msra.mxu0 0
    %2318 = vmatprep.subr.bf16.mxu0 0
    %2319 = vmatpush1.bf16.msra.mxu0 0
    %2320 = vmatprep.subr.bf16.mxu0 0
    %2321 = vmatpush1.bf16.msra.mxu0 %v2301
    %2322 = vmatprep.subr.bf16.mxu0 0
    %2323 = vmatpush2.bf16.msra.mxu0 0
    %2324 = vmatprep.subr.bf16.mxu0 0
    %2325 = vmatpush2.bf16.msra.mxu0 0
    %2326 = vmatprep.subr.bf16.mxu0 0
    %2327 = vmatpush2.bf16.msra.mxu0 0
    %2328 = vmatprep.subr.bf16.mxu0 0
    %2329 = vmatpush2.bf16.msra.mxu0 0
    %2330 = vmatprep.subr.bf16.mxu0 0
    %2331 = vmatpush2.bf16.msra.mxu0 0
    %2332 = vmatprep.subr.bf16.mxu0 0
    %2333 = vmatpush2.bf16.msra.mxu0 0
    %2334 = vmatprep.subr.bf16.mxu0 0
    %2335 = vmatpush2.bf16.msra.mxu0 0
    %2336 = vmatprep.subr.bf16.mxu0 0
    %2337 = vmatpush2.bf16.msra.mxu0 0
    %2338 = vmatprep.mubr.bf16.mxu0 0
    %2339 = vmatmul.mubr.bf16.gmra.mxu0 %v2304
    %v2340 = vpop.f32.mrf.mxu0
    %v2341 = vadd.f32 %v2292, %v2340
    %v2342 = vpop.f32.mrf.mxu0
    %v2343 = vpop.f32.mrf.mxu0
    %v2344 = vpop.f32.mrf.mxu0
    %2345 = vdwg.mxu0
    %2346 = vrot.lane.b32.xlu0 %v2024, 96
    %v2347 = vpop.permute.xlu0 %2346
    %2348 = vrot.lane.b32.xlu0 %v2025, 96
    %v2349 = vpop.permute.xlu0 %2348
    %v2351 = vsel %vm445, %v2347, 0
    %v2354 = vsel %vm445, %v2349, 0
    %2356 = vmatprep.subr.bf16.mxu0 0
    %2357 = vmatpush1.bf16.xpose.msra.mxu0 0
    %2358 = vmatprep.subr.bf16.mxu0 0
    %2359 = vmatpush1.bf16.xpose.msra.mxu0 0
    %2360 = vmatprep.subr.bf16.mxu0 0
    %2361 = vmatpush1.bf16.xpose.msra.mxu0 0
    %2362 = vmatprep.subr.bf16.mxu0 0
    %2363 = vmatpush1.bf16.xpose.msra.mxu0 0
    %2364 = vmatprep.subr.bf16.mxu0 0
    %2365 = vmatpush1.bf16.xpose.msra.mxu0 0
    %2366 = vmatprep.subr.bf16.mxu0 0
    %2367 = vmatpush1.bf16.xpose.msra.mxu0 0
    %2368 = vmatprep.subr.bf16.mxu0 0
    %2369 = vmatpush1.bf16.xpose.msra.mxu0 0
    %2370 = vmatprep.subr.bf16.mxu0 0
    %2371 = vmatpush1.bf16.xpose.msra.mxu0 %v2354
    %2372 = vmatprep.subr.bf16.mxu0 0
    %2373 = vmatpush2.bf16.xpose.msra.mxu0 0
    %2374 = vmatprep.subr.bf16.mxu0 0
    %2375 = vmatpush2.bf16.xpose.msra.mxu0 0
    %2376 = vmatprep.subr.bf16.mxu0 0
    %2377 = vmatpush2.bf16.xpose.msra.mxu0 0
    %2378 = vmatprep.subr.bf16.mxu0 0
    %2379 = vmatpush2.bf16.xpose.msra.mxu0 0
    %2380 = vmatprep.subr.bf16.mxu0 0
    %2381 = vmatpush2.bf16.xpose.msra.mxu0 0
    %2382 = vmatprep.subr.bf16.mxu0 0
    %2383 = vmatpush2.bf16.xpose.msra.mxu0 0
    %2384 = vmatprep.subr.bf16.mxu0 0
    %2385 = vmatpush2.bf16.xpose.msra.mxu0 0
    %2386 = vmatprep.subr.bf16.mxu0 0
    %2387 = vmatpush2.bf16.xpose.msra.mxu0 0
    %2388 = vmatprep.mubr.bf16.mxu0 0
    %2389 = vmatmul.mubr.bf16.gmra.mxu0 %v2351
    %v2390 = vpop.f32.mrf.mxu0
    %v2391 = vadd.f32 0.0, %v2390
    %v2392 = vpop.f32.mrf.mxu0
    %v2393 = vpop.f32.mrf.mxu0
    %v2394 = vpop.f32.mrf.mxu0
    %2395 = vdwg.mxu0
    %v2396 = vsel %vm2073, %v2391, -inf
    %2397 = vmax.xlane.f32.xlu0 %v2396
    %v2398 = vpop.xlane.xlu0 %2397
    %v2399 = vsub.f32 %v2391, %v2398
    %v2400 = vmul.f32 %v2399, 1.442695
    %v2401 = vpow.pop %v2400
    %v2402 = vsel %vm2073, %v2401, 0.0
    %2403 = vadd.xlane.f32.xlu0 %v2402
    %v2404 = vpop.xlane.xlu0 %2403
    %v2405 = vrcp.pop %v2404
    %v2406 = vmul.f32 %v2401, %v2405
    %v2407 = vpack.c.bf16 %v2406, %v2406
    %2408 = vrot.lane.b32.xlu0 %v2026, 96
    %v2409 = vpop.permute.xlu0 %2408
    %v2411 = vsel %vm2073, %v2407, 0
    %v2414 = vsel %vm2089, %v2409, 0
    %2416 = vmatprep.subr.bf16.mxu0 0
    %2417 = vmatpush1.bf16.msra.mxu0 0
    %2418 = vmatprep.subr.bf16.mxu0 0
    %2419 = vmatpush1.bf16.msra.mxu0 0
    %2420 = vmatprep.subr.bf16.mxu0 0
    %2421 = vmatpush1.bf16.msra.mxu0 0
    %2422 = vmatprep.subr.bf16.mxu0 0
    %2423 = vmatpush1.bf16.msra.mxu0 0
    %2424 = vmatprep.subr.bf16.mxu0 0
    %2425 = vmatpush1.bf16.msra.mxu0 0
    %2426 = vmatprep.subr.bf16.mxu0 0
    %2427 = vmatpush1.bf16.msra.mxu0 0
    %2428 = vmatprep.subr.bf16.mxu0 0
    %2429 = vmatpush1.bf16.msra.mxu0 0
    %2430 = vmatprep.subr.bf16.mxu0 0
    %2431 = vmatpush1.bf16.msra.mxu0 %v2414
    %2432 = vmatprep.subr.bf16.mxu0 0
    %2433 = vmatpush2.bf16.msra.mxu0 0
    %2434 = vmatprep.subr.bf16.mxu0 0
    %2435 = vmatpush2.bf16.msra.mxu0 0
    %2436 = vmatprep.subr.bf16.mxu0 0
    %2437 = vmatpush2.bf16.msra.mxu0 0
    %2438 = vmatprep.subr.bf16.mxu0 0
    %2439 = vmatpush2.bf16.msra.mxu0 0
    %2440 = vmatprep.subr.bf16.mxu0 0
    %2441 = vmatpush2.bf16.msra.mxu0 0
    %2442 = vmatprep.subr.bf16.mxu0 0
    %2443 = vmatpush2.bf16.msra.mxu0 0
    %2444 = vmatprep.subr.bf16.mxu0 0
    %2445 = vmatpush2.bf16.msra.mxu0 0
    %2446 = vmatprep.subr.bf16.mxu0 0
    %2447 = vmatpush2.bf16.msra.mxu0 0
    %2448 = vmatprep.mubr.bf16.mxu0 0
    %2449 = vmatmul.mubr.bf16.gmra.mxu0 %v2411
    %v2450 = vpop.f32.mrf.mxu0
    %v2451 = vadd.f32 0.0, %v2450
    %v2452 = vpop.f32.mrf.mxu0
    %v2453 = vpop.f32.mrf.mxu0
    %v2454 = vpop.f32.mrf.mxu0
    %2455 = vdwg.mxu0
    %v2456 = vpack.c.bf16 %v2451, %v2451
    %v2459 = vunpack.c.l.b16 %v2020
    %v2460 = vunpack.c.l.b16 %v2021
    %v2461 = vpack.c.b16 %v2460, %v2459
    %v2464 = vsel %vm445, %v2456, 0
    %2466 = vmatprep.subr.bf16.mxu0 0
    %2467 = vmatpush1.bf16.msra.mxu0 0
    %2468 = vmatprep.subr.bf16.mxu0 0
    %2469 = vmatpush1.bf16.msra.mxu0 0
    %2470 = vmatprep.subr.bf16.mxu0 0
    %2471 = vmatpush1.bf16.msra.mxu0 0
    %2472 = vmatprep.subr.bf16.mxu0 0
    %2473 = vmatpush1.bf16.msra.mxu0 0
    %2474 = vmatprep.subr.bf16.mxu0 0
    %2475 = vmatpush1.bf16.msra.mxu0 0
    %2476 = vmatprep.subr.bf16.mxu0 0
    %2477 = vmatpush1.bf16.msra.mxu0 0
    %2478 = vmatprep.subr.bf16.mxu0 0
    %2479 = vmatpush1.bf16.msra.mxu0 0
    %2480 = vmatprep.subr.bf16.mxu0 0
    %2481 = vmatpush1.bf16.msra.mxu0 %v2461
    %2482 = vmatprep.subr.bf16.mxu0 0
    %2483 = vmatpush2.bf16.msra.mxu0 0
    %2484 = vmatprep.subr.bf16.mxu0 0
    %2485 = vmatpush2.bf16.msra.mxu0 0
    %2486 = vmatprep.subr.bf16.mxu0 0
    %2487 = vmatpush2.bf16.msra.mxu0 0
    %2488 = vmatprep.subr.bf16.mxu0 0
    %2489 = vmatpush2.bf16.msra.mxu0 0
    %2490 = vmatprep.subr.bf16.mxu0 0
    %2491 = vmatpush2.bf16.msra.mxu0 0
    %2492 = vmatprep.subr.bf16.mxu0 0
    %2493 = vmatpush2.bf16.msra.mxu0 0
    %2494 = vmatprep.subr.bf16.mxu0 0
    %2495 = vmatpush2.bf16.msra.mxu0 0
    %2496 = vmatprep.subr.bf16.mxu0 0
    %2497 = vmatpush2.bf16.msra.mxu0 0
    %2498 = vmatprep.mubr.bf16.mxu0 0
    %2499 = vmatmul.mubr.bf16.gmra.mxu0 %v2464
    %v2500 = vpop.f32.mrf.mxu0
    %v2501 = vadd.f32 0.0, %v2500
    %v2502 = vpop.f32.mrf.mxu0
    %v2503 = vpop.f32.mrf.mxu0
    %v2504 = vpop.f32.mrf.mxu0
    %2505 = vdwg.mxu0
    %v2506 = vadd.f32 %v2341, %v2501
    %2507 = vrot.lane.b32.xlu0 %v2024, 80
    %v2508 = vpop.permute.xlu0 %2507
    %2509 = vrot.lane.b32.xlu0 %v2025, 80
    %v2510 = vpop.permute.xlu0 %2509
    %v2512 = vsel %vm445, %v2508, 0
    %v2515 = vsel %vm445, %v2510, 0
    %2517 = vmatprep.subr.bf16.mxu0 0
    %2518 = vmatpush1.bf16.xpose.msra.mxu0 0
    %2519 = vmatprep.subr.bf16.mxu0 0
    %2520 = vmatpush1.bf16.xpose.msra.mxu0 0
    %2521 = vmatprep.subr.bf16.mxu0 0
    %2522 = vmatpush1.bf16.xpose.msra.mxu0 0
    %2523 = vmatprep.subr.bf16.mxu0 0
    %2524 = vmatpush1.bf16.xpose.msra.mxu0 0
    %2525 = vmatprep.subr.bf16.mxu0 0
    %2526 = vmatpush1.bf16.xpose.msra.mxu0 0
    %2527 = vmatprep.subr.bf16.mxu0 0
    %2528 = vmatpush1.bf16.xpose.msra.mxu0 0
    %2529 = vmatprep.subr.bf16.mxu0 0
    %2530 = vmatpush1.bf16.xpose.msra.mxu0 0
    %2531 = vmatprep.subr.bf16.mxu0 0
    %2532 = vmatpush1.bf16.xpose.msra.mxu0 %v2515
    %2533 = vmatprep.subr.bf16.mxu0 0
    %2534 = vmatpush2.bf16.xpose.msra.mxu0 0
    %2535 = vmatprep.subr.bf16.mxu0 0
    %2536 = vmatpush2.bf16.xpose.msra.mxu0 0
    %2537 = vmatprep.subr.bf16.mxu0 0
    %2538 = vmatpush2.bf16.xpose.msra.mxu0 0
    %2539 = vmatprep.subr.bf16.mxu0 0
    %2540 = vmatpush2.bf16.xpose.msra.mxu0 0
    %2541 = vmatprep.subr.bf16.mxu0 0
    %2542 = vmatpush2.bf16.xpose.msra.mxu0 0
    %2543 = vmatprep.subr.bf16.mxu0 0
    %2544 = vmatpush2.bf16.xpose.msra.mxu0 0
    %2545 = vmatprep.subr.bf16.mxu0 0
    %2546 = vmatpush2.bf16.xpose.msra.mxu0 0
    %2547 = vmatprep.subr.bf16.mxu0 0
    %2548 = vmatpush2.bf16.xpose.msra.mxu0 0
    %2549 = vmatprep.mubr.bf16.mxu0 0
    %2550 = vmatmul.mubr.bf16.gmra.mxu0 %v2512
    %v2551 = vpop.f32.mrf.mxu0
    %v2552 = vadd.f32 0.0, %v2551
    %v2553 = vpop.f32.mrf.mxu0
    %v2554 = vpop.f32.mrf.mxu0
    %v2555 = vpop.f32.mrf.mxu0
    %2556 = vdwg.mxu0
    %v2557 = vsel %vm2073, %v2552, -inf
    %2558 = vmax.xlane.f32.xlu0 %v2557
    %v2559 = vpop.xlane.xlu0 %2558
    %v2560 = vsub.f32 %v2552, %v2559
    %v2561 = vmul.f32 %v2560, 1.442695
    %v2562 = vpow.pop %v2561
    %v2563 = vsel %vm2073, %v2562, 0.0
    %2564 = vadd.xlane.f32.xlu0 %v2563
    %v2565 = vpop.xlane.xlu0 %2564
    %v2566 = vrcp.pop %v2565
    %v2567 = vmul.f32 %v2562, %v2566
    %v2568 = vpack.c.bf16 %v2567, %v2567
    %2569 = vrot.lane.b32.xlu0 %v2026, 80
    %v2570 = vpop.permute.xlu0 %2569
    %v2572 = vsel %vm2073, %v2568, 0
    %v2575 = vsel %vm2089, %v2570, 0
    %2577 = vmatprep.subr.bf16.mxu0 0
    %2578 = vmatpush1.bf16.msra.mxu0 0
    %2579 = vmatprep.subr.bf16.mxu0 0
    %2580 = vmatpush1.bf16.msra.mxu0 0
    %2581 = vmatprep.subr.bf16.mxu0 0
    %2582 = vmatpush1.bf16.msra.mxu0 0
    %2583 = vmatprep.subr.bf16.mxu0 0
    %2584 = vmatpush1.bf16.msra.mxu0 0
    %2585 = vmatprep.subr.bf16.mxu0 0
    %2586 = vmatpush1.bf16.msra.mxu0 0
    %2587 = vmatprep.subr.bf16.mxu0 0
    %2588 = vmatpush1.bf16.msra.mxu0 0
    %2589 = vmatprep.subr.bf16.mxu0 0
    %2590 = vmatpush1.bf16.msra.mxu0 0
    %2591 = vmatprep.subr.bf16.mxu0 0
    %2592 = vmatpush1.bf16.msra.mxu0 %v2575
    %2593 = vmatprep.subr.bf16.mxu0 0
    %2594 = vmatpush2.bf16.msra.mxu0 0
    %2595 = vmatprep.subr.bf16.mxu0 0
    %2596 = vmatpush2.bf16.msra.mxu0 0
    %2597 = vmatprep.subr.bf16.mxu0 0
    %2598 = vmatpush2.bf16.msra.mxu0 0
    %2599 = vmatprep.subr.bf16.mxu0 0
    %2600 = vmatpush2.bf16.msra.mxu0 0
    %2601 = vmatprep.subr.bf16.mxu0 0
    %2602 = vmatpush2.bf16.msra.mxu0 0
    %2603 = vmatprep.subr.bf16.mxu0 0
    %2604 = vmatpush2.bf16.msra.mxu0 0
    %2605 = vmatprep.subr.bf16.mxu0 0
    %2606 = vmatpush2.bf16.msra.mxu0 0
    %2607 = vmatprep.subr.bf16.mxu0 0
    %2608 = vmatpush2.bf16.msra.mxu0 0
    %2609 = vmatprep.mubr.bf16.mxu0 0
    %2610 = vmatmul.mubr.bf16.gmra.mxu0 %v2572
    %v2611 = vpop.f32.mrf.mxu0
    %v2612 = vadd.f32 0.0, %v2611
    %v2613 = vpop.f32.mrf.mxu0
    %v2614 = vpop.f32.mrf.mxu0
    %v2615 = vpop.f32.mrf.mxu0
    %2616 = vdwg.mxu0
    %v2617 = vpack.c.bf16 %v2612, %v2612
    %v2620 = vunpack.c.l.b16 %v2022
    %v2621 = vunpack.c.l.b16 %v2023
    %v2622 = vpack.c.b16 %v2621, %v2620
    %v2625 = vsel %vm445, %v2617, 0
    %2627 = vmatprep.subr.bf16.mxu0 0
    %2628 = vmatpush1.bf16.msra.mxu0 0
    %2629 = vmatprep.subr.bf16.mxu0 0
    %2630 = vmatpush1.bf16.msra.mxu0 0
    %2631 = vmatprep.subr.bf16.mxu0 0
    %2632 = vmatpush1.bf16.msra.mxu0 0
    %2633 = vmatprep.subr.bf16.mxu0 0
    %2634 = vmatpush1.bf16.msra.mxu0 0
    %2635 = vmatprep.subr.bf16.mxu0 0
    %2636 = vmatpush1.bf16.msra.mxu0 0
    %2637 = vmatprep.subr.bf16.mxu0 0
    %2638 = vmatpush1.bf16.msra.mxu0 0
    %2639 = vmatprep.subr.bf16.mxu0 0
    %2640 = vmatpush1.bf16.msra.mxu0 0
    %2641 = vmatprep.subr.bf16.mxu0 0
    %2642 = vmatpush1.bf16.msra.mxu0 %v2622
    %2643 = vmatprep.subr.bf16.mxu0 0
    %2644 = vmatpush2.bf16.msra.mxu0 0
    %2645 = vmatprep.subr.bf16.mxu0 0
    %2646 = vmatpush2.bf16.msra.mxu0 0
    %2647 = vmatprep.subr.bf16.mxu0 0
    %2648 = vmatpush2.bf16.msra.mxu0 0
    %2649 = vmatprep.subr.bf16.mxu0 0
    %2650 = vmatpush2.bf16.msra.mxu0 0
    %2651 = vmatprep.subr.bf16.mxu0 0
    %2652 = vmatpush2.bf16.msra.mxu0 0
    %2653 = vmatprep.subr.bf16.mxu0 0
    %2654 = vmatpush2.bf16.msra.mxu0 0
    %2655 = vmatprep.subr.bf16.mxu0 0
    %2656 = vmatpush2.bf16.msra.mxu0 0
    %2657 = vmatprep.subr.bf16.mxu0 0
    %2658 = vmatpush2.bf16.msra.mxu0 0
    %2659 = vmatprep.mubr.bf16.mxu0 0
    %2660 = vmatmul.mubr.bf16.gmra.mxu0 %v2625
    %v2661 = vpop.f32.mrf.mxu0
    %v2662 = vadd.f32 0.0, %v2661
    %v2663 = vpop.f32.mrf.mxu0
    %v2664 = vpop.f32.mrf.mxu0
    %v2665 = vpop.f32.mrf.mxu0
    %2666 = vdwg.mxu0
    %v2667 = vadd.f32 %v2506, %v2662
    %v2668 = vpack.c.bf16 %v1834, %v1834
    %v2669 = vpack.c.bf16 %v1925, %v1920
    %v2670 = vpack.c.bf16 %v2010, %v2005
    %v2672 = vrot.slane %v2669, 1
    %v2674 = vsel %vm445, %v2668, 0
    %v2677 = vsel %vm445, %v2672, 0
    %2679 = vmatprep.subr.bf16.mxu0 0
    %2680 = vmatpush1.bf16.xpose.msra.mxu0 0
    %2681 = vmatprep.subr.bf16.mxu0 0
    %2682 = vmatpush1.bf16.xpose.msra.mxu0 0
    %2683 = vmatprep.subr.bf16.mxu0 0
    %2684 = vmatpush1.bf16.xpose.msra.mxu0 0
    %2685 = vmatprep.subr.bf16.mxu0 0
    %2686 = vmatpush1.bf16.xpose.msra.mxu0 0
    %2687 = vmatprep.subr.bf16.mxu0 0
    %2688 = vmatpush1.bf16.xpose.msra.mxu0 0
    %2689 = vmatprep.subr.bf16.mxu0 0
    %2690 = vmatpush1.bf16.xpose.msra.mxu0 0
    %2691 = vmatprep.subr.bf16.mxu0 0
    %2692 = vmatpush1.bf16.xpose.msra.mxu0 0
    %2693 = vmatprep.subr.bf16.mxu0 0
    %2694 = vmatpush1.bf16.xpose.msra.mxu0 %v2677
    %2695 = vmatprep.subr.bf16.mxu0 0
    %2696 = vmatpush2.bf16.xpose.msra.mxu0 0
    %2697 = vmatprep.subr.bf16.mxu0 0
    %2698 = vmatpush2.bf16.xpose.msra.mxu0 0
    %2699 = vmatprep.subr.bf16.mxu0 0
    %2700 = vmatpush2.bf16.xpose.msra.mxu0 0
    %2701 = vmatprep.subr.bf16.mxu0 0
    %2702 = vmatpush2.bf16.xpose.msra.mxu0 0
    %2703 = vmatprep.subr.bf16.mxu0 0
    %2704 = vmatpush2.bf16.xpose.msra.mxu0 0
    %2705 = vmatprep.subr.bf16.mxu0 0
    %2706 = vmatpush2.bf16.xpose.msra.mxu0 0
    %2707 = vmatprep.subr.bf16.mxu0 0
    %2708 = vmatpush2.bf16.xpose.msra.mxu0 0
    %2709 = vmatprep.subr.bf16.mxu0 0
    %2710 = vmatpush2.bf16.xpose.msra.mxu0 0
    %2711 = vmatprep.mubr.bf16.mxu0 0
    %2712 = vmatmul.mubr.bf16.gmra.mxu0 %v2674
    %v2713 = vpop.f32.mrf.mxu0
    %v2714 = vadd.f32 0.0, %v2713
    %v2715 = vpop.f32.mrf.mxu0
    %v2716 = vpop.f32.mrf.mxu0
    %v2717 = vpop.f32.mrf.mxu0
    %2718 = vdwg.mxu0
    %v2719 = vsel %vm2073, %v2714, -inf
    %2720 = vmax.xlane.f32.xlu0 %v2719
    %v2721 = vpop.xlane.xlu0 %2720
    %v2722 = vsub.f32 %v2714, %v2721
    %v2723 = vmul.f32 %v2722, 1.442695
    %v2724 = vpow.pop %v2723
    %v2725 = vsel %vm2073, %v2724, 0.0
    %2726 = vadd.xlane.f32.xlu0 %v2725
    %v2727 = vpop.xlane.xlu0 %2726
    %v2728 = vrcp.pop %v2727
    %v2729 = vmul.f32 %v2724, %v2728
    %v2730 = vpack.c.bf16 %v2729, %v2729
    %v2732 = vrot.slane %v2670, 1
    %v2734 = vsel %vm2073, %v2730, 0
    %v2737 = vsel %vm2089, %v2732, 0
    %2739 = vmatprep.subr.bf16.mxu0 0
    %2740 = vmatpush1.bf16.msra.mxu0 0
    %2741 = vmatprep.subr.bf16.mxu0 0
    %2742 = vmatpush1.bf16.msra.mxu0 0
    %2743 = vmatprep.subr.bf16.mxu0 0
    %2744 = vmatpush1.bf16.msra.mxu0 0
    %2745 = vmatprep.subr.bf16.mxu0 0
    %2746 = vmatpush1.bf16.msra.mxu0 0
    %2747 = vmatprep.subr.bf16.mxu0 0
    %2748 = vmatpush1.bf16.msra.mxu0 0
    %2749 = vmatprep.subr.bf16.mxu0 0
    %2750 = vmatpush1.bf16.msra.mxu0 0
    %2751 = vmatprep.subr.bf16.mxu0 0
    %2752 = vmatpush1.bf16.msra.mxu0 0
    %2753 = vmatprep.subr.bf16.mxu0 0
    %2754 = vmatpush1.bf16.msra.mxu0 %v2737
    %2755 = vmatprep.subr.bf16.mxu0 0
    %2756 = vmatpush2.bf16.msra.mxu0 0
    %2757 = vmatprep.subr.bf16.mxu0 0
    %2758 = vmatpush2.bf16.msra.mxu0 0
    %2759 = vmatprep.subr.bf16.mxu0 0
    %2760 = vmatpush2.bf16.msra.mxu0 0
    %2761 = vmatprep.subr.bf16.mxu0 0
    %2762 = vmatpush2.bf16.msra.mxu0 0
    %2763 = vmatprep.subr.bf16.mxu0 0
    %2764 = vmatpush2.bf16.msra.mxu0 0
    %2765 = vmatprep.subr.bf16.mxu0 0
    %2766 = vmatpush2.bf16.msra.mxu0 0
    %2767 = vmatprep.subr.bf16.mxu0 0
    %2768 = vmatpush2.bf16.msra.mxu0 0
    %2769 = vmatprep.subr.bf16.mxu0 0
    %2770 = vmatpush2.bf16.msra.mxu0 0
    %2771 = vmatprep.mubr.bf16.mxu0 0
    %2772 = vmatmul.mubr.bf16.gmra.mxu0 %v2734
    %v2773 = vpop.f32.mrf.mxu0
    %v2774 = vadd.f32 0.0, %v2773
    %v2775 = vpop.f32.mrf.mxu0
    %v2776 = vpop.f32.mrf.mxu0
    %v2777 = vpop.f32.mrf.mxu0
    %2778 = vdwg.mxu0
    %v2779 = vpack.c.bf16 %v2774, %v2774
    %2781 = vrot.lane.b32.xlu0 %v2668, 112
    %v2782 = vpop.permute.xlu0 %2781
    %2783 = vrot.lane.b32.xlu0 %v2672, 112
    %v2784 = vpop.permute.xlu0 %2783
    %v2786 = vsel %vm445, %v2782, 0
    %v2789 = vsel %vm445, %v2784, 0
    %2791 = vmatprep.subr.bf16.mxu0 0
    %2792 = vmatpush1.bf16.xpose.msra.mxu0 0
    %2793 = vmatprep.subr.bf16.mxu0 0
    %2794 = vmatpush1.bf16.xpose.msra.mxu0 0
    %2795 = vmatprep.subr.bf16.mxu0 0
    %2796 = vmatpush1.bf16.xpose.msra.mxu0 0
    %2797 = vmatprep.subr.bf16.mxu0 0
    %2798 = vmatpush1.bf16.xpose.msra.mxu0 0
    %2799 = vmatprep.subr.bf16.mxu0 0
    %2800 = vmatpush1.bf16.xpose.msra.mxu0 0
    %2801 = vmatprep.subr.bf16.mxu0 0
    %2802 = vmatpush1.bf16.xpose.msra.mxu0 0
    %2803 = vmatprep.subr.bf16.mxu0 0
    %2804 = vmatpush1.bf16.xpose.msra.mxu0 0
    %2805 = vmatprep.subr.bf16.mxu0 0
    %2806 = vmatpush1.bf16.xpose.msra.mxu0 %v2789
    %2807 = vmatprep.subr.bf16.mxu0 0
    %2808 = vmatpush2.bf16.xpose.msra.mxu0 0
    %2809 = vmatprep.subr.bf16.mxu0 0
    %2810 = vmatpush2.bf16.xpose.msra.mxu0 0
    %2811 = vmatprep.subr.bf16.mxu0 0
    %2812 = vmatpush2.bf16.xpose.msra.mxu0 0
    %2813 = vmatprep.subr.bf16.mxu0 0
    %2814 = vmatpush2.bf16.xpose.msra.mxu0 0
    %2815 = vmatprep.subr.bf16.mxu0 0
    %2816 = vmatpush2.bf16.xpose.msra.mxu0 0
    %2817 = vmatprep.subr.bf16.mxu0 0
    %2818 = vmatpush2.bf16.xpose.msra.mxu0 0
    %2819 = vmatprep.subr.bf16.mxu0 0
    %2820 = vmatpush2.bf16.xpose.msra.mxu0 0
    %2821 = vmatprep.subr.bf16.mxu0 0
    %2822 = vmatpush2.bf16.xpose.msra.mxu0 0
    %2823 = vmatprep.mubr.bf16.mxu0 0
    %2824 = vmatmul.mubr.bf16.gmra.mxu0 %v2786
    %v2825 = vpop.f32.mrf.mxu0
    %v2826 = vadd.f32 0.0, %v2825
    %v2827 = vpop.f32.mrf.mxu0
    %v2828 = vpop.f32.mrf.mxu0
    %v2829 = vpop.f32.mrf.mxu0
    %2830 = vdwg.mxu0
    %v2831 = vsel %vm2073, %v2826, -inf
    %2832 = vmax.xlane.f32.xlu0 %v2831
    %v2833 = vpop.xlane.xlu0 %2832
    %v2834 = vsub.f32 %v2826, %v2833
    %v2835 = vmul.f32 %v2834, 1.442695
    %v2836 = vpow.pop %v2835
    %v2837 = vsel %vm2073, %v2836, 0.0
    %2838 = vadd.xlane.f32.xlu0 %v2837
    %v2839 = vpop.xlane.xlu0 %2838
    %v2840 = vrcp.pop %v2839
    %v2841 = vmul.f32 %v2836, %v2840
    %v2842 = vpack.c.bf16 %v2841, %v2841
    %2843 = vrot.lane.b32.xlu0 %v2732, 112
    %v2844 = vpop.permute.xlu0 %2843
    %v2846 = vsel %vm2073, %v2842, 0
    %v2849 = vsel %vm2089, %v2844, 0
    %2851 = vmatprep.subr.bf16.mxu0 0
    %2852 = vmatpush1.bf16.msra.mxu0 0
    %2853 = vmatprep.subr.bf16.mxu0 0
    %2854 = vmatpush1.bf16.msra.mxu0 0
    %2855 = vmatprep.subr.bf16.mxu0 0
    %2856 = vmatpush1.bf16.msra.mxu0 0
    %2857 = vmatprep.subr.bf16.mxu0 0
    %2858 = vmatpush1.bf16.msra.mxu0 0
    %2859 = vmatprep.subr.bf16.mxu0 0
    %2860 = vmatpush1.bf16.msra.mxu0 0
    %2861 = vmatprep.subr.bf16.mxu0 0
    %2862 = vmatpush1.bf16.msra.mxu0 0
    %2863 = vmatprep.subr.bf16.mxu0 0
    %2864 = vmatpush1.bf16.msra.mxu0 0
    %2865 = vmatprep.subr.bf16.mxu0 0
    %2866 = vmatpush1.bf16.msra.mxu0 %v2849
    %2867 = vmatprep.subr.bf16.mxu0 0
    %2868 = vmatpush2.bf16.msra.mxu0 0
    %2869 = vmatprep.subr.bf16.mxu0 0
    %2870 = vmatpush2.bf16.msra.mxu0 0
    %2871 = vmatprep.subr.bf16.mxu0 0
    %2872 = vmatpush2.bf16.msra.mxu0 0
    %2873 = vmatprep.subr.bf16.mxu0 0
    %2874 = vmatpush2.bf16.msra.mxu0 0
    %2875 = vmatprep.subr.bf16.mxu0 0
    %2876 = vmatpush2.bf16.msra.mxu0 0
    %2877 = vmatprep.subr.bf16.mxu0 0
    %2878 = vmatpush2.bf16.msra.mxu0 0
    %2879 = vmatprep.subr.bf16.mxu0 0
    %2880 = vmatpush2.bf16.msra.mxu0 0
    %2881 = vmatprep.subr.bf16.mxu0 0
    %2882 = vmatpush2.bf16.msra.mxu0 0
    %2883 = vmatprep.mubr.bf16.mxu0 0
    %2884 = vmatmul.mubr.bf16.gmra.mxu0 %v2846
    %v2885 = vpop.f32.mrf.mxu0
    %v2886 = vadd.f32 0.0, %v2885
    %v2887 = vpop.f32.mrf.mxu0
    %v2888 = vpop.f32.mrf.mxu0
    %v2889 = vpop.f32.mrf.mxu0
    %2890 = vdwg.mxu0
    %v2891 = vpack.c.bf16 %v2886, %v2886
    %v2893 = vsel %vm445, %v2891, 0
    %2895 = vmatprep.subr.bf16.mxu0 0
    %2896 = vmatpush1.bf16.msra.mxu0 0
    %2897 = vmatprep.subr.bf16.mxu0 0
    %2898 = vmatpush1.bf16.msra.mxu0 0
    %2899 = vmatprep.subr.bf16.mxu0 0
    %2900 = vmatpush1.bf16.msra.mxu0 0
    %2901 = vmatprep.subr.bf16.mxu0 0
    %2902 = vmatpush1.bf16.msra.mxu0 0
    %2903 = vmatprep.subr.bf16.mxu0 0
    %2904 = vmatpush1.bf16.msra.mxu0 0
    %2905 = vmatprep.subr.bf16.mxu0 0
    %2906 = vmatpush1.bf16.msra.mxu0 0
    %2907 = vmatprep.subr.bf16.mxu0 0
    %2908 = vmatpush1.bf16.msra.mxu0 0
    %2909 = vmatprep.subr.bf16.mxu0 0
    %2910 = vmatpush1.bf16.msra.mxu0 %v2252
    %2911 = vmatprep.subr.bf16.mxu0 0
    %2912 = vmatpush2.bf16.msra.mxu0 0
    %2913 = vmatprep.subr.bf16.mxu0 0
    %2914 = vmatpush2.bf16.msra.mxu0 0
    %2915 = vmatprep.subr.bf16.mxu0 0
    %2916 = vmatpush2.bf16.msra.mxu0 0
    %2917 = vmatprep.subr.bf16.mxu0 0
    %2918 = vmatpush2.bf16.msra.mxu0 0
    %2919 = vmatprep.subr.bf16.mxu0 0
    %2920 = vmatpush2.bf16.msra.mxu0 0
    %2921 = vmatprep.subr.bf16.mxu0 0
    %2922 = vmatpush2.bf16.msra.mxu0 0
    %2923 = vmatprep.subr.bf16.mxu0 0
    %2924 = vmatpush2.bf16.msra.mxu0 0
    %2925 = vmatprep.subr.bf16.mxu0 0
    %2926 = vmatpush2.bf16.msra.mxu0 0
    %2927 = vmatprep.mubr.bf16.mxu0 0
    %2928 = vmatmul.mubr.bf16.gmra.mxu0 %v2893
    %v2929 = vpop.f32.mrf.mxu0
    %v2930 = vadd.f32 0.0, %v2929
    %v2931 = vpop.f32.mrf.mxu0
    %v2932 = vpop.f32.mrf.mxu0
    %v2933 = vpop.f32.mrf.mxu0
    %2934 = vdwg.mxu0
    %v2936 = vsel %vm445, %v2779, 0
    %2938 = vmatprep.subr.bf16.mxu0 0
    %2939 = vmatpush1.bf16.msra.mxu0 0
    %2940 = vmatprep.subr.bf16.mxu0 0
    %2941 = vmatpush1.bf16.msra.mxu0 0
    %2942 = vmatprep.subr.bf16.mxu0 0
    %2943 = vmatpush1.bf16.msra.mxu0 0
    %2944 = vmatprep.subr.bf16.mxu0 0
    %2945 = vmatpush1.bf16.msra.mxu0 0
    %2946 = vmatprep.subr.bf16.mxu0 0
    %2947 = vmatpush1.bf16.msra.mxu0 0
    %2948 = vmatprep.subr.bf16.mxu0 0
    %2949 = vmatpush1.bf16.msra.mxu0 0
    %2950 = vmatprep.subr.bf16.mxu0 0
    %2951 = vmatpush1.bf16.msra.mxu0 0
    %2952 = vmatprep.subr.bf16.mxu0 0
    %2953 = vmatpush1.bf16.msra.mxu0 %v2301
    %2954 = vmatprep.subr.bf16.mxu0 0
    %2955 = vmatpush2.bf16.msra.mxu0 0
    %2956 = vmatprep.subr.bf16.mxu0 0
    %2957 = vmatpush2.bf16.msra.mxu0 0
    %2958 = vmatprep.subr.bf16.mxu0 0
    %2959 = vmatpush2.bf16.msra.mxu0 0
    %2960 = vmatprep.subr.bf16.mxu0 0
    %2961 = vmatpush2.bf16.msra.mxu0 0
    %2962 = vmatprep.subr.bf16.mxu0 0
    %2963 = vmatpush2.bf16.msra.mxu0 0
    %2964 = vmatprep.subr.bf16.mxu0 0
    %2965 = vmatpush2.bf16.msra.mxu0 0
    %2966 = vmatprep.subr.bf16.mxu0 0
    %2967 = vmatpush2.bf16.msra.mxu0 0
    %2968 = vmatprep.subr.bf16.mxu0 0
    %2969 = vmatpush2.bf16.msra.mxu0 0
    %2970 = vmatprep.mubr.bf16.mxu0 0
    %2971 = vmatmul.mubr.bf16.gmra.mxu0 %v2936
    %v2972 = vpop.f32.mrf.mxu0
    %v2973 = vadd.f32 %v2930, %v2972
    %v2974 = vpop.f32.mrf.mxu0
    %v2975 = vpop.f32.mrf.mxu0
    %v2976 = vpop.f32.mrf.mxu0
    %2977 = vdwg.mxu0
    %2978 = vrot.lane.b32.xlu0 %v2668, 96
    %v2979 = vpop.permute.xlu0 %2978
    %2980 = vrot.lane.b32.xlu0 %v2672, 96
    %v2981 = vpop.permute.xlu0 %2980
    %v2983 = vsel %vm445, %v2979, 0
    %v2986 = vsel %vm445, %v2981, 0
    %2988 = vmatprep.subr.bf16.mxu0 0
    %2989 = vmatpush1.bf16.xpose.msra.mxu0 0
    %2990 = vmatprep.subr.bf16.mxu0 0
    %2991 = vmatpush1.bf16.xpose.msra.mxu0 0
    %2992 = vmatprep.subr.bf16.mxu0 0
    %2993 = vmatpush1.bf16.xpose.msra.mxu0 0
    %2994 = vmatprep.subr.bf16.mxu0 0
    %2995 = vmatpush1.bf16.xpose.msra.mxu0 0
    %2996 = vmatprep.subr.bf16.mxu0 0
    %2997 = vmatpush1.bf16.xpose.msra.mxu0 0
    %2998 = vmatprep.subr.bf16.mxu0 0
    %2999 = vmatpush1.bf16.xpose.msra.mxu0 0
    %3000 = vmatprep.subr.bf16.mxu0 0
    %3001 = vmatpush1.bf16.xpose.msra.mxu0 0
    %3002 = vmatprep.subr.bf16.mxu0 0
    %3003 = vmatpush1.bf16.xpose.msra.mxu0 %v2986
    %3004 = vmatprep.subr.bf16.mxu0 0
    %3005 = vmatpush2.bf16.xpose.msra.mxu0 0
    %3006 = vmatprep.subr.bf16.mxu0 0
    %3007 = vmatpush2.bf16.xpose.msra.mxu0 0
    %3008 = vmatprep.subr.bf16.mxu0 0
    %3009 = vmatpush2.bf16.xpose.msra.mxu0 0
    %3010 = vmatprep.subr.bf16.mxu0 0
    %3011 = vmatpush2.bf16.xpose.msra.mxu0 0
    %3012 = vmatprep.subr.bf16.mxu0 0
    %3013 = vmatpush2.bf16.xpose.msra.mxu0 0
    %3014 = vmatprep.subr.bf16.mxu0 0
    %3015 = vmatpush2.bf16.xpose.msra.mxu0 0
    %3016 = vmatprep.subr.bf16.mxu0 0
    %3017 = vmatpush2.bf16.xpose.msra.mxu0 0
    %3018 = vmatprep.subr.bf16.mxu0 0
    %3019 = vmatpush2.bf16.xpose.msra.mxu0 0
    %3020 = vmatprep.mubr.bf16.mxu0 0
    %3021 = vmatmul.mubr.bf16.gmra.mxu0 %v2983
    %v3022 = vpop.f32.mrf.mxu0
    %v3023 = vadd.f32 0.0, %v3022
    %v3024 = vpop.f32.mrf.mxu0
    %v3025 = vpop.f32.mrf.mxu0
    %v3026 = vpop.f32.mrf.mxu0
    %3027 = vdwg.mxu0
    %v3028 = vsel %vm2073, %v3023, -inf
    %3029 = vmax.xlane.f32.xlu0 %v3028
    %v3030 = vpop.xlane.xlu0 %3029
    %v3031 = vsub.f32 %v3023, %v3030
    %v3032 = vmul.f32 %v3031, 1.442695
    %v3033 = vpow.pop %v3032
    %v3034 = vsel %vm2073, %v3033, 0.0
    %3035 = vadd.xlane.f32.xlu0 %v3034
    %v3036 = vpop.xlane.xlu0 %3035
    %v3037 = vrcp.pop %v3036
    %v3038 = vmul.f32 %v3033, %v3037
    %v3039 = vpack.c.bf16 %v3038, %v3038
    %3040 = vrot.lane.b32.xlu0 %v2732, 96
    %v3041 = vpop.permute.xlu0 %3040
    %v3043 = vsel %vm2073, %v3039, 0
    %v3046 = vsel %vm2089, %v3041, 0
    %3048 = vmatprep.subr.bf16.mxu0 0
    %3049 = vmatpush1.bf16.msra.mxu0 0
    %3050 = vmatprep.subr.bf16.mxu0 0
    %3051 = vmatpush1.bf16.msra.mxu0 0
    %3052 = vmatprep.subr.bf16.mxu0 0
    %3053 = vmatpush1.bf16.msra.mxu0 0
    %3054 = vmatprep.subr.bf16.mxu0 0
    %3055 = vmatpush1.bf16.msra.mxu0 0
    %3056 = vmatprep.subr.bf16.mxu0 0
    %3057 = vmatpush1.bf16.msra.mxu0 0
    %3058 = vmatprep.subr.bf16.mxu0 0
    %3059 = vmatpush1.bf16.msra.mxu0 0
    %3060 = vmatprep.subr.bf16.mxu0 0
    %3061 = vmatpush1.bf16.msra.mxu0 0
    %3062 = vmatprep.subr.bf16.mxu0 0
    %3063 = vmatpush1.bf16.msra.mxu0 %v3046
    %3064 = vmatprep.subr.bf16.mxu0 0
    %3065 = vmatpush2.bf16.msra.mxu0 0
    %3066 = vmatprep.subr.bf16.mxu0 0
    %3067 = vmatpush2.bf16.msra.mxu0 0
    %3068 = vmatprep.subr.bf16.mxu0 0
    %3069 = vmatpush2.bf16.msra.mxu0 0
    %3070 = vmatprep.subr.bf16.mxu0 0
    %3071 = vmatpush2.bf16.msra.mxu0 0
    %3072 = vmatprep.subr.bf16.mxu0 0
    %3073 = vmatpush2.bf16.msra.mxu0 0
    %3074 = vmatprep.subr.bf16.mxu0 0
    %3075 = vmatpush2.bf16.msra.mxu0 0
    %3076 = vmatprep.subr.bf16.mxu0 0
    %3077 = vmatpush2.bf16.msra.mxu0 0
    %3078 = vmatprep.subr.bf16.mxu0 0
    %3079 = vmatpush2.bf16.msra.mxu0 0
    %3080 = vmatprep.mubr.bf16.mxu0 0
    %3081 = vmatmul.mubr.bf16.gmra.mxu0 %v3043
    %v3082 = vpop.f32.mrf.mxu0
    %v3083 = vadd.f32 0.0, %v3082
    %v3084 = vpop.f32.mrf.mxu0
    %v3085 = vpop.f32.mrf.mxu0
    %v3086 = vpop.f32.mrf.mxu0
    %3087 = vdwg.mxu0
    %v3088 = vpack.c.bf16 %v3083, %v3083
    %v3090 = vsel %vm445, %v3088, 0
    %3092 = vmatprep.subr.bf16.mxu0 0
    %3093 = vmatpush1.bf16.msra.mxu0 0
    %3094 = vmatprep.subr.bf16.mxu0 0
    %3095 = vmatpush1.bf16.msra.mxu0 0
    %3096 = vmatprep.subr.bf16.mxu0 0
    %3097 = vmatpush1.bf16.msra.mxu0 0
    %3098 = vmatprep.subr.bf16.mxu0 0
    %3099 = vmatpush1.bf16.msra.mxu0 0
    %3100 = vmatprep.subr.bf16.mxu0 0
    %3101 = vmatpush1.bf16.msra.mxu0 0
    %3102 = vmatprep.subr.bf16.mxu0 0
    %3103 = vmatpush1.bf16.msra.mxu0 0
    %3104 = vmatprep.subr.bf16.mxu0 0
    %3105 = vmatpush1.bf16.msra.mxu0 0
    %3106 = vmatprep.subr.bf16.mxu0 0
    %3107 = vmatpush1.bf16.msra.mxu0 %v2461
    %3108 = vmatprep.subr.bf16.mxu0 0
    %3109 = vmatpush2.bf16.msra.mxu0 0
    %3110 = vmatprep.subr.bf16.mxu0 0
    %3111 = vmatpush2.bf16.msra.mxu0 0
    %3112 = vmatprep.subr.bf16.mxu0 0
    %3113 = vmatpush2.bf16.msra.mxu0 0
    %3114 = vmatprep.subr.bf16.mxu0 0
    %3115 = vmatpush2.bf16.msra.mxu0 0
    %3116 = vmatprep.subr.bf16.mxu0 0
    %3117 = vmatpush2.bf16.msra.mxu0 0
    %3118 = vmatprep.subr.bf16.mxu0 0
    %3119 = vmatpush2.bf16.msra.mxu0 0
    %3120 = vmatprep.subr.bf16.mxu0 0
    %3121 = vmatpush2.bf16.msra.mxu0 0
    %3122 = vmatprep.subr.bf16.mxu0 0
    %3123 = vmatpush2.bf16.msra.mxu0 0
    %3124 = vmatprep.mubr.bf16.mxu0 0
    %3125 = vmatmul.mubr.bf16.gmra.mxu0 %v3090
    %v3126 = vpop.f32.mrf.mxu0
    %v3127 = vadd.f32 0.0, %v3126
    %v3128 = vpop.f32.mrf.mxu0
    %v3129 = vpop.f32.mrf.mxu0
    %v3130 = vpop.f32.mrf.mxu0
    %3131 = vdwg.mxu0
    %v3132 = vadd.f32 %v2973, %v3127
    %3133 = vrot.lane.b32.xlu0 %v2668, 80
    %v3134 = vpop.permute.xlu0 %3133
    %3135 = vrot.lane.b32.xlu0 %v2672, 80
    %v3136 = vpop.permute.xlu0 %3135
    %v3138 = vsel %vm445, %v3134, 0
    %v3141 = vsel %vm445, %v3136, 0
    %3143 = vmatprep.subr.bf16.mxu0 0
    %3144 = vmatpush1.bf16.xpose.msra.mxu0 0
    %3145 = vmatprep.subr.bf16.mxu0 0
    %3146 = vmatpush1.bf16.xpose.msra.mxu0 0
    %3147 = vmatprep.subr.bf16.mxu0 0
    %3148 = vmatpush1.bf16.xpose.msra.mxu0 0
    %3149 = vmatprep.subr.bf16.mxu0 0
    %3150 = vmatpush1.bf16.xpose.msra.mxu0 0
    %3151 = vmatprep.subr.bf16.mxu0 0
    %3152 = vmatpush1.bf16.xpose.msra.mxu0 0
    %3153 = vmatprep.subr.bf16.mxu0 0
    %3154 = vmatpush1.bf16.xpose.msra.mxu0 0
    %3155 = vmatprep.subr.bf16.mxu0 0
    %3156 = vmatpush1.bf16.xpose.msra.mxu0 0
    %3157 = vmatprep.subr.bf16.mxu0 0
    %3158 = vmatpush1.bf16.xpose.msra.mxu0 %v3141
    %3159 = vmatprep.subr.bf16.mxu0 0
    %3160 = vmatpush2.bf16.xpose.msra.mxu0 0
    %3161 = vmatprep.subr.bf16.mxu0 0
    %3162 = vmatpush2.bf16.xpose.msra.mxu0 0
    %3163 = vmatprep.subr.bf16.mxu0 0
    %3164 = vmatpush2.bf16.xpose.msra.mxu0 0
    %3165 = vmatprep.subr.bf16.mxu0 0
    %3166 = vmatpush2.bf16.xpose.msra.mxu0 0
    %3167 = vmatprep.subr.bf16.mxu0 0
    %3168 = vmatpush2.bf16.xpose.msra.mxu0 0
    %3169 = vmatprep.subr.bf16.mxu0 0
    %3170 = vmatpush2.bf16.xpose.msra.mxu0 0
    %3171 = vmatprep.subr.bf16.mxu0 0
    %3172 = vmatpush2.bf16.xpose.msra.mxu0 0
    %3173 = vmatprep.subr.bf16.mxu0 0
    %3174 = vmatpush2.bf16.xpose.msra.mxu0 0
    %3175 = vmatprep.mubr.bf16.mxu0 0
    %3176 = vmatmul.mubr.bf16.gmra.mxu0 %v3138
    %v3177 = vpop.f32.mrf.mxu0
    %v3178 = vadd.f32 0.0, %v3177
    %v3179 = vpop.f32.mrf.mxu0
    %v3180 = vpop.f32.mrf.mxu0
    %v3181 = vpop.f32.mrf.mxu0
    %3182 = vdwg.mxu0
    %v3183 = vsel %vm2073, %v3178, -inf
    %3184 = vmax.xlane.f32.xlu0 %v3183
    %v3185 = vpop.xlane.xlu0 %3184
    %v3186 = vsub.f32 %v3178, %v3185
    %v3187 = vmul.f32 %v3186, 1.442695
    %v3188 = vpow.pop %v3187
    %v3189 = vsel %vm2073, %v3188, 0.0
    %3190 = vadd.xlane.f32.xlu0 %v3189
    %v3191 = vpop.xlane.xlu0 %3190
    %v3192 = vrcp.pop %v3191
    %v3193 = vmul.f32 %v3188, %v3192
    %v3194 = vpack.c.bf16 %v3193, %v3193
    %3195 = vrot.lane.b32.xlu0 %v2732, 80
    %v3196 = vpop.permute.xlu0 %3195
    %v3198 = vsel %vm2073, %v3194, 0
    %v3201 = vsel %vm2089, %v3196, 0
    %3203 = vmatprep.subr.bf16.mxu0 0
    %3204 = vmatpush1.bf16.msra.mxu0 0
    %3205 = vmatprep.subr.bf16.mxu0 0
    %3206 = vmatpush1.bf16.msra.mxu0 0
    %3207 = vmatprep.subr.bf16.mxu0 0
    %3208 = vmatpush1.bf16.msra.mxu0 0
    %3209 = vmatprep.subr.bf16.mxu0 0
    %3210 = vmatpush1.bf16.msra.mxu0 0
    %3211 = vmatprep.subr.bf16.mxu0 0
    %3212 = vmatpush1.bf16.msra.mxu0 0
    %3213 = vmatprep.subr.bf16.mxu0 0
    %3214 = vmatpush1.bf16.msra.mxu0 0
    %3215 = vmatprep.subr.bf16.mxu0 0
    %3216 = vmatpush1.bf16.msra.mxu0 0
    %3217 = vmatprep.subr.bf16.mxu0 0
    %3218 = vmatpush1.bf16.msra.mxu0 %v3201
    %3219 = vmatprep.subr.bf16.mxu0 0
    %3220 = vmatpush2.bf16.msra.mxu0 0
    %3221 = vmatprep.subr.bf16.mxu0 0
    %3222 = vmatpush2.bf16.msra.mxu0 0
    %3223 = vmatprep.subr.bf16.mxu0 0
    %3224 = vmatpush2.bf16.msra.mxu0 0
    %3225 = vmatprep.subr.bf16.mxu0 0
    %3226 = vmatpush2.bf16.msra.mxu0 0
    %3227 = vmatprep.subr.bf16.mxu0 0
    %3228 = vmatpush2.bf16.msra.mxu0 0
    %3229 = vmatprep.subr.bf16.mxu0 0
    %3230 = vmatpush2.bf16.msra.mxu0 0
    %3231 = vmatprep.subr.bf16.mxu0 0
    %3232 = vmatpush2.bf16.msra.mxu0 0
    %3233 = vmatprep.subr.bf16.mxu0 0
    %3234 = vmatpush2.bf16.msra.mxu0 0
    %3235 = vmatprep.mubr.bf16.mxu0 0
    %3236 = vmatmul.mubr.bf16.gmra.mxu0 %v3198
    %v3237 = vpop.f32.mrf.mxu0
    %v3238 = vadd.f32 0.0, %v3237
    %v3239 = vpop.f32.mrf.mxu0
    %v3240 = vpop.f32.mrf.mxu0
    %v3241 = vpop.f32.mrf.mxu0
    %3242 = vdwg.mxu0
    %v3243 = vpack.c.bf16 %v3238, %v3238
    %v3245 = vsel %vm445, %v3243, 0
    %3247 = vmatprep.subr.bf16.mxu0 0
    %3248 = vmatpush1.bf16.msra.mxu0 0
    %3249 = vmatprep.subr.bf16.mxu0 0
    %3250 = vmatpush1.bf16.msra.mxu0 0
    %3251 = vmatprep.subr.bf16.mxu0 0
    %3252 = vmatpush1.bf16.msra.mxu0 0
    %3253 = vmatprep.subr.bf16.mxu0 0
    %3254 = vmatpush1.bf16.msra.mxu0 0
    %3255 = vmatprep.subr.bf16.mxu0 0
    %3256 = vmatpush1.bf16.msra.mxu0 0
    %3257 = vmatprep.subr.bf16.mxu0 0
    %3258 = vmatpush1.bf16.msra.mxu0 0
    %3259 = vmatprep.subr.bf16.mxu0 0
    %3260 = vmatpush1.bf16.msra.mxu0 0
    %3261 = vmatprep.subr.bf16.mxu0 0
    %3262 = vmatpush1.bf16.msra.mxu0 %v2622
    %3263 = vmatprep.subr.bf16.mxu0 0
    %3264 = vmatpush2.bf16.msra.mxu0 0
    %3265 = vmatprep.subr.bf16.mxu0 0
    %3266 = vmatpush2.bf16.msra.mxu0 0
    %3267 = vmatprep.subr.bf16.mxu0 0
    %3268 = vmatpush2.bf16.msra.mxu0 0
    %3269 = vmatprep.subr.bf16.mxu0 0
    %3270 = vmatpush2.bf16.msra.mxu0 0
    %3271 = vmatprep.subr.bf16.mxu0 0
    %3272 = vmatpush2.bf16.msra.mxu0 0
    %3273 = vmatprep.subr.bf16.mxu0 0
    %3274 = vmatpush2.bf16.msra.mxu0 0
    %3275 = vmatprep.subr.bf16.mxu0 0
    %3276 = vmatpush2.bf16.msra.mxu0 0
    %3277 = vmatprep.subr.bf16.mxu0 0
    %3278 = vmatpush2.bf16.msra.mxu0 0
    %3279 = vmatprep.mubr.bf16.mxu0 0
    %3280 = vmatmul.mubr.bf16.gmra.mxu0 %v3245
    %v3281 = vpop.f32.mrf.mxu0
    %v3282 = vadd.f32 0.0, %v3281
    %v3283 = vpop.f32.mrf.mxu0
    %v3284 = vpop.f32.mrf.mxu0
    %v3285 = vpop.f32.mrf.mxu0
    %3286 = vdwg.mxu0
    %v3287 = vadd.f32 %v3132, %v3282
    %v3288 = vlaneseq
    %v3289 = vshrl.u32 %v3288, 7
    %v3290 = vsub.s32 1, %v3289
    %v3291 = vrot.slane %v75, %v3290
    %v3292 = vadd.f32 %v2667, %v3291
    %v3293 = vadd.f32 %v3287, %v3291
    %v3294 = vadd.f32 %v1753, %v3292
    %v3295 = vadd.f32 %v1754, %v3293
    %v3296 = vsel %vm232, %v3294, 0.0
    %3297 = vadd.xlane.f32.xlu0 %v3296
    %v3298 = vpop.xlane.xlu0 %3297
    %v3299 = vsel %vm232, %v3295, 0.0
    %3300 = vadd.xlane.f32.xlu0 %v3299
    %v3301 = vpop.xlane.xlu0 %3300
    %v3302 = vmul.f32 %v3294, %v3294
    %v3303 = vmul.f32 %v3295, %v3295
    %v3304 = vsel %vm232, %v3302, 0.0
    %3305 = vadd.xlane.f32.xlu0 %v3304
    %v3306 = vpop.xlane.xlu0 %3305
    %v3307 = vsel %vm232, %v3303, 0.0
    %3308 = vadd.xlane.f32.xlu0 %v3307
    %v3309 = vpop.xlane.xlu0 %3308
    %v3310 = vmul.f32 %v3298, 0.016666668
    %v3311 = vmul.f32 %v3301, 0.016666668
    %v3312 = vmul.f32 %v3306, 0.016666668
    %v3313 = vmul.f32 %v3309, 0.016666668
    %v3314 = vmul.f32 %v3310, %v3310
    %v3315 = vmul.f32 %v3311, %v3311
    %v3316 = vsub.f32 %v3312, %v3314
    %v3317 = vsub.f32 %v3313, %v3315
    %v3318 = vsub.f32 %v3294, %v3310
    %v3319 = vsub.f32 %v3295, %v3311
    %v3320 = vadd.f32 %v3316, 1e-05
    %v3321 = vadd.f32 %v3317, 1e-05
    %v3322 = vrsqrt.pop %v3320
    %v3323 = vrsqrt.pop %v3321
    %v3324 = vmul.f32 %v3318, %v3322
    %v3325 = vmul.f32 %v3319, %v3323
    %v3326 = vlaneseq
    %v3327 = vshrl.u32 %v3326, 7
    %v3328 = vsub.s32 4, %v3327
    %v3329 = vrot.slane %v75, %v3328
    %v3330 = vmul.f32 %v3324, %v3329
    %v3331 = vmul.f32 %v3325, %v3329
    %v3332 = vlaneseq
    %v3333 = vshrl.u32 %v3332, 7
    %v3334 = vsub.s32 5, %v3333
    %v3335 = vrot.slane %v75, %v3334
    %v3336 = vadd.f32 %v3330, %v3335
    %v3337 = vadd.f32 %v3331, %v3335
    %v3338 = vpack.c.bf16 %v3337, %v3336
    %s3339 = scalar_lea.vmem [#allocation7], 192
    %v3340 = vld [vmem:[%s3339] sm:$0xf]
    %v3341 = vld [vmem:[%s3339 + $0x4] sm:$0xf]
    %v3342 = vld [vmem:[%s3339 + $0x8] sm:$0xf]
    %v3343 = vld [vmem:[%s3339 + $0xc] sm:$0xf]
    %v3344 = vld [vmem:[%s3339 + $0x10] sm:$0xf]
    %v3345 = vld [vmem:[%s3339 + $0x14] sm:$0xf]
    %v3346 = vld [vmem:[%s3339 + $0x18] sm:$0xf]
    %v3347 = vld [vmem:[%s3339 + $0x1c] sm:$0xf]
    %v3348 = vlaneseq
    %v3349 = vshrl.u32 %v3348, 7
    %v3350 = vsub.s32 6, %v3349
    %v3351 = vrot.slane %v74, %v3350
    %v3360 = vunpack.c.l.b16 %v3340
    %v3361 = vunpack.c.l.b16 %v3341
    %v3362 = vunpack.c.l.b16 %v3342
    %v3363 = vunpack.c.l.b16 %v3343
    %v3364 = vunpack.c.l.b16 %v3344
    %v3365 = vunpack.c.l.b16 %v3345
    %v3366 = vunpack.c.l.b16 %v3346
    %v3367 = vunpack.c.l.b16 %v3347
    %v3368 = vpack.c.b16 %v3361, %v3360
    %v3369 = vpack.c.b16 %v3363, %v3362
    %v3370 = vpack.c.b16 %v3365, %v3364
    %v3371 = vpack.c.b16 %v3367, %v3366
    %v3377 = vsel %vm232, %v3338, 0
    %3379 = vmatprep.subr.bf16.mxu0 0
    %3380 = vmatpush1.bf16.msra.mxu0 0
    %3381 = vmatprep.subr.bf16.mxu0 0
    %3382 = vmatpush1.bf16.msra.mxu0 0
    %3383 = vmatprep.subr.bf16.mxu0 0
    %3384 = vmatpush1.bf16.msra.mxu0 0
    %3385 = vmatprep.subr.bf16.mxu0 0
    %3386 = vmatpush1.bf16.msra.mxu0 0
    %3387 = vmatprep.subr.bf16.mxu0 0
    %3388 = vmatpush1.bf16.msra.mxu0 %v3371
    %3389 = vmatprep.subr.bf16.mxu0 0
    %3390 = vmatpush1.bf16.msra.mxu0 %v3370
    %3391 = vmatprep.subr.bf16.mxu0 0
    %3392 = vmatpush1.bf16.msra.mxu0 %v3369
    %3393 = vmatprep.subr.bf16.mxu0 0
    %3394 = vmatpush1.bf16.msra.mxu0 %v3368
    %3395 = vmatprep.subr.bf16.mxu0 0
    %3396 = vmatpush2.bf16.msra.mxu0 0
    %3397 = vmatprep.subr.bf16.mxu0 0
    %3398 = vmatpush2.bf16.msra.mxu0 0
    %3399 = vmatprep.subr.bf16.mxu0 0
    %3400 = vmatpush2.bf16.msra.mxu0 0
    %3401 = vmatprep.subr.bf16.mxu0 0
    %3402 = vmatpush2.bf16.msra.mxu0 0
    %3403 = vmatprep.subr.bf16.mxu0 0
    %3404 = vmatpush2.bf16.msra.mxu0 0
    %3405 = vmatprep.subr.bf16.mxu0 0
    %3406 = vmatpush2.bf16.msra.mxu0 0
    %3407 = vmatprep.subr.bf16.mxu0 0
    %3408 = vmatpush2.bf16.msra.mxu0 0
    %3409 = vmatprep.subr.bf16.mxu0 0
    %3410 = vmatpush2.bf16.msra.mxu0 0
    %3411 = vmatprep.mubr.bf16.mxu0 0
    %3412 = vmatmul.mubr.bf16.gmra.mxu0 %v3377
    %v3413 = vpop.f32.mrf.mxu0
    %v3414 = vadd.f32 %v3351, %v3413
    %v3415 = vpop.f32.mrf.mxu0
    %v3416 = vpop.f32.mrf.mxu0
    %v3417 = vadd.f32 %v3351, %v3416
    %v3418 = vpop.f32.mrf.mxu0
    %3419 = vdwg.mxu0
    %v3420 = vpack.c.bf16 %v3417, %v3414
    %s3421 = scalar_lea.vmem [#allocation7], 224
    %v3422 = vld [vmem:[%s3421] sm:$0xf]
    %v3423 = vld [vmem:[%s3421 + $0x4] sm:$0xf]
    %v3424 = vld [vmem:[%s3421 + $0x8] sm:$0xf]
    %v3425 = vld [vmem:[%s3421 + $0xc] sm:$0xf]
    %v3426 = vld [vmem:[%s3421 + $0x10] sm:$0xf]
    %v3427 = vld [vmem:[%s3421 + $0x14] sm:$0xf]
    %v3428 = vld [vmem:[%s3421 + $0x18] sm:$0xf]
    %v3429 = vld [vmem:[%s3421 + $0x1c] sm:$0xf]
    %v3430 = vlaneseq
    %v3431 = vshrl.u32 %v3430, 7
    %v3432 = vsub.s32 7, %v3431
    %v3433 = vrot.slane %v74, %v3432
    %v3442 = vunpack.c.l.b16 %v3422
    %v3443 = vunpack.c.l.b16 %v3423
    %v3444 = vunpack.c.l.b16 %v3424
    %v3445 = vunpack.c.l.b16 %v3425
    %v3446 = vunpack.c.l.b16 %v3426
    %v3447 = vunpack.c.l.b16 %v3427
    %v3448 = vunpack.c.l.b16 %v3428
    %v3449 = vunpack.c.l.b16 %v3429
    %v3450 = vpack.c.b16 %v3443, %v3442
    %v3451 = vpack.c.b16 %v3445, %v3444
    %v3452 = vpack.c.b16 %v3447, %v3446
    %v3453 = vpack.c.b16 %v3449, %v3448
    %v3459 = vsel %vm232, %v3420, 0
    %3461 = vmatprep.subr.bf16.mxu0 0
    %3462 = vmatpush1.bf16.msra.mxu0 0
    %3463 = vmatprep.subr.bf16.mxu0 0
    %3464 = vmatpush1.bf16.msra.mxu0 0
    %3465 = vmatprep.subr.bf16.mxu0 0
    %3466 = vmatpush1.bf16.msra.mxu0 0
    %3467 = vmatprep.subr.bf16.mxu0 0
    %3468 = vmatpush1.bf16.msra.mxu0 0
    %3469 = vmatprep.subr.bf16.mxu0 0
    %3470 = vmatpush1.bf16.msra.mxu0 %v3453
    %3471 = vmatprep.subr.bf16.mxu0 0
    %3472 = vmatpush1.bf16.msra.mxu0 %v3452
    %3473 = vmatprep.subr.bf16.mxu0 0
    %3474 = vmatpush1.bf16.msra.mxu0 %v3451
    %3475 = vmatprep.subr.bf16.mxu0 0
    %3476 = vmatpush1.bf16.msra.mxu0 %v3450
    %3477 = vmatprep.subr.bf16.mxu0 0
    %3478 = vmatpush2.bf16.msra.mxu0 0
    %3479 = vmatprep.subr.bf16.mxu0 0
    %3480 = vmatpush2.bf16.msra.mxu0 0
    %3481 = vmatprep.subr.bf16.mxu0 0
    %3482 = vmatpush2.bf16.msra.mxu0 0
    %3483 = vmatprep.subr.bf16.mxu0 0
    %3484 = vmatpush2.bf16.msra.mxu0 0
    %3485 = vmatprep.subr.bf16.mxu0 0
    %3486 = vmatpush2.bf16.msra.mxu0 0
    %3487 = vmatprep.subr.bf16.mxu0 0
    %3488 = vmatpush2.bf16.msra.mxu0 0
    %3489 = vmatprep.subr.bf16.mxu0 0
    %3490 = vmatpush2.bf16.msra.mxu0 0
    %3491 = vmatprep.subr.bf16.mxu0 0
    %3492 = vmatpush2.bf16.msra.mxu0 0
    %3493 = vmatprep.mubr.bf16.mxu0 0
    %3494 = vmatmul.mubr.bf16.gmra.mxu0 %v3459
    %v3495 = vpop.f32.mrf.mxu0
    %v3496 = vadd.f32 %v3433, %v3495
    %v3497 = vpop.f32.mrf.mxu0
    %v3498 = vpop.f32.mrf.mxu0
    %v3499 = vadd.f32 %v3433, %v3498
    %v3500 = vpop.f32.mrf.mxu0
    %3501 = vdwg.mxu0
    %v3502 = vadd.f32 %v3336, %v3496
    %v3503 = vadd.f32 %v3337, %v3499
    %v3504 = vsel %vm232, %v3502, 0.0
    %3505 = vadd.xlane.f32.xlu0 %v3504
    %v3506 = vpop.xlane.xlu0 %3505
    %v3507 = vsel %vm232, %v3503, 0.0
    %3508 = vadd.xlane.f32.xlu0 %v3507
    %v3509 = vpop.xlane.xlu0 %3508
    %v3510 = vmul.f32 %v3502, %v3502
    %v3511 = vmul.f32 %v3503, %v3503
    %v3512 = vsel %vm232, %v3510, 0.0
    %3513 = vadd.xlane.f32.xlu0 %v3512
    %v3514 = vpop.xlane.xlu0 %3513
    %v3515 = vsel %vm232, %v3511, 0.0
    %3516 = vadd.xlane.f32.xlu0 %v3515
    %v3517 = vpop.xlane.xlu0 %3516
    %v3518 = vmul.f32 %v3506, 0.016666668
    %v3519 = vmul.f32 %v3509, 0.016666668
    %v3520 = vmul.f32 %v3514, 0.016666668
    %v3521 = vmul.f32 %v3517, 0.016666668
    %v3522 = vmul.f32 %v3518, %v3518
    %v3523 = vmul.f32 %v3519, %v3519
    %v3524 = vsub.f32 %v3520, %v3522
    %v3525 = vsub.f32 %v3521, %v3523
    %v3526 = vsub.f32 %v3502, %v3518
    %v3527 = vsub.f32 %v3503, %v3519
    %v3528 = vadd.f32 %v3524, 1e-05
    %v3529 = vadd.f32 %v3525, 1e-05
    %v3530 = vrsqrt.pop %v3528
    %v3531 = vrsqrt.pop %v3529
    %v3532 = vmul.f32 %v3526, %v3530
    %v3533 = vmul.f32 %v3527, %v3531
    %v3534 = vlaneseq
    %v3535 = vshrl.u32 %v3534, 7
    %v3536 = vsub.s32 6, %v3535
    %v3537 = vrot.slane %v75, %v3536
    %v3538 = vmul.f32 %v3532, %v3537
    %v3539 = vmul.f32 %v3533, %v3537
    %v3540 = vlaneseq
    %v3541 = vshrl.u32 %v3540, 7
    %v3542 = vsub.s32 7, %v3541
    %v3543 = vrot.slane %v75, %v3542
    %v3544 = vadd.f32 %v3538, %v3543
    %v3545 = vadd.f32 %v3539, %v3543
    %v3546 = vpack.c.bf16 %v3545, %v3544
    %v3548 = vsel %vm232, %v3546, 0
    %3550 = vmatprep.subr.bf16.mxu0 0
    %3551 = vmatpush1.bf16.msra.mxu0 0
    %3552 = vmatprep.subr.bf16.mxu0 0
    %3553 = vmatpush1.bf16.msra.mxu0 0
    %3554 = vmatprep.subr.bf16.mxu0 0
    %3555 = vmatpush1.bf16.msra.mxu0 0
    %3556 = vmatprep.subr.bf16.mxu0 0
    %3557 = vmatpush1.bf16.msra.mxu0 0
    %3558 = vmatprep.subr.bf16.mxu0 0
    %3559 = vmatpush1.bf16.msra.mxu0 %v3371
    %3560 = vmatprep.subr.bf16.mxu0 0
    %3561 = vmatpush1.bf16.msra.mxu0 %v3370
    %3562 = vmatprep.subr.bf16.mxu0 0
    %3563 = vmatpush1.bf16.msra.mxu0 %v3369
    %3564 = vmatprep.subr.bf16.mxu0 0
    %3565 = vmatpush1.bf16.msra.mxu0 %v3368
    %3566 = vmatprep.subr.bf16.mxu0 0
    %3567 = vmatpush2.bf16.msra.mxu0 0
    %3568 = vmatprep.subr.bf16.mxu0 0
    %3569 = vmatpush2.bf16.msra.mxu0 0
    %3570 = vmatprep.subr.bf16.mxu0 0
    %3571 = vmatpush2.bf16.msra.mxu0 0
    %3572 = vmatprep.subr.bf16.mxu0 0
    %3573 = vmatpush2.bf16.msra.mxu0 0
    %3574 = vmatprep.subr.bf16.mxu0 0
    %3575 = vmatpush2.bf16.msra.mxu0 0
    %3576 = vmatprep.subr.bf16.mxu0 0
    %3577 = vmatpush2.bf16.msra.mxu0 0
    %3578 = vmatprep.subr.bf16.mxu0 0
    %3579 = vmatpush2.bf16.msra.mxu0 0
    %3580 = vmatprep.subr.bf16.mxu0 0
    %3581 = vmatpush2.bf16.msra.mxu0 0
    %3582 = vmatprep.mubr.bf16.mxu0 0
    %3583 = vmatmul.mubr.bf16.gmra.mxu0 %v3548
    %v3584 = vpop.f32.mrf.mxu0
    %v3585 = vadd.f32 %v3351, %v3584
    %v3586 = vpop.f32.mrf.mxu0
    %v3587 = vpop.f32.mrf.mxu0
    %v3588 = vadd.f32 %v3351, %v3587
    %v3589 = vpop.f32.mrf.mxu0
    %3590 = vdwg.mxu0
    %v3591 = vpack.c.bf16 %v3588, %v3585
    %v3593 = vsel %vm232, %v3591, 0
    %3595 = vmatprep.subr.bf16.mxu0 0
    %3596 = vmatpush1.bf16.msra.mxu0 0
    %3597 = vmatprep.subr.bf16.mxu0 0
    %3598 = vmatpush1.bf16.msra.mxu0 0
    %3599 = vmatprep.subr.bf16.mxu0 0
    %3600 = vmatpush1.bf16.msra.mxu0 0
    %3601 = vmatprep.subr.bf16.mxu0 0
    %3602 = vmatpush1.bf16.msra.mxu0 0
    %3603 = vmatprep.subr.bf16.mxu0 0
    %3604 = vmatpush1.bf16.msra.mxu0 %v3453
    %3605 = vmatprep.subr.bf16.mxu0 0
    %3606 = vmatpush1.bf16.msra.mxu0 %v3452
    %3607 = vmatprep.subr.bf16.mxu0 0
    %3608 = vmatpush1.bf16.msra.mxu0 %v3451
    %3609 = vmatprep.subr.bf16.mxu0 0
    %3610 = vmatpush1.bf16.msra.mxu0 %v3450
    %3611 = vmatprep.subr.bf16.mxu0 0
    %3612 = vmatpush2.bf16.msra.mxu0 0
    %3613 = vmatprep.subr.bf16.mxu0 0
    %3614 = vmatpush2.bf16.msra.mxu0 0
    %3615 = vmatprep.subr.bf16.mxu0 0
    %3616 = vmatpush2.bf16.msra.mxu0 0
    %3617 = vmatprep.subr.bf16.mxu0 0
    %3618 = vmatpush2.bf16.msra.mxu0 0
    %3619 = vmatprep.subr.bf16.mxu0 0
    %3620 = vmatpush2.bf16.msra.mxu0 0
    %3621 = vmatprep.subr.bf16.mxu0 0
    %3622 = vmatpush2.bf16.msra.mxu0 0
    %3623 = vmatprep.subr.bf16.mxu0 0
    %3624 = vmatpush2.bf16.msra.mxu0 0
    %3625 = vmatprep.subr.bf16.mxu0 0
    %3626 = vmatpush2.bf16.msra.mxu0 0
    %3627 = vmatprep.mubr.bf16.mxu0 0
    %3628 = vmatmul.mubr.bf16.gmra.mxu0 %v3593
    %v3629 = vpop.f32.mrf.mxu0
    %v3630 = vadd.f32 %v3433, %v3629
    %v3631 = vpop.f32.mrf.mxu0
    %v3632 = vpop.f32.mrf.mxu0
    %v3633 = vadd.f32 %v3433, %v3632
    %v3634 = vpop.f32.mrf.mxu0
    %3635 = vdwg.mxu0
    %v3636 = vadd.f32 %v3544, %v3630
    %v3637 = vadd.f32 %v3545, %v3633
    %v3638 = vsel %vm232, %v3636, 0.0
    %3639 = vadd.xlane.f32.xlu0 %v3638
    %v3640 = vpop.xlane.xlu0 %3639
    %v3641 = vsel %vm232, %v3637, 0.0
    %3642 = vadd.xlane.f32.xlu0 %v3641
    %v3643 = vpop.xlane.xlu0 %3642
    %v3644 = vmul.f32 %v3636, %v3636
    %v3645 = vmul.f32 %v3637, %v3637
    %v3646 = vsel %vm232, %v3644, 0.0
    %3647 = vadd.xlane.f32.xlu0 %v3646
    %v3648 = vpop.xlane.xlu0 %3647
    %v3649 = vsel %vm232, %v3645, 0.0
    %3650 = vadd.xlane.f32.xlu0 %v3649
    %v3651 = vpop.xlane.xlu0 %3650
    %v3652 = vmul.f32 %v3640, 0.016666668
    %v3653 = vmul.f32 %v3643, 0.016666668
    %v3654 = vmul.f32 %v3648, 0.016666668
    %v3655 = vmul.f32 %v3651, 0.016666668
    %v3656 = vmul.f32 %v3652, %v3652
    %v3657 = vmul.f32 %v3653, %v3653
    %v3658 = vsub.f32 %v3654, %v3656
    %v3659 = vsub.f32 %v3655, %v3657
    %v3660 = vsub.f32 %v3636, %v3652
    %v3661 = vsub.f32 %v3637, %v3653
    %v3662 = vadd.f32 %v3658, 1e-05
    %v3663 = vadd.f32 %v3659, 1e-05
    %v3664 = vrsqrt.pop %v3662
    %v3665 = vrsqrt.pop %v3663
    %v3666 = vmul.f32 %v3660, %v3664
    %v3667 = vmul.f32 %v3661, %v3665
    %v3668 = vlaneseq
    %v3669 = vshrl.u32 %v3668, 7
    %v3670 = vsub.s32 0, %v3669
    %v3671 = vrot.slane %v76, %v3670
    %v3672 = vmul.f32 %v3666, %v3671
    %v3673 = vmul.f32 %v3667, %v3671
    %v3674 = vlaneseq
    %v3675 = vshrl.u32 %v3674, 7
    %v3676 = vsub.s32 1, %v3675
    %v3677 = vrot.slane %v76, %v3676
    %v3678 = vadd.f32 %v3672, %v3677
    %v3679 = vadd.f32 %v3673, %v3677
    %v3681 = vcombine.high %v3678, %v3678
    %v3683 = vunpack.c.l.s4 1966171168
    %v3684 = vunpack.c.0.s8 %v3683
    %v3685 = vlaneseq
    %v3686 = vshrl.u32 %v3685, 7
    %v3687 = vsub.s32 %v3684, %v3686
    %v3688 = vrot.slane %v3678, %v3687
    %v3690 = vunpack.c.l.s4 1966171168
    %v3691 = vunpack.c.0.s8 %v3690
    %v3692 = vlaneseq
    %v3693 = vshrl.u32 %v3692, 7
    %v3694 = vsub.s32 %v3691, %v3693
    %v3695 = vrot.slane %v3681, %v3694
    %v3696 = vcombine.high %v3688, %v3688
    %v3697 = vcombine.high %v3695, %v3695
    %v3699 = vunpack.c.l.s4 1966171168
    %v3700 = vunpack.c.0.s8 %v3699
    %v3701 = vlaneseq
    %v3702 = vshrl.u32 %v3701, 7
    %v3703 = vsub.s32 %v3700, %v3702
    %v3704 = vrot.slane %v3688, %v3703
    %v3706 = vunpack.c.l.s4 1966171168
    %v3707 = vunpack.c.0.s8 %v3706
    %v3708 = vlaneseq
    %v3709 = vshrl.u32 %v3708, 7
    %v3710 = vsub.s32 %v3707, %v3709
    %v3711 = vrot.slane %v3695, %v3710
    %v3713 = vunpack.c.l.s4 1966171168
    %v3714 = vunpack.c.0.s8 %v3713
    %v3715 = vlaneseq
    %v3716 = vshrl.u32 %v3715, 7
    %v3717 = vsub.s32 %v3714, %v3716
    %v3718 = vrot.slane %v3696, %v3717
    %v3720 = vunpack.c.l.s4 1966171168
    %v3721 = vunpack.c.0.s8 %v3720
    %v3722 = vlaneseq
    %v3723 = vshrl.u32 %v3722, 7
    %v3724 = vsub.s32 %v3721, %v3723
    %v3725 = vrot.slane %v3697, %v3724
    %v3726 = vcombine.high %v3704, %v3704
    %v3727 = vcombine.high %v3711, %v3711
    %v3728 = vcombine.high %v3718, %v3718
    %v3729 = vcombine.high %v3725, %v3725
    %v3739 = vcombine.high %v3679, %v3679
    %v3741 = vunpack.c.l.s4 1966171168
    %v3742 = vunpack.c.0.s8 %v3741
    %v3743 = vlaneseq
    %v3744 = vshrl.u32 %v3743, 7
    %v3745 = vsub.s32 %v3742, %v3744
    %v3746 = vrot.slane %v3679, %v3745
    %v3748 = vunpack.c.l.s4 1966171168
    %v3749 = vunpack.c.0.s8 %v3748
    %v3750 = vlaneseq
    %v3751 = vshrl.u32 %v3750, 7
    %v3752 = vsub.s32 %v3749, %v3751
    %v3753 = vrot.slane %v3739, %v3752
    %v3754 = vcombine.high %v3746, %v3746
    %v3755 = vcombine.high %v3753, %v3753
    %v3757 = vunpack.c.l.s4 1966171168
    %v3758 = vunpack.c.0.s8 %v3757
    %v3759 = vlaneseq
    %v3760 = vshrl.u32 %v3759, 7
    %v3761 = vsub.s32 %v3758, %v3760
    %v3762 = vrot.slane %v3746, %v3761
    %v3764 = vunpack.c.l.s4 1966171168
    %v3765 = vunpack.c.0.s8 %v3764
    %v3766 = vlaneseq
    %v3767 = vshrl.u32 %v3766, 7
    %v3768 = vsub.s32 %v3765, %v3767
    %v3769 = vrot.slane %v3753, %v3768
    %v3771 = vunpack.c.l.s4 1966171168
    %v3772 = vunpack.c.0.s8 %v3771
    %v3773 = vlaneseq
    %v3774 = vshrl.u32 %v3773, 7
    %v3775 = vsub.s32 %v3772, %v3774
    %v3776 = vrot.slane %v3754, %v3775
    %v3778 = vunpack.c.l.s4 1966171168
    %v3779 = vunpack.c.0.s8 %v3778
    %v3780 = vlaneseq
    %v3781 = vshrl.u32 %v3780, 7
    %v3782 = vsub.s32 %v3779, %v3781
    %v3783 = vrot.slane %v3755, %v3782
    %v3784 = vcombine.high %v3762, %v3762
    %v3785 = vcombine.high %v3769, %v3769
    %v3786 = vcombine.high %v3776, %v3776
    %v3787 = vcombine.high %v3783, %v3783
    %v3788 = vlaneseq
    %v3789 = vshrl.u32 %v3788, 7
    %v3790 = vsub.s32 0, %v3789
    %v3791 = vrot.slane %v3762, %v3790
    %v3792 = vlaneseq
    %v3793 = vshrl.u32 %v3792, 7
    %v3794 = vsub.s32 0, %v3793
    %v3795 = vrot.slane %v3776, %v3794
    %v3796 = vlaneseq
    %v3797 = vshrl.u32 %v3796, 7
    %v3798 = vsub.s32 0, %v3797
    %v3799 = vrot.slane %v3784, %v3798
    %v3800 = vlaneseq
    %v3801 = vshrl.u32 %v3800, 7
    %v3802 = vsub.s32 0, %v3801
    %v3803 = vrot.slane %v3786, %v3802
    %v3804 = vlaneseq
    %v3805 = vshrl.u32 %v3804, 7
    %v3806 = vsub.s32 0, %v3805
    %v3807 = vrot.slane %v3769, %v3806
    %v3808 = vlaneseq
    %v3809 = vshrl.u32 %v3808, 7
    %v3810 = vsub.s32 0, %v3809
    %v3811 = vrot.slane %v3783, %v3810
    %v3812 = vlaneseq
    %v3813 = vshrl.u32 %v3812, 7
    %v3814 = vsub.s32 0, %v3813
    %v3815 = vrot.slane %v3785, %v3814
    %v3816 = vlaneseq
    %v3817 = vshrl.u32 %v3816, 7
    %v3818 = vsub.s32 0, %v3817
    %v3819 = vrot.slane %v3787, %v3818
    %vm3828 = vcmask 1040384
    %v3829 = vsel %vm3828, %v3704, %v3791
    %v3830 = vsel %vm3828, %v3718, %v3795
    %v3831 = vsel %vm3828, %v3726, %v3799
    %v3832 = vsel %vm3828, %v3728, %v3803
    %v3833 = vsel %vm3828, %v3711, %v3807
    %v3834 = vsel %vm3828, %v3725, %v3811
    %v3835 = vsel %vm3828, %v3727, %v3815
    %v3836 = vsel %vm3828, %v3729, %v3819
    %vm3837 = vcmask 484352
    %3838 = vst.msk [vmem:[#allocation10] sm:$0x3] %vm3837, %v3829
    %3839 = vst.msk [vmem:[#allocation10 + $0x2] sm:$0x3] %vm3837, %v3830
    %3840 = vst.msk [vmem:[#allocation10 + $0x4] sm:$0x3] %vm3837, %v3831
    %3841 = vst.msk [vmem:[#allocation10 + $0x6] sm:$0x3] %vm3837, %v3832
    %3842 = vst.msk [vmem:[#allocation10 + $0x8] sm:$0x3] %vm3837, %v3833
    %3843 = vst.msk [vmem:[#allocation10 + $0xa] sm:$0x3] %vm3837, %v3834
    %3844 = vst.msk [vmem:[#allocation10 + $0xc] sm:$0x3] %vm3837, %v3835
    %3845 = vst.msk [vmem:[#allocation10 + $0xe] sm:$0x3] %vm3837, %v3836
    // Predicated region
    $region34: #{transformer_decoder_forward.1} parent=1 // pred_check
      _
    $region35: #{transformer_decoder_forward.1} parent=1 // pred_check_branch
      %3847 = sbr.rel (0) target = $region37
    $region36: #{transformer_decoder_forward.1} parent=1 // pred_region
      %s3849 = ssub.s32 256, 256
      %3850 = vsyncadd [#allocation4], %s3849
      %s3851 = sshll.u32 [#allocation10], 4
      %s3852 = int_to_ptr.vmem [resolvable:$true] %s3851
      %3857 = dma.vmem_to_hbm [thread:$0]  %s3852, 256, %s4, [#allocation4], 32, 32, 2
    $region37: #{transformer_decoder_forward.1} parent=1 // pred_fallthru
      _
    // Predicated region
    $region38: #{transformer_decoder_forward.1} parent=1 // pred_check
      _
    $region39: #{transformer_decoder_forward.1} parent=1 // pred_check_branch
      %3859 = sbr.rel (0) target = $region41
    $region40: #{transformer_decoder_forward.1} parent=1 // pred_region
      %3860 = dma.done [#allocation4], 256
    $region41: #{transformer_decoder_forward.1} parent=1 // pred_fallthru
      _
    %3861 = vsyncpa [#allocation3], 1
    %3862 = vsyncpa [#allocation6], 1
    %3863 = vsyncpa [#allocation9], 1
    %3864 = vsyncpa [#allocation4], 1

</llo_original>
